<compile_context>
chip_gen: v5e
topology: v5e:2x2
jax: 0.10.0
libtpu: 0.0.40
codegen_flags: <defaults>
</compile_context>

<pallas_src>
import functools

import numpy as np
import jax
import jax.numpy as jnp
from jax import lax
from jax.experimental import pallas as pl
from jax.experimental.pallas import tpu as pltpu

KERNEL_LEN = 5            # axial depthwise kernel length (fixed by the module)
HALF = KERNEL_LEN // 2


# ----------------------------------------------------------------------------
# Static bilinear-x2 (align_corners=True) interpolation helpers.
# ----------------------------------------------------------------------------
def _interp_matrix(n_in, n_out):
    """Dense (n_out, n_in) align_corners=True interpolation matrix."""
    M = np.zeros((n_out, n_in), np.float32)
    if n_in == 1:
        M[:, 0] = 1.0
        return M
    for i in range(n_out):
        src = i * (n_in - 1) / (n_out - 1)
        lo = int(np.floor(src))
        hi = min(lo + 1, n_in - 1)
        fr = src - lo
        M[i, lo] += 1.0 - fr
        M[i, hi] += fr
    return M


def _bilinear_taps(n_in, n_out):
    """Per-output-row (lo, hi, frac) taps (static Python, align_corners=True)."""
    taps = []
    for o in range(n_out):
        if n_in == 1:
            taps.append((0, 0, 0.0))
            continue
        src = o * (n_in - 1) / (n_out - 1)
        lo = min(int(np.floor(src)), n_in - 1)
        hi = min(lo + 1, n_in - 1)
        taps.append((lo, hi, float(src - lo)))
    return tuple(taps)


# ----------------------------------------------------------------------------
# Pallas kernel: one batch element per grid step, full feature map in VMEM.
# Upsample + (virtual) concat + pwconv1 + axial depthwise + 1x1 conv + CA +
# pwconv2 are all fused here.
# ----------------------------------------------------------------------------
def decoder_block_kernel(x0_ref,                     # (1, Cin, HW)        skip connection, flattened NCHW
                         x_ref,                      # (1, Cin, Hl, Wl)    low-res input (quarter size)
                         mwt_ref,                    # (Wl, W0)            W-direction interp matrix (Mw^T)
                         w1a_ref, w1b_ref, b1_ref,   # (C2,Cin),(C2,Cin),(C2,1)   pwconv1 split [x0 | up(x)]
                         kh_ref, bh_ref,             # (C2,5),(C2,1)       horizontal dw (1x5)
                         kv_ref, bv_ref,             # (C2,5),(C2,1)       vertical   dw (5x1)
                         wc_ref, bc_ref,             # (Cout,C2),(Cout,1)  1x1 conv -> Cout
                         wm1_ref, wm2_ref,           # (Cout,Cr),(Cout,Cr) CA-MLP (W1^T, W2), no bias
                         w2_ref, b2_ref,             # (Cout,Cout),(Cout,1) pwconv2
                         o_ref,                      # (1, Cout, HW)
                         tmpw_ref,                   # scratch (Cin, Hl, W0)
                         up_ref,                     # scratch (Cin, HW)
                         *, H, W, h_taps):
    HW = x0_ref.shape[2]
    Cin = x_ref.shape[1]
    Hl, Wl = x_ref.shape[2], x_ref.shape[3]
    W0 = W

    # --- fused bilinear x2 upsample (align_corners=True), separable ---------
    # W-direction: one MXU matmul against the dense (Wl, W0) interp matrix.
    xr = x_ref[0].reshape(Cin * Hl, Wl)                              # leading-dim merge only
    tmpw_ref[...] = jnp.dot(xr, mwt_ref[...],
                            preferred_element_type=jnp.float32
                            ).reshape(Cin, Hl, W0)                   # leading-dim split only
    # H-direction: static 2-tap blend per output row, stored straight into the
    # flattened (Cin, H0*W0) layout (no lane-crossing reshape).
    for o, (lo, hi, fr) in enumerate(h_taps):
        r_lo = tmpw_ref[:, lo, :]                                    # (Cin, W0)
        if fr == 0.0:
            row = r_lo
        else:
            row = r_lo * (1.0 - fr) + tmpw_ref[:, hi, :] * fr
        up_ref[:, o * W0:(o + 1) * W0] = row

    # --- PointwiseConv #1 on the UNmaterialized concat [x0 | up(x)] ----------
    y = (jnp.dot(w1a_ref[...], x0_ref[0], preferred_element_type=jnp.float32)
         + jnp.dot(w1b_ref[...], up_ref[...], preferred_element_type=jnp.float32)
         + b1_ref[...])
    y = jnp.maximum(y, 0.0)                                          # (C2, HW)

    # --- merged axial depthwise (1x5 + 5x1) + residual in ONE accumulator ---
    lane = lax.broadcasted_iota(jnp.int32, (1, HW), 1)
    w_idx = lane % W0            # only horizontal masks need it; one int op/step
    kh = kh_ref[...]                                                 # (C2, 5)
    kv = kv_ref[...]                                                 # (C2, 5)
    acc = (y * (kh[:, HALF:HALF + 1] + kv[:, HALF:HALF + 1] + 1.0)
           + (bh_ref[...] + bv_ref[...]))
    for t in range(KERNEL_LEN):
        if t == HALF:
            continue
        d = t - HALF                                                 # tap offset
        # horizontal tap (along W): single-compare edge mask
        sh = pltpu.roll(y, shift=(-d) % HW, axis=1)                  # y[:, j + d]
        m_h = (w_idx < W0 - d) if d > 0 else (w_idx >= -d)
        acc = acc + jnp.where(m_h, sh, 0.0) * kh[:, t:t + 1]
        # vertical tap (along H): mask from the flat lane index, no div/mod
        sv = pltpu.roll(y, shift=(-d * W0) % HW, axis=1)             # y[:, j + d*W]
        m_v = (lane < (H - d) * W0) if d > 0 else (lane >= (-d) * W0)
        acc = acc + jnp.where(m_v, sv, 0.0) * kv[:, t:t + 1]
    z = jnp.maximum(acc, 0.0)                                        # relu(h+v+x)

    # --- 1x1 conv -> Cout ----------------------------------------------------
    a = jnp.dot(wc_ref[...], z, preferred_element_type=jnp.float32) + bc_ref[...]

    # --- CALayer: GAP -> Linear -> ReLU -> Linear -> Sigmoid -> scale --------
    pooled = jnp.mean(a, axis=1, keepdims=True)                      # (Cout, 1)
    hid = jnp.maximum(jnp.sum(wm1_ref[...] * pooled, axis=0, keepdims=True), 0.0)  # (1, Cr)
    s = jax.nn.sigmoid(jnp.sum(wm2_ref[...] * hid, axis=1, keepdims=True))         # (Cout, 1)
    a = jnp.maximum(a * s, 0.0)                                      # relu before pwconv2

    # --- PointwiseConv #2 + final relu (one max covers both relus) -----------
    out = jnp.dot(w2_ref[...], a, preferred_element_type=jnp.float32) + b2_ref[...]
    o_ref[0] = jnp.maximum(out, 0.0)


# ----------------------------------------------------------------------------
# Wrapper: no upsample, no concat, no transposes on the XLA side.
# ----------------------------------------------------------------------------
def run_pallas(x0_flat, x_lo, mwt, weights, H0, W0):
    B, Cin, HW = x0_flat.shape
    Hl, Wl = x_lo.shape[2], x_lo.shape[3]
    C2 = 2 * Cin
    Cout = weights[7].shape[0]                       # wc: (Cout, C2)

    def full_spec(arr):
        nd = arr.ndim
        return pl.BlockSpec(arr.shape, lambda b, nd=nd: (0,) * nd)

    in_specs = [pl.BlockSpec((1, Cin, HW), lambda b: (b, 0, 0)),
                pl.BlockSpec((1, Cin, Hl, Wl), lambda b: (b, 0, 0, 0)),
                full_spec(mwt)]
    in_specs += [full_spec(w) for w in weights]      # constant block idx -> fetched once
    out_specs = pl.BlockSpec((1, Cout, HW), lambda b: (b, 0, 0))

    kernel = functools.partial(decoder_block_kernel, H=H0, W=W0,
                               h_taps=_bilinear_taps(Hl, H0))

    # Generation-aware VMEM budget: ~75% of physical (96 MiB v5e/v6e, 48 MiB v7x).
    try:
        vmem_cap = pltpu.get_tpu_info().vmem_capacity_bytes
    except Exception:
        vmem_cap = 64 * 1024 * 1024
    ceiling = max(int(vmem_cap * 3 // 4), 32 * 1024 * 1024)
    need = 4 * HW * (4 * Cin + 4 * Cout + 8 * C2) + 4 * 4 * Cin * Hl * Wl
    vmem_limit = int(min(max(2 * need, 32 * 1024 * 1024), ceiling))

    return pl.pallas_call(
        kernel,
        out_shape=jax.ShapeDtypeStruct((B, Cout, HW), jnp.float32),
        grid_spec=pltpu.PrefetchScalarGridSpec(
            num_scalar_prefetch=0,
            grid=(B,),
            in_specs=in_specs,
            out_specs=out_specs,
            scratch_shapes=[pltpu.VMEM((Cin, Hl, W0), jnp.float32),   # W-interp temp
                            pltpu.VMEM((Cin, HW), jnp.float32)],      # up(x), flat
        ),
        compiler_params=pltpu.CompilerParams(
            dimension_semantics=("parallel",),        # batch over cores (v7x megacore)
            vmem_limit_bytes=vmem_limit,
        ),
    )(x0_flat, x_lo, mwt, *weights)


def decoder_block(x0_nchw, x_nchw, weights):
    B, Cin, H0, W0 = x0_nchw.shape
    Hl, Wl = x_nchw.shape[2], x_nchw.shape[3]
    mwt = jnp.asarray(_interp_matrix(Wl, W0).T)       # (Wl, W0)
    x0_flat = x0_nchw.reshape(B, Cin, H0 * W0)        # free reshape (contiguous NCHW)
    out_flat = run_pallas(x0_flat, x_nchw, mwt, weights, H0, W0)
    return out_flat.reshape(B, -1, H0, W0)            # free reshape back to NCHW


# ----------------------------------------------------------------------------
# Pure-JAX reference (full module: upsample + concat + ...) for a sanity check.
# ----------------------------------------------------------------------------
def ref_forward(x0, x, weights):
    (w1a, w1b, b1, kh, bh, kv, bv, wc, bc, wm1t, wm2, w2, b2) = weights
    B, Cin, H0, W0 = x0.shape
    Hl, Wl = x.shape[2], x.shape[3]
    C2 = 2 * Cin
    hp = lax.Precision.HIGHEST
    Mh = jnp.asarray(_interp_matrix(Hl, H0))
    Mw = jnp.asarray(_interp_matrix(Wl, W0))
    x_up = jnp.einsum('Oh,Pw,bchw->bcOP', Mh, Mw, x, precision=hp)
    xcat = jnp.concatenate([x0, x_up], axis=1)                       # (B, C2, H0, W0)
    w1 = jnp.concatenate([w1a, w1b], axis=1)                         # (C2, C2)
    y = jax.nn.relu(jnp.einsum('oc,bchw->bohw', w1, xcat, precision=hp)
                    + b1.reshape(1, C2, 1, 1))
    dn = ('NCHW', 'OIHW', 'NCHW')
    h = lax.conv_general_dilated(
        y, kh.reshape(C2, 1, 1, KERNEL_LEN), (1, 1), ((0, 0), (HALF, HALF)),
        dimension_numbers=dn, feature_group_count=C2, precision=hp) + bh.reshape(1, C2, 1, 1)
    v = lax.conv_general_dilated(
        y, kv.reshape(C2, 1, KERNEL_LEN, 1), (1, 1), ((HALF, HALF), (0, 0)),
        dimension_numbers=dn, feature_group_count=C2, precision=hp) + bv.reshape(1, C2, 1, 1)
    z = jax.nn.relu(h + v + y)
    a = jnp.einsum('oc,bchw->bohw', wc, z, precision=hp) + bc.reshape(1, -1, 1, 1)
    pooled = a.mean(axis=(2, 3))                                     # (B, Cout)
    hid = jax.nn.relu(pooled @ wm1t)                                 # (B, Cr)
    s = jax.nn.sigmoid(hid @ wm2.T)                                  # (B, Cout)
    a = a * s[:, :, None, None]
    out = jax.nn.relu(jnp.einsum('oc,bchw->bohw', w2, jax.nn.relu(a), precision=hp)
                      + b2.reshape(1, -1, 1, 1))
    return out                                                       # (B, Cout, H0, W0)


# ----------------------------------------------------------------------------
def make_weights(key, in_channels, out_channels, reduction=16):
    C2 = 2 * in_channels
    Cout = out_channels
    Cr = max(Cout // reduction, 1)
    ks = jax.random.split(key, 13)
    g = lambda k, shape, s=0.1: (s * jax.random.normal(k, shape)).astype(jnp.float32)
    # Layout vs PyTorch:
    #   pwconv1 weight (C2, C2) is split column-wise into [W1a | W1b] = conv.weight[:, :, 0, 0]
    #   depthwise taps are (channel, tap); 1x1 conv weights are (out, in)
    #   CA MLP: wm1t == mlp[0].weight.T (Cout, Cr), wm2 == mlp[2].weight (Cout, Cr), bias=False
    return (
        g(ks[0], (C2, in_channels)), g(ks[1], (C2, in_channels)),    # pwconv1 split
        g(ks[2], (C2, 1), 0.05),
        g(ks[3], (C2, KERNEL_LEN)),  g(ks[4], (C2, 1), 0.05),        # horizontal dw
        g(ks[5], (C2, KERNEL_LEN)),  g(ks[6], (C2, 1), 0.05),        # vertical dw
        g(ks[7], (Cout, C2)),        g(ks[8], (Cout, 1), 0.05),      # 1x1 conv -> Cout
        g(ks[9], (Cout, Cr)),        g(ks[10], (Cout, Cr)),          # CA-MLP (no bias)
        g(ks[11], (Cout, Cout)),     g(ks[12], (Cout, 1), 0.05),     # pwconv2
    )


if __name__ == "__main__":
    B, Cin, H, W = 2, 8, 8, 8          # x:  (B, Cin, H, W)   low-res input
    Cout = 32                          # out_channels (reduction=16 -> hidden=2)
    H0, W0 = 2 * H, 2 * W              # x0: (B, Cin, 2H, 2W) skip connection

    key = jax.random.PRNGKey(0)
    k0, k1, kw = jax.random.split(key, 3)
    x0 = jax.random.normal(k0, (B, Cin, H0, W0), jnp.float32)
    x = jax.random.normal(k1, (B, Cin, H, W), jnp.float32)
    weights = make_weights(kw, Cin, Cout)

    out = decoder_block(x0, x, weights)              # (B, Cout, H0, W0)
    jax.block_until_ready(out)
    assert out.shape == (B, Cout, H0, W0)

    ref = ref_forward(x0, x, weights)
    np.testing.assert_allclose(np.asarray(out), np.asarray(ref),
                               rtol=5e-3, atol=5e-3)

    print("KERNEL_OK")
</pallas_src>

<mosaic_0001>
module attributes {stable_mosaic.version = 11 : i64} {
  func.func @decoder_block_kernel(%arg0: i32, %arg1: memref<1x8x256xf32, #tpu.memory_space<vmem>>, %arg2: memref<1x8x8x8xf32, #tpu.memory_space<vmem>>, %arg3: memref<8x16xf32, #tpu.memory_space<vmem>>, %arg4: memref<16x8xf32, #tpu.memory_space<vmem>>, %arg5: memref<16x8xf32, #tpu.memory_space<vmem>>, %arg6: memref<16x1xf32, #tpu.memory_space<vmem>>, %arg7: memref<16x5xf32, #tpu.memory_space<vmem>>, %arg8: memref<16x1xf32, #tpu.memory_space<vmem>>, %arg9: memref<16x5xf32, #tpu.memory_space<vmem>>, %arg10: memref<16x1xf32, #tpu.memory_space<vmem>>, %arg11: memref<32x16xf32, #tpu.memory_space<vmem>>, %arg12: memref<32x1xf32, #tpu.memory_space<vmem>>, %arg13: memref<32x2xf32, #tpu.memory_space<vmem>>, %arg14: memref<32x2xf32, #tpu.memory_space<vmem>>, %arg15: memref<32x32xf32, #tpu.memory_space<vmem>>, %arg16: memref<32x1xf32, #tpu.memory_space<vmem>>, %arg17: memref<1x32x256xf32, #tpu.memory_space<vmem>>, %arg18: memref<8x8x16xf32, #tpu.memory_space<vmem>>, %arg19: memref<8x256xf32, #tpu.memory_space<vmem>>) attributes {dimension_semantics = [#tpu.dimension_semantics<parallel>], iteration_bounds = array<i64: 2>, scalar_prefetch = 0 : i64, scratch_operands = 2 : i64, tpu.core_type = #tpu.core_type<tc>, window_params = [{transform_indices = @transform_0, window_bounds = array<i64: 1, 8, 256>}, {transform_indices = @transform_1, window_bounds = array<i64: 1, 8, 8, 8>}, {pipeline_mode = #tpu.pipeline_mode<synchronous>, transform_indices = @transform_2, window_bounds = array<i64: 8, 16>}, {pipeline_mode = #tpu.pipeline_mode<synchronous>, transform_indices = @transform_3, window_bounds = array<i64: 16, 8>}, {pipeline_mode = #tpu.pipeline_mode<synchronous>, transform_indices = @transform_4, window_bounds = array<i64: 16, 8>}, {pipeline_mode = #tpu.pipeline_mode<synchronous>, transform_indices = @transform_5, window_bounds = array<i64: 16, 1>}, {pipeline_mode = #tpu.pipeline_mode<synchronous>, transform_indices = @transform_6, window_bounds = array<i64: 16, 5>}, {pipeline_mode = #tpu.pipeline_mode<synchronous>, transform_indices = @transform_7, window_bounds = array<i64: 16, 1>}, {pipeline_mode = #tpu.pipeline_mode<synchronous>, transform_indices = @transform_8, window_bounds = array<i64: 16, 5>}, {pipeline_mode = #tpu.pipeline_mode<synchronous>, transform_indices = @transform_9, window_bounds = array<i64: 16, 1>}, {pipeline_mode = #tpu.pipeline_mode<synchronous>, transform_indices = @transform_10, window_bounds = array<i64: 32, 16>}, {pipeline_mode = #tpu.pipeline_mode<synchronous>, transform_indices = @transform_11, window_bounds = array<i64: 32, 1>}, {pipeline_mode = #tpu.pipeline_mode<synchronous>, transform_indices = @transform_12, window_bounds = array<i64: 32, 2>}, {pipeline_mode = #tpu.pipeline_mode<synchronous>, transform_indices = @transform_13, window_bounds = array<i64: 32, 2>}, {pipeline_mode = #tpu.pipeline_mode<synchronous>, transform_indices = @transform_14, window_bounds = array<i64: 32, 32>}, {pipeline_mode = #tpu.pipeline_mode<synchronous>, transform_indices = @transform_15, window_bounds = array<i64: 32, 1>}, {transform_indices = @transform_16, window_bounds = array<i64: 1, 32, 256>}]} {
    %c0 = arith.constant 0 : index
    %c0_0 = arith.constant 0 : index
    %c0_1 = arith.constant 0 : index
    %c0_2 = arith.constant 0 : index
    %0 = vector.load %arg2[%c0, %c0_0, %c0_1, %c0_2] : memref<1x8x8x8xf32, #tpu.memory_space<vmem>>, vector<1x8x8x8xf32>
    %1 = vector.shape_cast %0 : vector<1x8x8x8xf32> to vector<8x8x8xf32>
    %2 = vector.shape_cast %1 : vector<8x8x8xf32> to vector<64x8xf32>
    %c0_3 = arith.constant 0 : index
    %c0_4 = arith.constant 0 : index
    %3 = vector.load %arg3[%c0_3, %c0_4] : memref<8x16xf32, #tpu.memory_space<vmem>>, vector<8x16xf32>
    %cst = arith.constant dense<0.000000e+00> : vector<64x16xf32>
    %4 = tpu.matmul %2, %3, %cst {dimension_numbers = #tpu.dot_dimension_numbers<[1], [0], [0], [1], [0, 0, 1, 1], [], []>} : vector<64x8xf32>, vector<8x16xf32>, vector<64x16xf32> -> vector<64x16xf32>
    %5 = vector.shape_cast %4 : vector<64x16xf32> to vector<8x8x16xf32>
    %c0_5 = arith.constant 0 : index
    %c0_6 = arith.constant 0 : index
    %c0_7 = arith.constant 0 : index
    %6 = vector.load %arg18[%c0_5, %c0_6, %c0_7] : memref<8x8x16xf32, #tpu.memory_space<vmem>>, vector<8x8x16xf32>
    tpu.vector_store %arg18[%c0_5, %c0_6, %c0_7], %5 {strides = array<i32>} : memref<8x8x16xf32, #tpu.memory_space<vmem>>, vector<8x8x16xf32>,
    %c0_8 = arith.constant 0 : index
    %c0_9 = arith.constant 0 : index
    %c0_10 = arith.constant 0 : index
    %7 = vector.load %arg18[%c0_8, %c0_9, %c0_10] : memref<8x8x16xf32, #tpu.memory_space<vmem>>, vector<8x1x16xf32>
    %8 = vector.shape_cast %7 : vector<8x1x16xf32> to vector<8x16xf32>
    %c0_11 = arith.constant 0 : index
    %c0_12 = arith.constant 0 : index
    %9 = vector.load %arg19[%c0_11, %c0_12] : memref<8x256xf32, #tpu.memory_space<vmem>>, vector<8x16xf32>
    tpu.vector_store %arg19[%c0_11, %c0_12], %8 {strides = array<i32>} : memref<8x256xf32, #tpu.memory_space<vmem>>, vector<8x16xf32>,
    %c0_13 = arith.constant 0 : index
    %c0_14 = arith.constant 0 : index
    %c0_15 = arith.constant 0 : index
    %10 = vector.load %arg18[%c0_13, %c0_14, %c0_15] : memref<8x8x16xf32, #tpu.memory_space<vmem>>, vector<8x1x16xf32>
    %11 = vector.shape_cast %10 : vector<8x1x16xf32> to vector<8x16xf32>
    %cst_16 = arith.constant 0.533333361 : f32
    %12 = vector.broadcast %cst_16 : f32 to vector<8x16xf32>
    %13 = arith.mulf %11, %12 : vector<8x16xf32>
    %c0_17 = arith.constant 0 : index
    %c1 = arith.constant 1 : index
    %c0_18 = arith.constant 0 : index
    %14 = vector.load %arg18[%c0_17, %c1, %c0_18] : memref<8x8x16xf32, #tpu.memory_space<vmem>>, vector<8x1x16xf32>
    %15 = vector.shape_cast %14 : vector<8x1x16xf32> to vector<8x16xf32>
    %cst_19 = arith.constant 0.466666669 : f32
    %16 = vector.broadcast %cst_19 : f32 to vector<8x16xf32>
    %17 = arith.mulf %15, %16 : vector<8x16xf32>
    %18 = arith.addf %13, %17 : vector<8x16xf32>
    %c0_20 = arith.constant 0 : index
    %c16 = arith.constant 16 : index
    %19 = vector.load %arg19[%c0_20, %c16] : memref<8x256xf32, #tpu.memory_space<vmem>>, vector<8x16xf32>
    tpu.vector_store %arg19[%c0_20, %c16], %18 {strides = array<i32>} : memref<8x256xf32, #tpu.memory_space<vmem>>, vector<8x16xf32>,
    %c0_21 = arith.constant 0 : index
    %c0_22 = arith.constant 0 : index
    %c0_23 = arith.constant 0 : index
    %20 = vector.load %arg18[%c0_21, %c0_22, %c0_23] : memref<8x8x16xf32, #tpu.memory_space<vmem>>, vector<8x1x16xf32>
    %21 = vector.shape_cast %20 : vector<8x1x16xf32> to vector<8x16xf32>
    %cst_24 = arith.constant 0.0666666701 : f32
    %22 = vector.broadcast %cst_24 : f32 to vector<8x16xf32>
    %23 = arith.mulf %21, %22 : vector<8x16xf32>
    %c0_25 = arith.constant 0 : index
    %c1_26 = arith.constant 1 : index
    %c0_27 = arith.constant 0 : index
    %24 = vector.load %arg18[%c0_25, %c1_26, %c0_27] : memref<8x8x16xf32, #tpu.memory_space<vmem>>, vector<8x1x16xf32>
    %25 = vector.shape_cast %24 : vector<8x1x16xf32> to vector<8x16xf32>
    %cst_28 = arith.constant 0.933333337 : f32
    %26 = vector.broadcast %cst_28 : f32 to vector<8x16xf32>
    %27 = arith.mulf %25, %26 : vector<8x16xf32>
    %28 = arith.addf %23, %27 : vector<8x16xf32>
    %c0_29 = arith.constant 0 : index
    %c32 = arith.constant 32 : index
    %29 = vector.load %arg19[%c0_29, %c32] : memref<8x256xf32, #tpu.memory_space<vmem>>, vector<8x16xf32>
    tpu.vector_store %arg19[%c0_29, %c32], %28 {strides = array<i32>} : memref<8x256xf32, #tpu.memory_space<vmem>>, vector<8x16xf32>,
    %c0_30 = arith.constant 0 : index
    %c1_31 = arith.constant 1 : index
    %c0_32 = arith.constant 0 : index
    %30 = vector.load %arg18[%c0_30, %c1_31, %c0_32] : memref<8x8x16xf32, #tpu.memory_space<vmem>>, vector<8x1x16xf32>
    %31 = vector.shape_cast %30 : vector<8x1x16xf32> to vector<8x16xf32>
    %cst_33 = arith.constant 6.000000e-01 : f32
    %32 = vector.broadcast %cst_33 : f32 to vector<8x16xf32>
    %33 = arith.mulf %31, %32 : vector<8x16xf32>
    %c0_34 = arith.constant 0 : index
    %c2 = arith.constant 2 : index
    %c0_35 = arith.constant 0 : index
    %34 = vector.load %arg18[%c0_34, %c2, %c0_35] : memref<8x8x16xf32, #tpu.memory_space<vmem>>, vector<8x1x16xf32>
    %35 = vector.shape_cast %34 : vector<8x1x16xf32> to vector<8x16xf32>
    %cst_36 = arith.constant 4.000000e-01 : f32
    %36 = vector.broadcast %cst_36 : f32 to vector<8x16xf32>
    %37 = arith.mulf %35, %36 : vector<8x16xf32>
    %38 = arith.addf %33, %37 : vector<8x16xf32>
    %c0_37 = arith.constant 0 : index
    %c48 = arith.constant 48 : index
    %39 = vector.load %arg19[%c0_37, %c48] : memref<8x256xf32, #tpu.memory_space<vmem>>, vector<8x16xf32>
    tpu.vector_store %arg19[%c0_37, %c48], %38 {strides = array<i32>} : memref<8x256xf32, #tpu.memory_space<vmem>>, vector<8x16xf32>,
    %c0_38 = arith.constant 0 : index
    %c1_39 = arith.constant 1 : index
    %c0_40 = arith.constant 0 : index
    %40 = vector.load %arg18[%c0_38, %c1_39, %c0_40] : memref<8x8x16xf32, #tpu.memory_space<vmem>>, vector<8x1x16xf32>
    %41 = vector.shape_cast %40 : vector<8x1x16xf32> to vector<8x16xf32>
    %cst_41 = arith.constant 0.13333334 : f32
    %42 = vector.broadcast %cst_41 : f32 to vector<8x16xf32>
    %43 = arith.mulf %41, %42 : vector<8x16xf32>
    %c0_42 = arith.constant 0 : index
    %c2_43 = arith.constant 2 : index
    %c0_44 = arith.constant 0 : index
    %44 = vector.load %arg18[%c0_42, %c2_43, %c0_44] : memref<8x8x16xf32, #tpu.memory_space<vmem>>, vector<8x1x16xf32>
    %45 = vector.shape_cast %44 : vector<8x1x16xf32> to vector<8x16xf32>
    %cst_45 = arith.constant 0.866666674 : f32
    %46 = vector.broadcast %cst_45 : f32 to vector<8x16xf32>
    %47 = arith.mulf %45, %46 : vector<8x16xf32>
    %48 = arith.addf %43, %47 : vector<8x16xf32>
    %c0_46 = arith.constant 0 : index
    %c64 = arith.constant 64 : index
    %49 = vector.load %arg19[%c0_46, %c64] : memref<8x256xf32, #tpu.memory_space<vmem>>, vector<8x16xf32>
    tpu.vector_store %arg19[%c0_46, %c64], %48 {strides = array<i32>} : memref<8x256xf32, #tpu.memory_space<vmem>>, vector<8x16xf32>,
    %c0_47 = arith.constant 0 : index
    %c2_48 = arith.constant 2 : index
    %c0_49 = arith.constant 0 : index
    %50 = vector.load %arg18[%c0_47, %c2_48, %c0_49] : memref<8x8x16xf32, #tpu.memory_space<vmem>>, vector<8x1x16xf32>
    %51 = vector.shape_cast %50 : vector<8x1x16xf32> to vector<8x16xf32>
    %cst_50 = arith.constant 0.666666686 : f32
    %52 = vector.broadcast %cst_50 : f32 to vector<8x16xf32>
    %53 = arith.mulf %51, %52 : vector<8x16xf32>
    %c0_51 = arith.constant 0 : index
    %c3 = arith.constant 3 : index
    %c0_52 = arith.constant 0 : index
    %54 = vector.load %arg18[%c0_51, %c3, %c0_52] : memref<8x8x16xf32, #tpu.memory_space<vmem>>, vector<8x1x16xf32>
    %55 = vector.shape_cast %54 : vector<8x1x16xf32> to vector<8x16xf32>
    %cst_53 = arith.constant 0.333333343 : f32
    %56 = vector.broadcast %cst_53 : f32 to vector<8x16xf32>
    %57 = arith.mulf %55, %56 : vector<8x16xf32>
    %58 = arith.addf %53, %57 : vector<8x16xf32>
    %c0_54 = arith.constant 0 : index
    %c80 = arith.constant 80 : index
    %59 = vector.load %arg19[%c0_54, %c80] : memref<8x256xf32, #tpu.memory_space<vmem>>, vector<8x16xf32>
    tpu.vector_store %arg19[%c0_54, %c80], %58 {strides = array<i32>} : memref<8x256xf32, #tpu.memory_space<vmem>>, vector<8x16xf32>,
    %c0_55 = arith.constant 0 : index
    %c2_56 = arith.constant 2 : index
    %c0_57 = arith.constant 0 : index
    %60 = vector.load %arg18[%c0_55, %c2_56, %c0_57] : memref<8x8x16xf32, #tpu.memory_space<vmem>>, vector<8x1x16xf32>
    %61 = vector.shape_cast %60 : vector<8x1x16xf32> to vector<8x16xf32>
    %cst_58 = arith.constant 2.000000e-01 : f32
    %62 = vector.broadcast %cst_58 : f32 to vector<8x16xf32>
    %63 = arith.mulf %61, %62 : vector<8x16xf32>
    %c0_59 = arith.constant 0 : index
    %c3_60 = arith.constant 3 : index
    %c0_61 = arith.constant 0 : index
    %64 = vector.load %arg18[%c0_59, %c3_60, %c0_61] : memref<8x8x16xf32, #tpu.memory_space<vmem>>, vector<8x1x16xf32>
    %65 = vector.shape_cast %64 : vector<8x1x16xf32> to vector<8x16xf32>
    %cst_62 = arith.constant 8.000000e-01 : f32
    %66 = vector.broadcast %cst_62 : f32 to vector<8x16xf32>
    %67 = arith.mulf %65, %66 : vector<8x16xf32>
    %68 = arith.addf %63, %67 : vector<8x16xf32>
    %c0_63 = arith.constant 0 : index
    %c96 = arith.constant 96 : index
    %69 = vector.load %arg19[%c0_63, %c96] : memref<8x256xf32, #tpu.memory_space<vmem>>, vector<8x16xf32>
    tpu.vector_store %arg19[%c0_63, %c96], %68 {strides = array<i32>} : memref<8x256xf32, #tpu.memory_space<vmem>>, vector<8x16xf32>,
    %c0_64 = arith.constant 0 : index
    %c3_65 = arith.constant 3 : index
    %c0_66 = arith.constant 0 : index
    %70 = vector.load %arg18[%c0_64, %c3_65, %c0_66] : memref<8x8x16xf32, #tpu.memory_space<vmem>>, vector<8x1x16xf32>
    %71 = vector.shape_cast %70 : vector<8x1x16xf32> to vector<8x16xf32>
    %cst_67 = arith.constant 0.733333349 : f32
    %72 = vector.broadcast %cst_67 : f32 to vector<8x16xf32>
    %73 = arith.mulf %71, %72 : vector<8x16xf32>
    %c0_68 = arith.constant 0 : index
    %c4 = arith.constant 4 : index
    %c0_69 = arith.constant 0 : index
    %74 = vector.load %arg18[%c0_68, %c4, %c0_69] : memref<8x8x16xf32, #tpu.memory_space<vmem>>, vector<8x1x16xf32>
    %75 = vector.shape_cast %74 : vector<8x1x16xf32> to vector<8x16xf32>
    %cst_70 = arith.constant 0.266666681 : f32
    %76 = vector.broadcast %cst_70 : f32 to vector<8x16xf32>
    %77 = arith.mulf %75, %76 : vector<8x16xf32>
    %78 = arith.addf %73, %77 : vector<8x16xf32>
    %c0_71 = arith.constant 0 : index
    %c112 = arith.constant 112 : index
    %79 = vector.load %arg19[%c0_71, %c112] : memref<8x256xf32, #tpu.memory_space<vmem>>, vector<8x16xf32>
    tpu.vector_store %arg19[%c0_71, %c112], %78 {strides = array<i32>} : memref<8x256xf32, #tpu.memory_space<vmem>>, vector<8x16xf32>,
    %c0_72 = arith.constant 0 : index
    %c3_73 = arith.constant 3 : index
    %c0_74 = arith.constant 0 : index
    %80 = vector.load %arg18[%c0_72, %c3_73, %c0_74] : memref<8x8x16xf32, #tpu.memory_space<vmem>>, vector<8x1x16xf32>
    %81 = vector.shape_cast %80 : vector<8x1x16xf32> to vector<8x16xf32>
    %cst_75 = arith.constant 0.266666681 : f32
    %82 = vector.broadcast %cst_75 : f32 to vector<8x16xf32>
    %83 = arith.mulf %81, %82 : vector<8x16xf32>
    %c0_76 = arith.constant 0 : index
    %c4_77 = arith.constant 4 : index
    %c0_78 = arith.constant 0 : index
    %84 = vector.load %arg18[%c0_76, %c4_77, %c0_78] : memref<8x8x16xf32, #tpu.memory_space<vmem>>, vector<8x1x16xf32>
    %85 = vector.shape_cast %84 : vector<8x1x16xf32> to vector<8x16xf32>
    %cst_79 = arith.constant 0.733333349 : f32
    %86 = vector.broadcast %cst_79 : f32 to vector<8x16xf32>
    %87 = arith.mulf %85, %86 : vector<8x16xf32>
    %88 = arith.addf %83, %87 : vector<8x16xf32>
    %c0_80 = arith.constant 0 : index
    %c128 = arith.constant 128 : index
    %89 = vector.load %arg19[%c0_80, %c128] : memref<8x256xf32, #tpu.memory_space<vmem>>, vector<8x16xf32>
    tpu.vector_store %arg19[%c0_80, %c128], %88 {strides = array<i32>} : memref<8x256xf32, #tpu.memory_space<vmem>>, vector<8x16xf32>,
    %c0_81 = arith.constant 0 : index
    %c4_82 = arith.constant 4 : index
    %c0_83 = arith.constant 0 : index
    %90 = vector.load %arg18[%c0_81, %c4_82, %c0_83] : memref<8x8x16xf32, #tpu.memory_space<vmem>>, vector<8x1x16xf32>
    %91 = vector.shape_cast %90 : vector<8x1x16xf32> to vector<8x16xf32>
    %cst_84 = arith.constant 8.000000e-01 : f32
    %92 = vector.broadcast %cst_84 : f32 to vector<8x16xf32>
    %93 = arith.mulf %91, %92 : vector<8x16xf32>
    %c0_85 = arith.constant 0 : index
    %c5 = arith.constant 5 : index
    %c0_86 = arith.constant 0 : index
    %94 = vector.load %arg18[%c0_85, %c5, %c0_86] : memref<8x8x16xf32, #tpu.memory_space<vmem>>, vector<8x1x16xf32>
    %95 = vector.shape_cast %94 : vector<8x1x16xf32> to vector<8x16xf32>
    %cst_87 = arith.constant 2.000000e-01 : f32
    %96 = vector.broadcast %cst_87 : f32 to vector<8x16xf32>
    %97 = arith.mulf %95, %96 : vector<8x16xf32>
    %98 = arith.addf %93, %97 : vector<8x16xf32>
    %c0_88 = arith.constant 0 : index
    %c144 = arith.constant 144 : index
    %99 = vector.load %arg19[%c0_88, %c144] : memref<8x256xf32, #tpu.memory_space<vmem>>, vector<8x16xf32>
    tpu.vector_store %arg19[%c0_88, %c144], %98 {strides = array<i32>} : memref<8x256xf32, #tpu.memory_space<vmem>>, vector<8x16xf32>,
    %c0_89 = arith.constant 0 : index
    %c4_90 = arith.constant 4 : index
    %c0_91 = arith.constant 0 : index
    %100 = vector.load %arg18[%c0_89, %c4_90, %c0_91] : memref<8x8x16xf32, #tpu.memory_space<vmem>>, vector<8x1x16xf32>
    %101 = vector.shape_cast %100 : vector<8x1x16xf32> to vector<8x16xf32>
    %cst_92 = arith.constant 0.333333343 : f32
    %102 = vector.broadcast %cst_92 : f32 to vector<8x16xf32>
    %103 = arith.mulf %101, %102 : vector<8x16xf32>
    %c0_93 = arith.constant 0 : index
    %c5_94 = arith.constant 5 : index
    %c0_95 = arith.constant 0 : index
    %104 = vector.load %arg18[%c0_93, %c5_94, %c0_95] : memref<8x8x16xf32, #tpu.memory_space<vmem>>, vector<8x1x16xf32>
    %105 = vector.shape_cast %104 : vector<8x1x16xf32> to vector<8x16xf32>
    %cst_96 = arith.constant 0.666666686 : f32
    %106 = vector.broadcast %cst_96 : f32 to vector<8x16xf32>
    %107 = arith.mulf %105, %106 : vector<8x16xf32>
    %108 = arith.addf %103, %107 : vector<8x16xf32>
    %c0_97 = arith.constant 0 : index
    %c160 = arith.constant 160 : index
    %109 = vector.load %arg19[%c0_97, %c160] : memref<8x256xf32, #tpu.memory_space<vmem>>, vector<8x16xf32>
    tpu.vector_store %arg19[%c0_97, %c160], %108 {strides = array<i32>} : memref<8x256xf32, #tpu.memory_space<vmem>>, vector<8x16xf32>,
    %c0_98 = arith.constant 0 : index
    %c5_99 = arith.constant 5 : index
    %c0_100 = arith.constant 0 : index
    %110 = vector.load %arg18[%c0_98, %c5_99, %c0_100] : memref<8x8x16xf32, #tpu.memory_space<vmem>>, vector<8x1x16xf32>
    %111 = vector.shape_cast %110 : vector<8x1x16xf32> to vector<8x16xf32>
    %cst_101 = arith.constant 0.866666674 : f32
    %112 = vector.broadcast %cst_101 : f32 to vector<8x16xf32>
    %113 = arith.mulf %111, %112 : vector<8x16xf32>
    %c0_102 = arith.constant 0 : index
    %c6 = arith.constant 6 : index
    %c0_103 = arith.constant 0 : index
    %114 = vector.load %arg18[%c0_102, %c6, %c0_103] : memref<8x8x16xf32, #tpu.memory_space<vmem>>, vector<8x1x16xf32>
    %115 = vector.shape_cast %114 : vector<8x1x16xf32> to vector<8x16xf32>
    %cst_104 = arith.constant 0.13333334 : f32
    %116 = vector.broadcast %cst_104 : f32 to vector<8x16xf32>
    %117 = arith.mulf %115, %116 : vector<8x16xf32>
    %118 = arith.addf %113, %117 : vector<8x16xf32>
    %c0_105 = arith.constant 0 : index
    %c176 = arith.constant 176 : index
    %119 = vector.load %arg19[%c0_105, %c176] : memref<8x256xf32, #tpu.memory_space<vmem>>, vector<8x16xf32>
    tpu.vector_store %arg19[%c0_105, %c176], %118 {strides = array<i32>} : memref<8x256xf32, #tpu.memory_space<vmem>>, vector<8x16xf32>,
    %c0_106 = arith.constant 0 : index
    %c5_107 = arith.constant 5 : index
    %c0_108 = arith.constant 0 : index
    %120 = vector.load %arg18[%c0_106, %c5_107, %c0_108] : memref<8x8x16xf32, #tpu.memory_space<vmem>>, vector<8x1x16xf32>
    %121 = vector.shape_cast %120 : vector<8x1x16xf32> to vector<8x16xf32>
    %cst_109 = arith.constant 4.000000e-01 : f32
    %122 = vector.broadcast %cst_109 : f32 to vector<8x16xf32>
    %123 = arith.mulf %121, %122 : vector<8x16xf32>
    %c0_110 = arith.constant 0 : index
    %c6_111 = arith.constant 6 : index
    %c0_112 = arith.constant 0 : index
    %124 = vector.load %arg18[%c0_110, %c6_111, %c0_112] : memref<8x8x16xf32, #tpu.memory_space<vmem>>, vector<8x1x16xf32>
    %125 = vector.shape_cast %124 : vector<8x1x16xf32> to vector<8x16xf32>
    %cst_113 = arith.constant 6.000000e-01 : f32
    %126 = vector.broadcast %cst_113 : f32 to vector<8x16xf32>
    %127 = arith.mulf %125, %126 : vector<8x16xf32>
    %128 = arith.addf %123, %127 : vector<8x16xf32>
    %c0_114 = arith.constant 0 : index
    %c192 = arith.constant 192 : index
    %129 = vector.load %arg19[%c0_114, %c192] : memref<8x256xf32, #tpu.memory_space<vmem>>, vector<8x16xf32>
    tpu.vector_store %arg19[%c0_114, %c192], %128 {strides = array<i32>} : memref<8x256xf32, #tpu.memory_space<vmem>>, vector<8x16xf32>,
    %c0_115 = arith.constant 0 : index
    %c6_116 = arith.constant 6 : index
    %c0_117 = arith.constant 0 : index
    %130 = vector.load %arg18[%c0_115, %c6_116, %c0_117] : memref<8x8x16xf32, #tpu.memory_space<vmem>>, vector<8x1x16xf32>
    %131 = vector.shape_cast %130 : vector<8x1x16xf32> to vector<8x16xf32>
    %cst_118 = arith.constant 0.933333337 : f32
    %132 = vector.broadcast %cst_118 : f32 to vector<8x16xf32>
    %133 = arith.mulf %131, %132 : vector<8x16xf32>
    %c0_119 = arith.constant 0 : index
    %c7 = arith.constant 7 : index
    %c0_120 = arith.constant 0 : index
    %134 = vector.load %arg18[%c0_119, %c7, %c0_120] : memref<8x8x16xf32, #tpu.memory_space<vmem>>, vector<8x1x16xf32>
    %135 = vector.shape_cast %134 : vector<8x1x16xf32> to vector<8x16xf32>
    %cst_121 = arith.constant 0.0666666701 : f32
    %136 = vector.broadcast %cst_121 : f32 to vector<8x16xf32>
    %137 = arith.mulf %135, %136 : vector<8x16xf32>
    %138 = arith.addf %133, %137 : vector<8x16xf32>
    %c0_122 = arith.constant 0 : index
    %c208 = arith.constant 208 : index
    %139 = vector.load %arg19[%c0_122, %c208] : memref<8x256xf32, #tpu.memory_space<vmem>>, vector<8x16xf32>
    tpu.vector_store %arg19[%c0_122, %c208], %138 {strides = array<i32>} : memref<8x256xf32, #tpu.memory_space<vmem>>, vector<8x16xf32>,
    %c0_123 = arith.constant 0 : index
    %c6_124 = arith.constant 6 : index
    %c0_125 = arith.constant 0 : index
    %140 = vector.load %arg18[%c0_123, %c6_124, %c0_125] : memref<8x8x16xf32, #tpu.memory_space<vmem>>, vector<8x1x16xf32>
    %141 = vector.shape_cast %140 : vector<8x1x16xf32> to vector<8x16xf32>
    %cst_126 = arith.constant 0.466666669 : f32
    %142 = vector.broadcast %cst_126 : f32 to vector<8x16xf32>
    %143 = arith.mulf %141, %142 : vector<8x16xf32>
    %c0_127 = arith.constant 0 : index
    %c7_128 = arith.constant 7 : index
    %c0_129 = arith.constant 0 : index
    %144 = vector.load %arg18[%c0_127, %c7_128, %c0_129] : memref<8x8x16xf32, #tpu.memory_space<vmem>>, vector<8x1x16xf32>
    %145 = vector.shape_cast %144 : vector<8x1x16xf32> to vector<8x16xf32>
    %cst_130 = arith.constant 0.533333361 : f32
    %146 = vector.broadcast %cst_130 : f32 to vector<8x16xf32>
    %147 = arith.mulf %145, %146 : vector<8x16xf32>
    %148 = arith.addf %143, %147 : vector<8x16xf32>
    %c0_131 = arith.constant 0 : index
    %c224 = arith.constant 224 : index
    %149 = vector.load %arg19[%c0_131, %c224] : memref<8x256xf32, #tpu.memory_space<vmem>>, vector<8x16xf32>
    tpu.vector_store %arg19[%c0_131, %c224], %148 {strides = array<i32>} : memref<8x256xf32, #tpu.memory_space<vmem>>, vector<8x16xf32>,
    %c0_132 = arith.constant 0 : index
    %c7_133 = arith.constant 7 : index
    %c0_134 = arith.constant 0 : index
    %150 = vector.load %arg18[%c0_132, %c7_133, %c0_134] : memref<8x8x16xf32, #tpu.memory_space<vmem>>, vector<8x1x16xf32>
    %151 = vector.shape_cast %150 : vector<8x1x16xf32> to vector<8x16xf32>
    %c0_135 = arith.constant 0 : index
    %c240 = arith.constant 240 : index
    %152 = vector.load %arg19[%c0_135, %c240] : memref<8x256xf32, #tpu.memory_space<vmem>>, vector<8x16xf32>
    tpu.vector_store %arg19[%c0_135, %c240], %151 {strides = array<i32>} : memref<8x256xf32, #tpu.memory_space<vmem>>, vector<8x16xf32>,
    %c0_136 = arith.constant 0 : index
    %c0_137 = arith.constant 0 : index
    %153 = vector.load %arg4[%c0_136, %c0_137] : memref<16x8xf32, #tpu.memory_space<vmem>>, vector<16x8xf32>
    %c0_138 = arith.constant 0 : index
    %c0_139 = arith.constant 0 : index
    %c0_140 = arith.constant 0 : index
    %154 = vector.load %arg1[%c0_138, %c0_139, %c0_140] : memref<1x8x256xf32, #tpu.memory_space<vmem>>, vector<1x8x256xf32>
    %155 = vector.shape_cast %154 : vector<1x8x256xf32> to vector<8x256xf32>
    %cst_141 = arith.constant dense<0.000000e+00> : vector<16x256xf32>
    %156 = tpu.matmul %153, %155, %cst_141 {dimension_numbers = #tpu.dot_dimension_numbers<[1], [0], [0], [1], [0, 0, 1, 1], [], []>} : vector<16x8xf32>, vector<8x256xf32>, vector<16x256xf32> -> vector<16x256xf32>
    %c0_142 = arith.constant 0 : index
    %c0_143 = arith.constant 0 : index
    %157 = vector.load %arg5[%c0_142, %c0_143] : memref<16x8xf32, #tpu.memory_space<vmem>>, vector<16x8xf32>
    %c0_144 = arith.constant 0 : index
    %c0_145 = arith.constant 0 : index
    %158 = vector.load %arg19[%c0_144, %c0_145] : memref<8x256xf32, #tpu.memory_space<vmem>>, vector<8x256xf32>
    %cst_146 = arith.constant dense<0.000000e+00> : vector<16x256xf32>
    %159 = tpu.matmul %157, %158, %cst_146 {dimension_numbers = #tpu.dot_dimension_numbers<[1], [0], [0], [1], [0, 0, 1, 1], [], []>} : vector<16x8xf32>, vector<8x256xf32>, vector<16x256xf32> -> vector<16x256xf32>
    %160 = arith.addf %156, %159 : vector<16x256xf32>
    %c0_147 = arith.constant 0 : index
    %c0_148 = arith.constant 0 : index
    %161 = vector.load %arg6[%c0_147, %c0_148] : memref<16x1xf32, #tpu.memory_space<vmem>>, vector<16x1xf32>
    %162 = vector.broadcast %161 : vector<16x1xf32> to vector<16x256xf32>
    %163 = arith.addf %160, %162 : vector<16x256xf32>
    %cst_149 = arith.constant 0.000000e+00 : f32
    %164 = vector.broadcast %cst_149 : f32 to vector<16x256xf32>
    %165 = arith.maximumf %163, %164 : vector<16x256xf32>
    %166 = tpu.iota {dimensions = array<i32: 1>} : vector<1x256xi32>
    %c16_i32 = arith.constant 16 : i32
    %c0_i32 = arith.constant 0 : i32
    %167 = arith.cmpi eq, %c16_i32, %c0_i32 : i32
    %c1_i32 = arith.constant 1 : i32
    %168 = arith.select %167, %c1_i32, %c16_i32 : i32
    %169 = vector.broadcast %168 : i32 to vector<1x256xi32>
    %170 = arith.remsi %166, %169 : vector<1x256xi32>
    %c0_i32_150 = arith.constant 0 : i32
    %171 = vector.broadcast %c0_i32_150 : i32 to vector<1x256xi32>
    %172 = arith.cmpi ne, %170, %171 : vector<1x256xi32>
    %c0_i32_151 = arith.constant 0 : i32
    %173 = vector.broadcast %c0_i32_151 : i32 to vector<1x256xi32>
    %174 = arith.cmpi slt, %170, %173 : vector<1x256xi32>
    %c0_i32_152 = arith.constant 0 : i32
    %175 = arith.cmpi slt, %168, %c0_i32_152 : i32
    %176 = vector.broadcast %175 : i1 to vector<1x256xi1>
    %177 = vector.broadcast %176 : vector<1x256xi1> to vector<1x256xi1>
    %178 = arith.xori %174, %177 : vector<1x256xi1>
    %179 = arith.andi %178, %172 : vector<1x256xi1>
    %180 = vector.broadcast %168 : i32 to vector<1x256xi32>
    %181 = arith.addi %170, %180 : vector<1x256xi32>
    %182 = arith.select %179, %181, %170 : vector<1x256xi1>, vector<1x256xi32>
    %c0_153 = arith.constant 0 : index
    %c0_154 = arith.constant 0 : index
    %183 = vector.load %arg7[%c0_153, %c0_154] : memref<16x5xf32, #tpu.memory_space<vmem>>, vector<16x5xf32>
    %c0_155 = arith.constant 0 : index
    %c0_156 = arith.constant 0 : index
    %184 = vector.load %arg9[%c0_155, %c0_156] : memref<16x5xf32, #tpu.memory_space<vmem>>, vector<16x5xf32>
    %185 = vector.extract_strided_slice %183 {offsets = [0, 2], sizes = [16, 1], strides = [1, 1]} : vector<16x5xf32> to vector<16x1xf32>
    %186 = vector.extract_strided_slice %184 {offsets = [0, 2], sizes = [16, 1], strides = [1, 1]} : vector<16x5xf32> to vector<16x1xf32>
    %187 = arith.addf %185, %186 : vector<16x1xf32>
    %cst_157 = arith.constant 1.000000e+00 : f32
    %188 = vector.broadcast %cst_157 : f32 to vector<16x1xf32>
    %189 = arith.addf %187, %188 : vector<16x1xf32>
    %190 = vector.broadcast %189 : vector<16x1xf32> to vector<16x256xf32>
    %191 = arith.mulf %165, %190 : vector<16x256xf32>
    %c0_158 = arith.constant 0 : index
    %c0_159 = arith.constant 0 : index
    %192 = vector.load %arg8[%c0_158, %c0_159] : memref<16x1xf32, #tpu.memory_space<vmem>>, vector<16x1xf32>
    %c0_160 = arith.constant 0 : index
    %c0_161 = arith.constant 0 : index
    %193 = vector.load %arg10[%c0_160, %c0_161] : memref<16x1xf32, #tpu.memory_space<vmem>>, vector<16x1xf32>
    %194 = arith.addf %192, %193 : vector<16x1xf32>
    %195 = vector.broadcast %194 : vector<16x1xf32> to vector<16x256xf32>
    %196 = arith.addf %191, %195 : vector<16x256xf32>
    %c2_i32 = arith.constant 2 : i32
    %197 = tpu.dynamic_rotate %165 by %c2_i32 dim 1 : vector<16x256xf32>, i32 -> vector<16x256xf32>
    %c2_i32_162 = arith.constant 2 : i32
    %198 = vector.broadcast %c2_i32_162 : i32 to vector<1x256xi32>
    %199 = arith.cmpi sge, %182, %198 : vector<1x256xi32>
    %cst_163 = arith.constant 0.000000e+00 : f32
    %200 = vector.shape_cast %199 : vector<1x256xi1> to vector<1x256xi1>
    %201 = vector.broadcast %200 : vector<1x256xi1> to vector<16x256xi1>
    %202 = vector.broadcast %cst_163 : f32 to vector<16x256xf32>
    %203 = arith.select %201, %197, %202 : vector<16x256xi1>, vector<16x256xf32>
    %204 = vector.extract_strided_slice %183 {offsets = [0, 0], sizes = [16, 1], strides = [1, 1]} : vector<16x5xf32> to vector<16x1xf32>
    %205 = vector.broadcast %204 : vector<16x1xf32> to vector<16x256xf32>
    %206 = arith.mulf %203, %205 : vector<16x256xf32>
    %207 = arith.addf %196, %206 : vector<16x256xf32>
    %c32_i32 = arith.constant 32 : i32
    %208 = tpu.dynamic_rotate %165 by %c32_i32 dim 1 : vector<16x256xf32>, i32 -> vector<16x256xf32>
    %c32_i32_164 = arith.constant 32 : i32
    %209 = vector.broadcast %c32_i32_164 : i32 to vector<1x256xi32>
    %210 = arith.cmpi sge, %166, %209 : vector<1x256xi32>
    %cst_165 = arith.constant 0.000000e+00 : f32
    %211 = vector.shape_cast %210 : vector<1x256xi1> to vector<1x256xi1>
    %212 = vector.broadcast %211 : vector<1x256xi1> to vector<16x256xi1>
    %213 = vector.broadcast %cst_165 : f32 to vector<16x256xf32>
    %214 = arith.select %212, %208, %213 : vector<16x256xi1>, vector<16x256xf32>
    %215 = vector.extract_strided_slice %184 {offsets = [0, 0], sizes = [16, 1], strides = [1, 1]} : vector<16x5xf32> to vector<16x1xf32>
    %216 = vector.broadcast %215 : vector<16x1xf32> to vector<16x256xf32>
    %217 = arith.mulf %214, %216 : vector<16x256xf32>
    %218 = arith.addf %207, %217 : vector<16x256xf32>
    %c1_i32_166 = arith.constant 1 : i32
    %219 = tpu.dynamic_rotate %165 by %c1_i32_166 dim 1 : vector<16x256xf32>, i32 -> vector<16x256xf32>
    %c1_i32_167 = arith.constant 1 : i32
    %220 = vector.broadcast %c1_i32_167 : i32 to vector<1x256xi32>
    %221 = arith.cmpi sge, %182, %220 : vector<1x256xi32>
    %cst_168 = arith.constant 0.000000e+00 : f32
    %222 = vector.shape_cast %221 : vector<1x256xi1> to vector<1x256xi1>
    %223 = vector.broadcast %222 : vector<1x256xi1> to vector<16x256xi1>
    %224 = vector.broadcast %cst_168 : f32 to vector<16x256xf32>
    %225 = arith.select %223, %219, %224 : vector<16x256xi1>, vector<16x256xf32>
    %226 = vector.extract_strided_slice %183 {offsets = [0, 1], sizes = [16, 1], strides = [1, 1]} : vector<16x5xf32> to vector<16x1xf32>
    %227 = vector.broadcast %226 : vector<16x1xf32> to vector<16x256xf32>
    %228 = arith.mulf %225, %227 : vector<16x256xf32>
    %229 = arith.addf %218, %228 : vector<16x256xf32>
    %c16_i32_169 = arith.constant 16 : i32
    %230 = tpu.dynamic_rotate %165 by %c16_i32_169 dim 1 : vector<16x256xf32>, i32 -> vector<16x256xf32>
    %c16_i32_170 = arith.constant 16 : i32
    %231 = vector.broadcast %c16_i32_170 : i32 to vector<1x256xi32>
    %232 = arith.cmpi sge, %166, %231 : vector<1x256xi32>
    %cst_171 = arith.constant 0.000000e+00 : f32
    %233 = vector.shape_cast %232 : vector<1x256xi1> to vector<1x256xi1>
    %234 = vector.broadcast %233 : vector<1x256xi1> to vector<16x256xi1>
    %235 = vector.broadcast %cst_171 : f32 to vector<16x256xf32>
    %236 = arith.select %234, %230, %235 : vector<16x256xi1>, vector<16x256xf32>
    %237 = vector.extract_strided_slice %184 {offsets = [0, 1], sizes = [16, 1], strides = [1, 1]} : vector<16x5xf32> to vector<16x1xf32>
    %238 = vector.broadcast %237 : vector<16x1xf32> to vector<16x256xf32>
    %239 = arith.mulf %236, %238 : vector<16x256xf32>
    %240 = arith.addf %229, %239 : vector<16x256xf32>
    %c255_i32 = arith.constant 255 : i32
    %241 = tpu.dynamic_rotate %165 by %c255_i32 dim 1 : vector<16x256xf32>, i32 -> vector<16x256xf32>
    %c15_i32 = arith.constant 15 : i32
    %242 = vector.broadcast %c15_i32 : i32 to vector<1x256xi32>
    %243 = arith.cmpi slt, %182, %242 : vector<1x256xi32>
    %cst_172 = arith.constant 0.000000e+00 : f32
    %244 = vector.shape_cast %243 : vector<1x256xi1> to vector<1x256xi1>
    %245 = vector.broadcast %244 : vector<1x256xi1> to vector<16x256xi1>
    %246 = vector.broadcast %cst_172 : f32 to vector<16x256xf32>
    %247 = arith.select %245, %241, %246 : vector<16x256xi1>, vector<16x256xf32>
    %248 = vector.extract_strided_slice %183 {offsets = [0, 3], sizes = [16, 1], strides = [1, 1]} : vector<16x5xf32> to vector<16x1xf32>
    %249 = vector.broadcast %248 : vector<16x1xf32> to vector<16x256xf32>
    %250 = arith.mulf %247, %249 : vector<16x256xf32>
    %251 = arith.addf %240, %250 : vector<16x256xf32>
    %c240_i32 = arith.constant 240 : i32
    %252 = tpu.dynamic_rotate %165 by %c240_i32 dim 1 : vector<16x256xf32>, i32 -> vector<16x256xf32>
    %c240_i32_173 = arith.constant 240 : i32
    %253 = vector.broadcast %c240_i32_173 : i32 to vector<1x256xi32>
    %254 = arith.cmpi slt, %166, %253 : vector<1x256xi32>
    %cst_174 = arith.constant 0.000000e+00 : f32
    %255 = vector.shape_cast %254 : vector<1x256xi1> to vector<1x256xi1>
    %256 = vector.broadcast %255 : vector<1x256xi1> to vector<16x256xi1>
    %257 = vector.broadcast %cst_174 : f32 to vector<16x256xf32>
    %258 = arith.select %256, %252, %257 : vector<16x256xi1>, vector<16x256xf32>
    %259 = vector.extract_strided_slice %184 {offsets = [0, 3], sizes = [16, 1], strides = [1, 1]} : vector<16x5xf32> to vector<16x1xf32>
    %260 = vector.broadcast %259 : vector<16x1xf32> to vector<16x256xf32>
    %261 = arith.mulf %258, %260 : vector<16x256xf32>
    %262 = arith.addf %251, %261 : vector<16x256xf32>
    %c254_i32 = arith.constant 254 : i32
    %263 = tpu.dynamic_rotate %165 by %c254_i32 dim 1 : vector<16x256xf32>, i32 -> vector<16x256xf32>
    %c14_i32 = arith.constant 14 : i32
    %264 = vector.broadcast %c14_i32 : i32 to vector<1x256xi32>
    %265 = arith.cmpi slt, %182, %264 : vector<1x256xi32>
    %cst_175 = arith.constant 0.000000e+00 : f32
    %266 = vector.shape_cast %265 : vector<1x256xi1> to vector<1x256xi1>
    %267 = vector.broadcast %266 : vector<1x256xi1> to vector<16x256xi1>
    %268 = vector.broadcast %cst_175 : f32 to vector<16x256xf32>
    %269 = arith.select %267, %263, %268 : vector<16x256xi1>, vector<16x256xf32>
    %270 = vector.extract_strided_slice %183 {offsets = [0, 4], sizes = [16, 1], strides = [1, 1]} : vector<16x5xf32> to vector<16x1xf32>
    %271 = vector.broadcast %270 : vector<16x1xf32> to vector<16x256xf32>
    %272 = arith.mulf %269, %271 : vector<16x256xf32>
    %273 = arith.addf %262, %272 : vector<16x256xf32>
    %c224_i32 = arith.constant 224 : i32
    %274 = tpu.dynamic_rotate %165 by %c224_i32 dim 1 : vector<16x256xf32>, i32 -> vector<16x256xf32>
    %c224_i32_176 = arith.constant 224 : i32
    %275 = vector.broadcast %c224_i32_176 : i32 to vector<1x256xi32>
    %276 = arith.cmpi slt, %166, %275 : vector<1x256xi32>
    %cst_177 = arith.constant 0.000000e+00 : f32
    %277 = vector.shape_cast %276 : vector<1x256xi1> to vector<1x256xi1>
    %278 = vector.broadcast %277 : vector<1x256xi1> to vector<16x256xi1>
    %279 = vector.broadcast %cst_177 : f32 to vector<16x256xf32>
    %280 = arith.select %278, %274, %279 : vector<16x256xi1>, vector<16x256xf32>
    %281 = vector.extract_strided_slice %184 {offsets = [0, 4], sizes = [16, 1], strides = [1, 1]} : vector<16x5xf32> to vector<16x1xf32>
    %282 = vector.broadcast %281 : vector<16x1xf32> to vector<16x256xf32>
    %283 = arith.mulf %280, %282 : vector<16x256xf32>
    %284 = arith.addf %273, %283 : vector<16x256xf32>
    %cst_178 = arith.constant 0.000000e+00 : f32
    %285 = vector.broadcast %cst_178 : f32 to vector<16x256xf32>
    %286 = arith.maximumf %284, %285 : vector<16x256xf32>
    %c0_179 = arith.constant 0 : index
    %c0_180 = arith.constant 0 : index
    %287 = vector.load %arg11[%c0_179, %c0_180] : memref<32x16xf32, #tpu.memory_space<vmem>>, vector<32x16xf32>
    %cst_181 = arith.constant dense<0.000000e+00> : vector<32x256xf32>
    %288 = tpu.matmul %287, %286, %cst_181 {dimension_numbers = #tpu.dot_dimension_numbers<[1], [0], [0], [1], [0, 0, 1, 1], [], []>} : vector<32x16xf32>, vector<16x256xf32>, vector<32x256xf32> -> vector<32x256xf32>
    %c0_182 = arith.constant 0 : index
    %c0_183 = arith.constant 0 : index
    %289 = vector.load %arg12[%c0_182, %c0_183] : memref<32x1xf32, #tpu.memory_space<vmem>>, vector<32x1xf32>
    %290 = vector.broadcast %289 : vector<32x1xf32> to vector<32x256xf32>
    %291 = arith.addf %288, %290 : vector<32x256xf32>
    %cst_184 = arith.constant dense<0.000000e+00> : vector<32xf32>
    %292 = vector.multi_reduction <add>, %291, %cst_184 [1] : vector<32x256xf32> to vector<32xf32>
    %293 = vector.shape_cast %292 : vector<32xf32> to vector<32x1xf32>
    %cst_185 = arith.constant 2.560000e+02 : f32
    %294 = vector.broadcast %cst_185 : f32 to vector<32x1xf32>
    %295 = arith.divf %293, %294 : vector<32x1xf32>
    %c0_186 = arith.constant 0 : index
    %c0_187 = arith.constant 0 : index
    %296 = vector.load %arg13[%c0_186, %c0_187] : memref<32x2xf32, #tpu.memory_space<vmem>>, vector<32x2xf32>
    %297 = vector.broadcast %295 : vector<32x1xf32> to vector<32x2xf32>
    %298 = arith.mulf %296, %297 : vector<32x2xf32>
    %cst_188 = arith.constant dense<0.000000e+00> : vector<2xf32>
    %299 = vector.multi_reduction <add>, %298, %cst_188 [0] : vector<32x2xf32> to vector<2xf32>
    %300 = vector.shape_cast %299 : vector<2xf32> to vector<1x2xf32>
    %cst_189 = arith.constant 0.000000e+00 : f32
    %301 = vector.broadcast %cst_189 : f32 to vector<1x2xf32>
    %302 = arith.maximumf %300, %301 : vector<1x2xf32>
    %c0_190 = arith.constant 0 : index
    %c0_191 = arith.constant 0 : index
    %303 = vector.load %arg14[%c0_190, %c0_191] : memref<32x2xf32, #tpu.memory_space<vmem>>, vector<32x2xf32>
    %304 = vector.broadcast %302 : vector<1x2xf32> to vector<32x2xf32>
    %305 = arith.mulf %303, %304 : vector<32x2xf32>
    %cst_192 = arith.constant dense<0.000000e+00> : vector<32xf32>
    %306 = vector.multi_reduction <add>, %305, %cst_192 [1] : vector<32x2xf32> to vector<32xf32>
    %307 = vector.shape_cast %306 : vector<32xf32> to vector<32x1xf32>
    %308 = arith.negf %307 : vector<32x1xf32>
    %309 = math.exp %308 : vector<32x1xf32>
    %cst_193 = arith.constant 1.000000e+00 : f32
    %310 = vector.broadcast %cst_193 : f32 to vector<32x1xf32>
    %311 = arith.addf %310, %309 : vector<32x1xf32>
    %312 = arith.divf %310, %311 : vector<32x1xf32>
    %313 = vector.broadcast %312 : vector<32x1xf32> to vector<32x256xf32>
    %314 = arith.mulf %291, %313 : vector<32x256xf32>
    %cst_194 = arith.constant 0.000000e+00 : f32
    %315 = vector.broadcast %cst_194 : f32 to vector<32x256xf32>
    %316 = arith.maximumf %314, %315 : vector<32x256xf32>
    %c0_195 = arith.constant 0 : index
    %c0_196 = arith.constant 0 : index
    %317 = vector.load %arg15[%c0_195, %c0_196] : memref<32x32xf32, #tpu.memory_space<vmem>>, vector<32x32xf32>
    %cst_197 = arith.constant dense<0.000000e+00> : vector<32x256xf32>
    %318 = tpu.matmul %317, %316, %cst_197 {dimension_numbers = #tpu.dot_dimension_numbers<[1], [0], [0], [1], [0, 0, 1, 1], [], []>} : vector<32x32xf32>, vector<32x256xf32>, vector<32x256xf32> -> vector<32x256xf32>
    %c0_198 = arith.constant 0 : index
    %c0_199 = arith.constant 0 : index
    %319 = vector.load %arg16[%c0_198, %c0_199] : memref<32x1xf32, #tpu.memory_space<vmem>>, vector<32x1xf32>
    %320 = vector.broadcast %319 : vector<32x1xf32> to vector<32x256xf32>
    %321 = arith.addf %318, %320 : vector<32x256xf32>
    %cst_200 = arith.constant 0.000000e+00 : f32
    %322 = vector.broadcast %cst_200 : f32 to vector<32x256xf32>
    %323 = arith.maximumf %321, %322 : vector<32x256xf32>
    %c0_201 = arith.constant 0 : index
    %c0_202 = arith.constant 0 : index
    %c0_203 = arith.constant 0 : index
    %324 = vector.load %arg17[%c0_201, %c0_202, %c0_203] : memref<1x32x256xf32, #tpu.memory_space<vmem>>, vector<1x32x256xf32>
    %325 = vector.shape_cast %324 : vector<1x32x256xf32> to vector<32x256xf32>
    %326 = vector.shape_cast %323 : vector<32x256xf32> to vector<1x32x256xf32>
    tpu.vector_store %arg17[%c0_201, %c0_202, %c0_203], %326 {strides = array<i32>} : memref<1x32x256xf32, #tpu.memory_space<vmem>>, vector<1x32x256xf32>,
    return
  }
  func.func @transform_0(%arg0: i32) -> (i32, i32, i32) {
    %c0_i32 = arith.constant 0 : i32
    %c0_i32_0 = arith.constant 0 : i32
    %c0_i32_1 = arith.constant 0 : i32
    return %arg0, %c0_i32, %c0_i32_0 : i32, i32, i32
  }
  func.func @transform_1(%arg0: i32) -> (i32, i32, i32, i32) {
    %c0_i32 = arith.constant 0 : i32
    %c0_i32_0 = arith.constant 0 : i32
    %c0_i32_1 = arith.constant 0 : i32
    %c0_i32_2 = arith.constant 0 : i32
    return %arg0, %c0_i32, %c0_i32_0, %c0_i32_1 : i32, i32, i32, i32
  }
  func.func @transform_2(%arg0: i32) -> (i32, i32) {
    %c0_i32 = arith.constant 0 : i32
    %c0_i32_0 = arith.constant 0 : i32
    %c0_i32_1 = arith.constant 0 : i32
    return %c0_i32, %c0_i32_0 : i32, i32
  }
  func.func @transform_3(%arg0: i32) -> (i32, i32) {
    %c0_i32 = arith.constant 0 : i32
    %c0_i32_0 = arith.constant 0 : i32
    %c0_i32_1 = arith.constant 0 : i32
    return %c0_i32, %c0_i32_0 : i32, i32
  }
  func.func @transform_4(%arg0: i32) -> (i32, i32) {
    %c0_i32 = arith.constant 0 : i32
    %c0_i32_0 = arith.constant 0 : i32
    %c0_i32_1 = arith.constant 0 : i32
    return %c0_i32, %c0_i32_0 : i32, i32
  }
  func.func @transform_5(%arg0: i32) -> (i32, i32) {
    %c0_i32 = arith.constant 0 : i32
    %c0_i32_0 = arith.constant 0 : i32
    %c0_i32_1 = arith.constant 0 : i32
    return %c0_i32, %c0_i32_0 : i32, i32
  }
  func.func @transform_6(%arg0: i32) -> (i32, i32) {
    %c0_i32 = arith.constant 0 : i32
    %c0_i32_0 = arith.constant 0 : i32
    %c0_i32_1 = arith.constant 0 : i32
    return %c0_i32, %c0_i32_0 : i32, i32
  }
  func.func @transform_7(%arg0: i32) -> (i32, i32) {
    %c0_i32 = arith.constant 0 : i32
    %c0_i32_0 = arith.constant 0 : i32
    %c0_i32_1 = arith.constant 0 : i32
    return %c0_i32, %c0_i32_0 : i32, i32
  }
  func.func @transform_8(%arg0: i32) -> (i32, i32) {
    %c0_i32 = arith.constant 0 : i32
    %c0_i32_0 = arith.constant 0 : i32
    %c0_i32_1 = arith.constant 0 : i32
    return %c0_i32, %c0_i32_0 : i32, i32
  }
  func.func @transform_9(%arg0: i32) -> (i32, i32) {
    %c0_i32 = arith.constant 0 : i32
    %c0_i32_0 = arith.constant 0 : i32
    %c0_i32_1 = arith.constant 0 : i32
    return %c0_i32, %c0_i32_0 : i32, i32
  }
  func.func @transform_10(%arg0: i32) -> (i32, i32) {
    %c0_i32 = arith.constant 0 : i32
    %c0_i32_0 = arith.constant 0 : i32
    %c0_i32_1 = arith.constant 0 : i32
    return %c0_i32, %c0_i32_0 : i32, i32
  }
  func.func @transform_11(%arg0: i32) -> (i32, i32) {
    %c0_i32 = arith.constant 0 : i32
    %c0_i32_0 = arith.constant 0 : i32
    %c0_i32_1 = arith.constant 0 : i32
    return %c0_i32, %c0_i32_0 : i32, i32
  }
  func.func @transform_12(%arg0: i32) -> (i32, i32) {
    %c0_i32 = arith.constant 0 : i32
    %c0_i32_0 = arith.constant 0 : i32
    %c0_i32_1 = arith.constant 0 : i32
    return %c0_i32, %c0_i32_0 : i32, i32
  }
  func.func @transform_13(%arg0: i32) -> (i32, i32) {
    %c0_i32 = arith.constant 0 : i32
    %c0_i32_0 = arith.constant 0 : i32
    %c0_i32_1 = arith.constant 0 : i32
    return %c0_i32, %c0_i32_0 : i32, i32
  }
  func.func @transform_14(%arg0: i32) -> (i32, i32) {
    %c0_i32 = arith.constant 0 : i32
    %c0_i32_0 = arith.constant 0 : i32
    %c0_i32_1 = arith.constant 0 : i32
    return %c0_i32, %c0_i32_0 : i32, i32
  }
  func.func @transform_15(%arg0: i32) -> (i32, i32) {
    %c0_i32 = arith.constant 0 : i32
    %c0_i32_0 = arith.constant 0 : i32
    %c0_i32_1 = arith.constant 0 : i32
    return %c0_i32, %c0_i32_0 : i32, i32
  }
  func.func @transform_16(%arg0: i32) -> (i32, i32, i32) {
    %c0_i32 = arith.constant 0 : i32
    %c0_i32_0 = arith.constant 0 : i32
    %c0_i32_1 = arith.constant 0 : i32
    return %arg0, %c0_i32, %c0_i32_0 : i32, i32, i32
  }
}

</mosaic_0001>

<llo_original>
// kernel: tpu_custom_call.1
$region0: #{tpu_custom_call.1}
  #allocation0 [shape = 'u32[]', space=smem, size = 0x4, offset = 0x4, fixed_abs, tag = 'smem constant byte address 0x4 - core index']
  #allocation1 [shape = 'u32[72,128]{1,0:T(1,128)}', space=vmem, size = 0x9000, scoped, tag = 'internal scratch']
  #allocation2 [shape = 'f32[8,8,16]{2,1,0:T(8,128)}', space=vmem, size = 0x8000, scoped, tag = 'scratch operand']
  #allocation3 [shape = 'f32[8,256]{1,0:T(8,128)}', space=vmem, size = 0x2000, scoped, tag = 'scratch operand']
  %s0 = inlined_call_operand.vmem [shape: f32[2,8,256], index: 0, kind: input, shape index: {}]
  %s1 = inlined_call_operand.hbm [shape: f32[2,8,8,8], index: 1, kind: input, shape index: {}]
  %s2 = inlined_call_operand.vmem [shape: f32[8,16], index: 2, kind: input, shape index: {}]
  %s3 = inlined_call_operand.vmem [shape: f32[16,8], index: 3, kind: input, shape index: {}]
  %s4 = inlined_call_operand.vmem [shape: f32[16,8], index: 4, kind: input, shape index: {}]
  %s5 = inlined_call_operand.vmem [shape: f32[16,1], index: 5, kind: input, shape index: {}]
  %s6 = inlined_call_operand.vmem [shape: f32[16,5], index: 6, kind: input, shape index: {}]
  %s7 = inlined_call_operand.vmem [shape: f32[16,1], index: 7, kind: input, shape index: {}]
  %s8 = inlined_call_operand.vmem [shape: f32[16,5], index: 8, kind: input, shape index: {}]
  %s9 = inlined_call_operand.vmem [shape: f32[16,1], index: 9, kind: input, shape index: {}]
  %s10 = inlined_call_operand.vmem [shape: f32[32,16], index: 10, kind: input, shape index: {}]
  %s11 = inlined_call_operand.vmem [shape: f32[32,1], index: 11, kind: input, shape index: {}]
  %s12 = inlined_call_operand.vmem [shape: f32[32,2], index: 12, kind: input, shape index: {}]
  %s13 = inlined_call_operand.vmem [shape: f32[32,2], index: 13, kind: input, shape index: {}]
  %s14 = inlined_call_operand.vmem [shape: f32[32,32], index: 14, kind: input, shape index: {}]
  %s15 = inlined_call_operand.vmem [shape: f32[32,1], index: 15, kind: input, shape index: {}]
  %s16 = inlined_call_operand.hbm [shape: f32[2,32,256], index: 16, kind: output, shape index: {}]
  %s17 = sld [smem:[#allocation0]]
  $region101: #{tpu_custom_call.1} parent=0
    _
  %s19 = ssub.s32 1, %s17
  %s20 = scalar_select 0, %s19, %s17
  $region1: #{tpu_custom_call.1} parent=0
    #allocation4 [shape = 'u8[65536]{0}', space=vmem, size = 0x10000, scoped, tag = 'input window, operand 1']
    #allocation5 [shape = 's32[2]{0}', space=sflag, size = 0x8, scoped, tag = 'scoped memory for tpu_custom_call.1']
    #allocation6 [shape = 's32[2]{0}', space=sflag, size = 0x8, scoped, tag = 'scoped memory for tpu_custom_call.1']
    #allocation7 [shape = 'u8[65536]{0}', space=vmem, size = 0x10000, scoped, tag = 'output window, operand 0']
    %21 = vsyncpa [#allocation5], 0
    %s22 = scalar_lea.sflag [#allocation5], 1
    %23 = vsyncpa %s22, 0
    %24 = vsyncpa [#allocation6], 0
    %s25 = scalar_lea.sflag [#allocation6], 1
    %26 = vsyncpa %s25, 0
    loop: start=0, step=1, limit=4
    $region2: #{tpu_custom_call.1} parent=1 // loop_pre_header
      _
    $region3: #{tpu_custom_call.1} parent=1 // loop_header
      %s28 = sphi 0, %s32
      %p29 = scmp.ge.s32.totalorder %s28, 4
      %s38 = sphi 0, %s40
      %s41 = sphi 0, %s38
      %s42 = sphi 0, %s41
      %s58 = sphi 0, %s42
      %s64 = sphi 0, %s66
      %s67 = sphi 0, %s64
      %s68 = sphi 0, %s67
      %s84 = sphi 0, %s68
      %s88 = sphi 0, %s88
      %s90 = sphi 0, %s88
      %s91 = sphi 0, %s90
      %s105 = sphi 0, %s91
      %s109 = sphi 0, %s109
      %s111 = sphi 0, %s109
      %s112 = sphi 0, %s111
      %s126 = sphi 0, %s112
      %s130 = sphi 0, %s130
      %s132 = sphi 0, %s130
      %s133 = sphi 0, %s132
      %s147 = sphi 0, %s133
      %s151 = sphi 0, %s151
      %s153 = sphi 0, %s151
      %s154 = sphi 0, %s153
      %s168 = sphi 0, %s154
      %s172 = sphi 0, %s172
      %s174 = sphi 0, %s172
      %s175 = sphi 0, %s174
      %s189 = sphi 0, %s175
      %s193 = sphi 0, %s193
      %s195 = sphi 0, %s193
      %s196 = sphi 0, %s195
      %s210 = sphi 0, %s196
      %s214 = sphi 0, %s214
      %s216 = sphi 0, %s214
      %s217 = sphi 0, %s216
      %s231 = sphi 0, %s217
      %s235 = sphi 0, %s235
      %s237 = sphi 0, %s235
      %s238 = sphi 0, %s237
      %s252 = sphi 0, %s238
      %s256 = sphi 0, %s256
      %s258 = sphi 0, %s256
      %s259 = sphi 0, %s258
      %s273 = sphi 0, %s259
      %s277 = sphi 0, %s277
      %s279 = sphi 0, %s277
      %s280 = sphi 0, %s279
      %s294 = sphi 0, %s280
      %s298 = sphi 0, %s298
      %s300 = sphi 0, %s298
      %s301 = sphi 0, %s300
      %s315 = sphi 0, %s301
      %s319 = sphi 0, %s319
      %s321 = sphi 0, %s319
      %s322 = sphi 0, %s321
      %s336 = sphi 0, %s322
      %s340 = sphi 0, %s340
      %s342 = sphi 0, %s340
      %s343 = sphi 0, %s342
      %s357 = sphi 0, %s343
      %s361 = sphi 0, %s361
      %s363 = sphi 0, %s361
      %s364 = sphi 0, %s363
      %s378 = sphi 0, %s364
      %s384 = sphi 0, %s386
      %s387 = sphi 0, %s384
      %s388 = sphi 0, %s387
      %s404 = sphi 0, %s388
    $region4: #{tpu_custom_call.1} parent=1 // loop_header_branch
      %31 = sbr.rel (%p29) target = $region8
    $region5: #{tpu_custom_call.1} parent=1 // loop_body
      %s33 = ssub.s32 %s28, 1
      %s34 = ssub.s32 %s28, 2
      %s35 = sadd.s32 %s28, 1
      %s36 = ssub.s32 %s28, %s35
      %p37 = scmp.eq.s32.totalorder %s36, 0
      %s39 = sadd.s32 %s38, 1
      %s40 = scalar_select %p37, %s38, %s39
      %p43 = pneg %p37
      %p44 = scmp.eq.s32.totalorder %s28, 1
      %p45 = por %p43, %p44
      %p46 = scmp.ne.s32.totalorder %s38, %s41
      %p47 = scmp.eq.s32.totalorder %s28, 0
      %p48 = por %p46, %p47
      %p49 = scmp.ne.s32.totalorder %s38, %s41
      %p50 = scmp.eq.s32.totalorder %s33, 1
      %p51 = por %p49, %p50
      %p52 = scmp.ne.s32.totalorder %s41, %s42
      %p53 = scmp.eq.s32.totalorder %s33, 0
      %p54 = por %p52, %p53
      %p55 = scmp.ne.s32.totalorder %s41, %s42
      %p56 = scmp.eq.s32.totalorder %s34, 1
      %p57 = por %p55, %p56
      %p59 = scmp.ne.s32.totalorder %s42, %s58
      %p60 = scmp.eq.s32.totalorder %s34, 0
      %p61 = por %p59, %p60
      %s62 = ssub.s32 %s28, %s35
      %p63 = scmp.eq.s32.totalorder %s62, 0
      %s65 = sadd.s32 %s64, 1
      %s66 = scalar_select %p63, %s64, %s65
      %p69 = pneg %p63
      %p70 = scmp.eq.s32.totalorder %s28, 1
      %p71 = por %p69, %p70
      %p72 = scmp.ne.s32.totalorder %s64, %s67
      %p73 = scmp.eq.s32.totalorder %s28, 0
      %p74 = por %p72, %p73
      %p75 = scmp.ne.s32.totalorder %s64, %s67
      %p76 = scmp.eq.s32.totalorder %s33, 1
      %p77 = por %p75, %p76
      %p78 = scmp.ne.s32.totalorder %s67, %s68
      %p79 = scmp.eq.s32.totalorder %s33, 0
      %p80 = por %p78, %p79
      %p81 = scmp.ne.s32.totalorder %s67, %s68
      %p82 = scmp.eq.s32.totalorder %s34, 1
      %p83 = por %p81, %p82
      %p85 = scmp.ne.s32.totalorder %s68, %s84
      %p86 = scmp.eq.s32.totalorder %s34, 0
      %p87 = por %p85, %p86
      %s89 = sadd.s32 %s88, 1
      %p92 = scmp.eq.s32.totalorder %s28, 1
      %p93 = scmp.ne.s32.totalorder %s88, %s90
      %p94 = scmp.eq.s32.totalorder %s28, 0
      %p95 = por %p93, %p94
      %p96 = scmp.ne.s32.totalorder %s88, %s90
      %p97 = scmp.eq.s32.totalorder %s33, 1
      %p98 = por %p96, %p97
      %p99 = scmp.ne.s32.totalorder %s90, %s91
      %p100 = scmp.eq.s32.totalorder %s33, 0
      %p101 = por %p99, %p100
      %p102 = scmp.ne.s32.totalorder %s90, %s91
      %p103 = scmp.eq.s32.totalorder %s34, 1
      %p104 = por %p102, %p103
      %p106 = scmp.ne.s32.totalorder %s91, %s105
      %p107 = scmp.eq.s32.totalorder %s34, 0
      %p108 = por %p106, %p107
      %s110 = sadd.s32 %s109, 1
      %p113 = scmp.eq.s32.totalorder %s28, 1
      %p114 = scmp.ne.s32.totalorder %s109, %s111
      %p115 = scmp.eq.s32.totalorder %s28, 0
      %p116 = por %p114, %p115
      %p117 = scmp.ne.s32.totalorder %s109, %s111
      %p118 = scmp.eq.s32.totalorder %s33, 1
      %p119 = por %p117, %p118
      %p120 = scmp.ne.s32.totalorder %s111, %s112
      %p121 = scmp.eq.s32.totalorder %s33, 0
      %p122 = por %p120, %p121
      %p123 = scmp.ne.s32.totalorder %s111, %s112
      %p124 = scmp.eq.s32.totalorder %s34, 1
      %p125 = por %p123, %p124
      %p127 = scmp.ne.s32.totalorder %s112, %s126
      %p128 = scmp.eq.s32.totalorder %s34, 0
      %p129 = por %p127, %p128
      %s131 = sadd.s32 %s130, 1
      %p134 = scmp.eq.s32.totalorder %s28, 1
      %p135 = scmp.ne.s32.totalorder %s130, %s132
      %p136 = scmp.eq.s32.totalorder %s28, 0
      %p137 = por %p135, %p136
      %p138 = scmp.ne.s32.totalorder %s130, %s132
      %p139 = scmp.eq.s32.totalorder %s33, 1
      %p140 = por %p138, %p139
      %p141 = scmp.ne.s32.totalorder %s132, %s133
      %p142 = scmp.eq.s32.totalorder %s33, 0
      %p143 = por %p141, %p142
      %p144 = scmp.ne.s32.totalorder %s132, %s133
      %p145 = scmp.eq.s32.totalorder %s34, 1
      %p146 = por %p144, %p145
      %p148 = scmp.ne.s32.totalorder %s133, %s147
      %p149 = scmp.eq.s32.totalorder %s34, 0
      %p150 = por %p148, %p149
      %s152 = sadd.s32 %s151, 1
      %p155 = scmp.eq.s32.totalorder %s28, 1
      %p156 = scmp.ne.s32.totalorder %s151, %s153
      %p157 = scmp.eq.s32.totalorder %s28, 0
      %p158 = por %p156, %p157
      %p159 = scmp.ne.s32.totalorder %s151, %s153
      %p160 = scmp.eq.s32.totalorder %s33, 1
      %p161 = por %p159, %p160
      %p162 = scmp.ne.s32.totalorder %s153, %s154
      %p163 = scmp.eq.s32.totalorder %s33, 0
      %p164 = por %p162, %p163
      %p165 = scmp.ne.s32.totalorder %s153, %s154
      %p166 = scmp.eq.s32.totalorder %s34, 1
      %p167 = por %p165, %p166
      %p169 = scmp.ne.s32.totalorder %s154, %s168
      %p170 = scmp.eq.s32.totalorder %s34, 0
      %p171 = por %p169, %p170
      %s173 = sadd.s32 %s172, 1
      %p176 = scmp.eq.s32.totalorder %s28, 1
      %p177 = scmp.ne.s32.totalorder %s172, %s174
      %p178 = scmp.eq.s32.totalorder %s28, 0
      %p179 = por %p177, %p178
      %p180 = scmp.ne.s32.totalorder %s172, %s174
      %p181 = scmp.eq.s32.totalorder %s33, 1
      %p182 = por %p180, %p181
      %p183 = scmp.ne.s32.totalorder %s174, %s175
      %p184 = scmp.eq.s32.totalorder %s33, 0
      %p185 = por %p183, %p184
      %p186 = scmp.ne.s32.totalorder %s174, %s175
      %p187 = scmp.eq.s32.totalorder %s34, 1
      %p188 = por %p186, %p187
      %p190 = scmp.ne.s32.totalorder %s175, %s189
      %p191 = scmp.eq.s32.totalorder %s34, 0
      %p192 = por %p190, %p191
      %s194 = sadd.s32 %s193, 1
      %p197 = scmp.eq.s32.totalorder %s28, 1
      %p198 = scmp.ne.s32.totalorder %s193, %s195
      %p199 = scmp.eq.s32.totalorder %s28, 0
      %p200 = por %p198, %p199
      %p201 = scmp.ne.s32.totalorder %s193, %s195
      %p202 = scmp.eq.s32.totalorder %s33, 1
      %p203 = por %p201, %p202
      %p204 = scmp.ne.s32.totalorder %s195, %s196
      %p205 = scmp.eq.s32.totalorder %s33, 0
      %p206 = por %p204, %p205
      %p207 = scmp.ne.s32.totalorder %s195, %s196
      %p208 = scmp.eq.s32.totalorder %s34, 1
      %p209 = por %p207, %p208
      %p211 = scmp.ne.s32.totalorder %s196, %s210
      %p212 = scmp.eq.s32.totalorder %s34, 0
      %p213 = por %p211, %p212
      %s215 = sadd.s32 %s214, 1
      %p218 = scmp.eq.s32.totalorder %s28, 1
      %p219 = scmp.ne.s32.totalorder %s214, %s216
      %p220 = scmp.eq.s32.totalorder %s28, 0
      %p221 = por %p219, %p220
      %p222 = scmp.ne.s32.totalorder %s214, %s216
      %p223 = scmp.eq.s32.totalorder %s33, 1
      %p224 = por %p222, %p223
      %p225 = scmp.ne.s32.totalorder %s216, %s217
      %p226 = scmp.eq.s32.totalorder %s33, 0
      %p227 = por %p225, %p226
      %p228 = scmp.ne.s32.totalorder %s216, %s217
      %p229 = scmp.eq.s32.totalorder %s34, 1
      %p230 = por %p228, %p229
      %p232 = scmp.ne.s32.totalorder %s217, %s231
      %p233 = scmp.eq.s32.totalorder %s34, 0
      %p234 = por %p232, %p233
      %s236 = sadd.s32 %s235, 1
      %p239 = scmp.eq.s32.totalorder %s28, 1
      %p240 = scmp.ne.s32.totalorder %s235, %s237
      %p241 = scmp.eq.s32.totalorder %s28, 0
      %p242 = por %p240, %p241
      %p243 = scmp.ne.s32.totalorder %s235, %s237
      %p244 = scmp.eq.s32.totalorder %s33, 1
      %p245 = por %p243, %p244
      %p246 = scmp.ne.s32.totalorder %s237, %s238
      %p247 = scmp.eq.s32.totalorder %s33, 0
      %p248 = por %p246, %p247
      %p249 = scmp.ne.s32.totalorder %s237, %s238
      %p250 = scmp.eq.s32.totalorder %s34, 1
      %p251 = por %p249, %p250
      %p253 = scmp.ne.s32.totalorder %s238, %s252
      %p254 = scmp.eq.s32.totalorder %s34, 0
      %p255 = por %p253, %p254
      %s257 = sadd.s32 %s256, 1
      %p260 = scmp.eq.s32.totalorder %s28, 1
      %p261 = scmp.ne.s32.totalorder %s256, %s258
      %p262 = scmp.eq.s32.totalorder %s28, 0
      %p263 = por %p261, %p262
      %p264 = scmp.ne.s32.totalorder %s256, %s258
      %p265 = scmp.eq.s32.totalorder %s33, 1
      %p266 = por %p264, %p265
      %p267 = scmp.ne.s32.totalorder %s258, %s259
      %p268 = scmp.eq.s32.totalorder %s33, 0
      %p269 = por %p267, %p268
      %p270 = scmp.ne.s32.totalorder %s258, %s259
      %p271 = scmp.eq.s32.totalorder %s34, 1
      %p272 = por %p270, %p271
      %p274 = scmp.ne.s32.totalorder %s259, %s273
      %p275 = scmp.eq.s32.totalorder %s34, 0
      %p276 = por %p274, %p275
      %s278 = sadd.s32 %s277, 1
      %p281 = scmp.eq.s32.totalorder %s28, 1
      %p282 = scmp.ne.s32.totalorder %s277, %s279
      %p283 = scmp.eq.s32.totalorder %s28, 0
      %p284 = por %p282, %p283
      %p285 = scmp.ne.s32.totalorder %s277, %s279
      %p286 = scmp.eq.s32.totalorder %s33, 1
      %p287 = por %p285, %p286
      %p288 = scmp.ne.s32.totalorder %s279, %s280
      %p289 = scmp.eq.s32.totalorder %s33, 0
      %p290 = por %p288, %p289
      %p291 = scmp.ne.s32.totalorder %s279, %s280
      %p292 = scmp.eq.s32.totalorder %s34, 1
      %p293 = por %p291, %p292
      %p295 = scmp.ne.s32.totalorder %s280, %s294
      %p296 = scmp.eq.s32.totalorder %s34, 0
      %p297 = por %p295, %p296
      %s299 = sadd.s32 %s298, 1
      %p302 = scmp.eq.s32.totalorder %s28, 1
      %p303 = scmp.ne.s32.totalorder %s298, %s300
      %p304 = scmp.eq.s32.totalorder %s28, 0
      %p305 = por %p303, %p304
      %p306 = scmp.ne.s32.totalorder %s298, %s300
      %p307 = scmp.eq.s32.totalorder %s33, 1
      %p308 = por %p306, %p307
      %p309 = scmp.ne.s32.totalorder %s300, %s301
      %p310 = scmp.eq.s32.totalorder %s33, 0
      %p311 = por %p309, %p310
      %p312 = scmp.ne.s32.totalorder %s300, %s301
      %p313 = scmp.eq.s32.totalorder %s34, 1
      %p314 = por %p312, %p313
      %p316 = scmp.ne.s32.totalorder %s301, %s315
      %p317 = scmp.eq.s32.totalorder %s34, 0
      %p318 = por %p316, %p317
      %s320 = sadd.s32 %s319, 1
      %p323 = scmp.eq.s32.totalorder %s28, 1
      %p324 = scmp.ne.s32.totalorder %s319, %s321
      %p325 = scmp.eq.s32.totalorder %s28, 0
      %p326 = por %p324, %p325
      %p327 = scmp.ne.s32.totalorder %s319, %s321
      %p328 = scmp.eq.s32.totalorder %s33, 1
      %p329 = por %p327, %p328
      %p330 = scmp.ne.s32.totalorder %s321, %s322
      %p331 = scmp.eq.s32.totalorder %s33, 0
      %p332 = por %p330, %p331
      %p333 = scmp.ne.s32.totalorder %s321, %s322
      %p334 = scmp.eq.s32.totalorder %s34, 1
      %p335 = por %p333, %p334
      %p337 = scmp.ne.s32.totalorder %s322, %s336
      %p338 = scmp.eq.s32.totalorder %s34, 0
      %p339 = por %p337, %p338
      %s341 = sadd.s32 %s340, 1
      %p344 = scmp.eq.s32.totalorder %s28, 1
      %p345 = scmp.ne.s32.totalorder %s340, %s342
      %p346 = scmp.eq.s32.totalorder %s28, 0
      %p347 = por %p345, %p346
      %p348 = scmp.ne.s32.totalorder %s340, %s342
      %p349 = scmp.eq.s32.totalorder %s33, 1
      %p350 = por %p348, %p349
      %p351 = scmp.ne.s32.totalorder %s342, %s343
      %p352 = scmp.eq.s32.totalorder %s33, 0
      %p353 = por %p351, %p352
      %p354 = scmp.ne.s32.totalorder %s342, %s343
      %p355 = scmp.eq.s32.totalorder %s34, 1
      %p356 = por %p354, %p355
      %p358 = scmp.ne.s32.totalorder %s343, %s357
      %p359 = scmp.eq.s32.totalorder %s34, 0
      %p360 = por %p358, %p359
      %s362 = sadd.s32 %s361, 1
      %p365 = scmp.eq.s32.totalorder %s28, 1
      %p366 = scmp.ne.s32.totalorder %s361, %s363
      %p367 = scmp.eq.s32.totalorder %s28, 0
      %p368 = por %p366, %p367
      %p369 = scmp.ne.s32.totalorder %s361, %s363
      %p370 = scmp.eq.s32.totalorder %s33, 1
      %p371 = por %p369, %p370
      %p372 = scmp.ne.s32.totalorder %s363, %s364
      %p373 = scmp.eq.s32.totalorder %s33, 0
      %p374 = por %p372, %p373
      %p375 = scmp.ne.s32.totalorder %s363, %s364
      %p376 = scmp.eq.s32.totalorder %s34, 1
      %p377 = por %p375, %p376
      %p379 = scmp.ne.s32.totalorder %s364, %s378
      %p380 = scmp.eq.s32.totalorder %s34, 0
      %p381 = por %p379, %p380
      %s382 = ssub.s32 %s28, %s35
      %p383 = scmp.eq.s32.totalorder %s382, 0
      %s385 = sadd.s32 %s384, 1
      %s386 = scalar_select %p383, %s384, %s385
      %p389 = pneg %p383
      %p390 = scmp.eq.s32.totalorder %s28, 1
      %p391 = por %p389, %p390
      %p392 = scmp.ne.s32.totalorder %s384, %s387
      %p393 = scmp.eq.s32.totalorder %s28, 0
      %p394 = por %p392, %p393
      %p395 = scmp.ne.s32.totalorder %s384, %s387
      %p396 = scmp.eq.s32.totalorder %s33, 1
      %p397 = por %p395, %p396
      %p398 = scmp.ne.s32.totalorder %s387, %s388
      %p399 = scmp.eq.s32.totalorder %s33, 0
      %p400 = por %p398, %p399
      %p401 = scmp.ne.s32.totalorder %s387, %s388
      %p402 = scmp.eq.s32.totalorder %s34, 1
      %p403 = por %p401, %p402
      %p405 = scmp.ne.s32.totalorder %s388, %s404
      %p406 = scmp.eq.s32.totalorder %s34, 0
      %p407 = por %p405, %p406
      %p408 = scmp.le.s32.totalorder 1, %s28
      %p409 = scmp.lt.s32.totalorder %s28, 3
      %p410 = pnand %p408, %p409
      %p411 = pneg %p410
      // Predicated region
      $region9: #{tpu_custom_call.1} parent=5 // pred_check
        _
      $region10: #{tpu_custom_call.1} parent=5 // pred_check_branch
        %413 = sbr.rel (%p410) target = $region12
      $region11: #{tpu_custom_call.1} parent=5 // pred_region
        %s414 = ssub.s32 %s28, 1
        // Predicated region
        $region13: #{tpu_custom_call.1} parent=11 // pred_check
          %p415 = pneg %p101
        $region14: #{tpu_custom_call.1} parent=11 // pred_check_branch
          %417 = sbr.rel (%p415) target = $region16
        $region15: #{tpu_custom_call.1} parent=11 // pred_region
          _
        $region16: #{tpu_custom_call.1} parent=11 // pred_fallthru
          _
        // Predicated region
        $region17: #{tpu_custom_call.1} parent=11 // pred_check
          %p418 = pneg %p122
        $region18: #{tpu_custom_call.1} parent=11 // pred_check_branch
          %420 = sbr.rel (%p418) target = $region20
        $region19: #{tpu_custom_call.1} parent=11 // pred_region
          _
        $region20: #{tpu_custom_call.1} parent=11 // pred_fallthru
          _
        // Predicated region
        $region21: #{tpu_custom_call.1} parent=11 // pred_check
          %p421 = pneg %p143
        $region22: #{tpu_custom_call.1} parent=11 // pred_check_branch
          %423 = sbr.rel (%p421) target = $region24
        $region23: #{tpu_custom_call.1} parent=11 // pred_region
          _
        $region24: #{tpu_custom_call.1} parent=11 // pred_fallthru
          _
        // Predicated region
        $region25: #{tpu_custom_call.1} parent=11 // pred_check
          %p424 = pneg %p164
        $region26: #{tpu_custom_call.1} parent=11 // pred_check_branch
          %426 = sbr.rel (%p424) target = $region28
        $region27: #{tpu_custom_call.1} parent=11 // pred_region
          _
        $region28: #{tpu_custom_call.1} parent=11 // pred_fallthru
          _
        // Predicated region
        $region29: #{tpu_custom_call.1} parent=11 // pred_check
          %p427 = pneg %p185
        $region30: #{tpu_custom_call.1} parent=11 // pred_check_branch
          %429 = sbr.rel (%p427) target = $region32
        $region31: #{tpu_custom_call.1} parent=11 // pred_region
          _
        $region32: #{tpu_custom_call.1} parent=11 // pred_fallthru
          _
        // Predicated region
        $region33: #{tpu_custom_call.1} parent=11 // pred_check
          %p430 = pneg %p206
        $region34: #{tpu_custom_call.1} parent=11 // pred_check_branch
          %432 = sbr.rel (%p430) target = $region36
        $region35: #{tpu_custom_call.1} parent=11 // pred_region
          _
        $region36: #{tpu_custom_call.1} parent=11 // pred_fallthru
          _
        // Predicated region
        $region37: #{tpu_custom_call.1} parent=11 // pred_check
          %p433 = pneg %p227
        $region38: #{tpu_custom_call.1} parent=11 // pred_check_branch
          %435 = sbr.rel (%p433) target = $region40
        $region39: #{tpu_custom_call.1} parent=11 // pred_region
          _
        $region40: #{tpu_custom_call.1} parent=11 // pred_fallthru
          _
        // Predicated region
        $region41: #{tpu_custom_call.1} parent=11 // pred_check
          %p436 = pneg %p248
        $region42: #{tpu_custom_call.1} parent=11 // pred_check_branch
          %438 = sbr.rel (%p436) target = $region44
        $region43: #{tpu_custom_call.1} parent=11 // pred_region
          _
        $region44: #{tpu_custom_call.1} parent=11 // pred_fallthru
          _
        // Predicated region
        $region45: #{tpu_custom_call.1} parent=11 // pred_check
          %p439 = pneg %p269
        $region46: #{tpu_custom_call.1} parent=11 // pred_check_branch
          %441 = sbr.rel (%p439) target = $region48
        $region47: #{tpu_custom_call.1} parent=11 // pred_region
          _
        $region48: #{tpu_custom_call.1} parent=11 // pred_fallthru
          _
        // Predicated region
        $region49: #{tpu_custom_call.1} parent=11 // pred_check
          %p442 = pneg %p290
        $region50: #{tpu_custom_call.1} parent=11 // pred_check_branch
          %444 = sbr.rel (%p442) target = $region52
        $region51: #{tpu_custom_call.1} parent=11 // pred_region
          _
        $region52: #{tpu_custom_call.1} parent=11 // pred_fallthru
          _
        // Predicated region
        $region53: #{tpu_custom_call.1} parent=11 // pred_check
          %p445 = pneg %p311
        $region54: #{tpu_custom_call.1} parent=11 // pred_check_branch
          %447 = sbr.rel (%p445) target = $region56
        $region55: #{tpu_custom_call.1} parent=11 // pred_region
          _
        $region56: #{tpu_custom_call.1} parent=11 // pred_fallthru
          _
        // Predicated region
        $region57: #{tpu_custom_call.1} parent=11 // pred_check
          %p448 = pneg %p332
        $region58: #{tpu_custom_call.1} parent=11 // pred_check_branch
          %450 = sbr.rel (%p448) target = $region60
        $region59: #{tpu_custom_call.1} parent=11 // pred_region
          _
        $region60: #{tpu_custom_call.1} parent=11 // pred_fallthru
          _
        // Predicated region
        $region61: #{tpu_custom_call.1} parent=11 // pred_check
          %p451 = pneg %p353
        $region62: #{tpu_custom_call.1} parent=11 // pred_check_branch
          %453 = sbr.rel (%p451) target = $region64
        $region63: #{tpu_custom_call.1} parent=11 // pred_region
          _
        $region64: #{tpu_custom_call.1} parent=11 // pred_fallthru
          _
        // Predicated region
        $region65: #{tpu_custom_call.1} parent=11 // pred_check
          %p454 = pneg %p374
        $region66: #{tpu_custom_call.1} parent=11 // pred_check_branch
          %456 = sbr.rel (%p454) target = $region68
        $region67: #{tpu_custom_call.1} parent=11 // pred_region
          _
        $region68: #{tpu_custom_call.1} parent=11 // pred_fallthru
          _
      $region12: #{tpu_custom_call.1} parent=5 // pred_fallthru
        _
      %p457 = scmp.lt.s32.totalorder %s28, 2
      // Predicated region
      $region69: #{tpu_custom_call.1} parent=5 // pred_check
        %p458 = pneg %p457
      $region70: #{tpu_custom_call.1} parent=5 // pred_check_branch
        %460 = sbr.rel (%p458) target = $region72
      $region71: #{tpu_custom_call.1} parent=5 // pred_region
        // Predicated region
        $region73: #{tpu_custom_call.1} parent=71 // pred_check
          %p461 = pneg %p48
        $region74: #{tpu_custom_call.1} parent=71 // pred_check_branch
          %463 = sbr.rel (%p461) target = $region76
        $region75: #{tpu_custom_call.1} parent=71 // pred_region
          %p464 = scmp.lt.s32.totalorder %s28, 1
          %s465 = scalar_select %p464, %s28, 1
          %s466 = smul.addr %s465, 2
          %s467 = smul.addr %s466, 8
          %s468 = scalar_lea.vmem %s0, %s467
        $region76: #{tpu_custom_call.1} parent=71 // pred_fallthru
          _
        // Predicated region
        $region77: #{tpu_custom_call.1} parent=71 // pred_check
          %p469 = pneg %p74
        $region78: #{tpu_custom_call.1} parent=71 // pred_check_branch
          %471 = sbr.rel (%p469) target = $region80
        $region79: #{tpu_custom_call.1} parent=71 // pred_region
          %s472 = sand.u32 %s64, 1
          %s473 = scalar_lea.sflag [#allocation5], %s472
          %s474 = sand.u32 %s64, 1
          %s475 = smul.addr %s474, 64
          %s476 = scalar_lea.vmem [#allocation4], %s475
          %478 = vsyncadd %s473, 0
          %s479 = smul.addr %s28, 8
          %s480 = smul.addr %s479, 8
          %s481 = scalar_lea.hbm %s1, %s480
          %s482 = sshll.u32 %s481, 4
          %s483 = int_to_ptr.hbm [resolvable:$true] %s482
          %s484 = sshll.u32 %s476, 4
          %s485 = int_to_ptr.vmem [resolvable:$true] %s484
          %490 = dma.hbm_to_vmem [thread:$0]  %s483, 1024, %s485, %s473, 128, 128, 8
        $region80: #{tpu_custom_call.1} parent=71 // pred_fallthru
          _
      $region72: #{tpu_custom_call.1} parent=5 // pred_fallthru
        _
      %p491 = scmp.le.s32.totalorder 1, %s28
      %p492 = scmp.lt.s32.totalorder %s28, 3
      %p493 = pnand %p491, %p492
      %p494 = pneg %p493
      // Predicated region
      $region81: #{tpu_custom_call.1} parent=5 // pred_check
        _
      $region82: #{tpu_custom_call.1} parent=5 // pred_check_branch
        %496 = sbr.rel (%p493) target = $region84
      $region83: #{tpu_custom_call.1} parent=5 // pred_region
        %s497 = ssub.s32 %s28, 1
        %s498 = sand.u32 %s67, 1
        %s499 = scalar_lea.sflag [#allocation5], %s498
        %s500 = sand.u32 %s67, 1
        %s501 = smul.addr %s500, 64
        %s502 = scalar_lea.vmem [#allocation4], %s501
        // Predicated region
        $region85: #{tpu_custom_call.1} parent=83 // pred_check
          %p503 = pneg %p80
        $region86: #{tpu_custom_call.1} parent=83 // pred_check_branch
          %505 = sbr.rel (%p503) target = $region88
        $region87: #{tpu_custom_call.1} parent=83 // pred_region
          %507 = dma.done %s499, 1024
        $region88: #{tpu_custom_call.1} parent=83 // pred_fallthru
          _
        %p508 = scmp.lt.s32.totalorder %s33, 1
        %s509 = scalar_select %p508, %s33, 1
        %s510 = smul.addr %s509, 2
        %s511 = smul.addr %s510, 8
        %s512 = scalar_lea.vmem %s0, %s511
        %p513 = pneg %p54
        %p514 = pneg %p51
        %s515 = sand.u32 %s67, 1
        %s516 = scalar_lea.sflag [#allocation5], %s515
        %s517 = sand.u32 %s67, 1
        %s518 = smul.addr %s517, 64
        %s519 = scalar_lea.vmem [#allocation4], %s518
        %p520 = pneg %p80
        %p521 = pneg %p77
        %p522 = pneg %p101
        %p523 = pneg %p98
        %p524 = pneg %p122
        %p525 = pneg %p119
        %p526 = pneg %p143
        %p527 = pneg %p140
        %p528 = pneg %p164
        %p529 = pneg %p161
        %p530 = pneg %p185
        %p531 = pneg %p182
        %p532 = pneg %p206
        %p533 = pneg %p203
        %p534 = pneg %p227
        %p535 = pneg %p224
        %p536 = pneg %p248
        %p537 = pneg %p245
        %p538 = pneg %p269
        %p539 = pneg %p266
        %p540 = pneg %p290
        %p541 = pneg %p287
        %p542 = pneg %p311
        %p543 = pneg %p308
        %p544 = pneg %p332
        %p545 = pneg %p329
        %p546 = pneg %p353
        %p547 = pneg %p350
        %p548 = pneg %p374
        %p549 = pneg %p371
        %p550 = pneg %p400
        %p551 = pneg %p397
        %s552 = sand.u32 %s387, 1
        %s553 = scalar_lea.sflag [#allocation6], %s552
        %s554 = sand.u32 %s387, 1
        %s555 = smul.addr %s554, 64
        %s556 = scalar_lea.vmem [#allocation7], %s555
        %p557 = scmp.lt.s32.totalorder %s33, 1
        %s558 = scalar_select %p557, %s33, 1
        %s559 = smul.addr %s558, 2
        %s560 = smul.addr %s559, 8
        %s561 = scalar_lea.vmem %s0, %s560
        %v562 = vld [vmem:[%s502] sm:$0xff]
        %v563 = vld [vmem:[%s502 + $0x8] sm:$0xff]
        %v564 = vld [vmem:[%s502 + $0x10] sm:$0xff]
        %v565 = vld [vmem:[%s502 + $0x18] sm:$0xff]
        %v566 = vld [vmem:[%s502 + $0x20] sm:$0xff]
        %v567 = vld [vmem:[%s502 + $0x28] sm:$0xff]
        %v568 = vld [vmem:[%s502 + $0x30] sm:$0xff]
        %v569 = vld [vmem:[%s502 + $0x38] sm:$0xff]
        %v570 = vld [vmem:[%s2] sm:$0xff]
        %vm571 = vcmask 64512
        %v573 = vsel %vm571, %v562, 0
        %v576 = vsel %vm571, %v563, 0
        %v579 = vsel %vm571, %v564, 0
        %v582 = vsel %vm571, %v565, 0
        %v585 = vsel %vm571, %v566, 0
        %v588 = vsel %vm571, %v567, 0
        %v591 = vsel %vm571, %v568, 0
        %v594 = vsel %vm571, %v569, 0
        %596 = vmatpush.msra.mxu0 0.0
        %597 = vmatpush.msra.mxu0 0.0
        %598 = vmatpush.msra.mxu0 0.0
        %599 = vmatpush.msra.mxu0 0.0
        %600 = vmatpush.msra.mxu0 0.0
        %601 = vmatpush.msra.mxu0 0.0
        %602 = vmatpush.msra.mxu0 0.0
        %603 = vmatpush.msra.mxu0 0.0
        %604 = vmatpush.msra.mxu0 0.0
        %605 = vmatpush.msra.mxu0 0.0
        %606 = vmatpush.msra.mxu0 0.0
        %607 = vmatpush.msra.mxu0 0.0
        %608 = vmatpush.msra.mxu0 0.0
        %609 = vmatpush.msra.mxu0 0.0
        %610 = vmatpush.msra.mxu0 0.0
        %611 = vmatpush.msra.mxu0 %v570
        %612 = vmatmul.f32.gmra.mxu0 %v573
        %v613 = vpop.f32.mrf.mxu0
        %v614 = vadd.f32 0.0, %v613
        %615 = vmatmul.f32.gmra.mxu0 %v576
        %v616 = vpop.f32.mrf.mxu0
        %v617 = vadd.f32 0.0, %v616
        %618 = vmatmul.f32.gmra.mxu0 %v579
        %v619 = vpop.f32.mrf.mxu0
        %v620 = vadd.f32 0.0, %v619
        %621 = vmatmul.f32.gmra.mxu0 %v582
        %v622 = vpop.f32.mrf.mxu0
        %v623 = vadd.f32 0.0, %v622
        %624 = vmatmul.f32.gmra.mxu0 %v585
        %v625 = vpop.f32.mrf.mxu0
        %v626 = vadd.f32 0.0, %v625
        %627 = vmatmul.f32.gmra.mxu0 %v588
        %v628 = vpop.f32.mrf.mxu0
        %v629 = vadd.f32 0.0, %v628
        %630 = vmatmul.f32.gmra.mxu0 %v591
        %v631 = vpop.f32.mrf.mxu0
        %v632 = vadd.f32 0.0, %v631
        %633 = vmatmul.f32.gmra.mxu0 %v594
        %v634 = vpop.f32.mrf.mxu0
        %v635 = vadd.f32 0.0, %v634
        %636 = vdwg.mxu0
        %vm637 = vcmask 130048
        %638 = vst.msk [vmem:[#allocation2] sm:$0xff] %vm637, %v614
        %639 = vst.msk [vmem:[#allocation2 + $0x8] sm:$0xff] %vm637, %v617
        %640 = vst.msk [vmem:[#allocation2 + $0x10] sm:$0xff] %vm637, %v620
        %641 = vst.msk [vmem:[#allocation2 + $0x18] sm:$0xff] %vm637, %v623
        %642 = vst.msk [vmem:[#allocation2 + $0x20] sm:$0xff] %vm637, %v626
        %643 = vst.msk [vmem:[#allocation2 + $0x28] sm:$0xff] %vm637, %v629
        %644 = vst.msk [vmem:[#allocation2 + $0x30] sm:$0xff] %vm637, %v632
        %645 = vst.msk [vmem:[#allocation2 + $0x38] sm:$0xff] %vm637, %v635
        %v646 = vld [vmem:[#allocation2] sm:$0x1]
        %v647 = vld [vmem:[#allocation2 + $0x8] sm:$0x1]
        %v648 = vld [vmem:[#allocation2 + $0x10] sm:$0x1]
        %v649 = vld [vmem:[#allocation2 + $0x18] sm:$0x1]
        %v650 = vld [vmem:[#allocation2 + $0x20] sm:$0x1]
        %v651 = vld [vmem:[#allocation2 + $0x28] sm:$0x1]
        %v652 = vld [vmem:[#allocation2 + $0x30] sm:$0x1]
        %v653 = vld [vmem:[#allocation2 + $0x38] sm:$0x1]
        %v662 = vrot.slane %v647, 7
        %vm663 = vcmask 1041409
        %v664 = vsel %vm663, %v662, %v646
        %v665 = vrot.slane %v648, 6
        %vm666 = vcmask 1042434
        %v667 = vsel %vm666, %v665, %v664
        %v668 = vrot.slane %v649, 5
        %vm669 = vcmask 1043459
        %v670 = vsel %vm669, %v668, %v667
        %v671 = vrot.slane %v650, 4
        %vm672 = vcmask 1044484
        %v673 = vsel %vm672, %v671, %v670
        %v674 = vrot.slane %v651, 3
        %vm675 = vcmask 1045509
        %v676 = vsel %vm675, %v674, %v673
        %v677 = vrot.slane %v652, 2
        %vm678 = vcmask 1046534
        %v679 = vsel %vm678, %v677, %v676
        %v680 = vrot.slane %v653, 1
        %vm681 = vcmask 1047559
        %v682 = vsel %vm681, %v680, %v679
        %684 = vst.msk [vmem:[#allocation3] sm:$0xff] %vm637, %v682
        %v685 = vld [vmem:[#allocation2] sm:$0x1]
        %v686 = vld [vmem:[#allocation2 + $0x8] sm:$0x1]
        %v687 = vld [vmem:[#allocation2 + $0x10] sm:$0x1]
        %v688 = vld [vmem:[#allocation2 + $0x18] sm:$0x1]
        %v689 = vld [vmem:[#allocation2 + $0x20] sm:$0x1]
        %v690 = vld [vmem:[#allocation2 + $0x28] sm:$0x1]
        %v691 = vld [vmem:[#allocation2 + $0x30] sm:$0x1]
        %v692 = vld [vmem:[#allocation2 + $0x38] sm:$0x1]
        %v693 = vmul.f32 %v685, 0.53333336
        %v694 = vmul.f32 %v686, 0.53333336
        %v695 = vmul.f32 %v687, 0.53333336
        %v696 = vmul.f32 %v688, 0.53333336
        %v697 = vmul.f32 %v689, 0.53333336
        %v698 = vmul.f32 %v690, 0.53333336
        %v699 = vmul.f32 %v691, 0.53333336
        %v700 = vmul.f32 %v692, 0.53333336
        %v701 = vld [vmem:[#allocation2 + $0x1] sm:$0x1]
        %v702 = vld [vmem:[#allocation2 + $0x9] sm:$0x1]
        %v703 = vld [vmem:[#allocation2 + $0x11] sm:$0x1]
        %v704 = vld [vmem:[#allocation2 + $0x19] sm:$0x1]
        %v705 = vld [vmem:[#allocation2 + $0x21] sm:$0x1]
        %v706 = vld [vmem:[#allocation2 + $0x29] sm:$0x1]
        %v707 = vld [vmem:[#allocation2 + $0x31] sm:$0x1]
        %v708 = vld [vmem:[#allocation2 + $0x39] sm:$0x1]
        %v709 = vmul.f32 %v701, 0.46666667
        %v710 = vmul.f32 %v702, 0.46666667
        %v711 = vmul.f32 %v703, 0.46666667
        %v712 = vmul.f32 %v704, 0.46666667
        %v713 = vmul.f32 %v705, 0.46666667
        %v714 = vmul.f32 %v706, 0.46666667
        %v715 = vmul.f32 %v707, 0.46666667
        %v716 = vmul.f32 %v708, 0.46666667
        %v717 = vadd.f32 %v693, %v709
        %v718 = vadd.f32 %v694, %v710
        %v719 = vadd.f32 %v695, %v711
        %v720 = vadd.f32 %v696, %v712
        %v721 = vadd.f32 %v697, %v713
        %v722 = vadd.f32 %v698, %v714
        %v723 = vadd.f32 %v699, %v715
        %v724 = vadd.f32 %v700, %v716
        %v733 = vrot.slane %v718, 7
        %v734 = vsel %vm663, %v733, %v717
        %v735 = vrot.slane %v719, 6
        %v736 = vsel %vm666, %v735, %v734
        %v737 = vrot.slane %v720, 5
        %v738 = vsel %vm669, %v737, %v736
        %v739 = vrot.slane %v721, 4
        %v740 = vsel %vm672, %v739, %v738
        %v741 = vrot.slane %v722, 3
        %v742 = vsel %vm675, %v741, %v740
        %v743 = vrot.slane %v723, 2
        %v744 = vsel %vm678, %v743, %v742
        %v745 = vrot.slane %v724, 1
        %v746 = vsel %vm681, %v745, %v744
        %747 = vrot.lane.b32.xlu0 %v746, 16
        %v748 = vpop.permute.xlu0 %747
        %vm750 = vcmask 261248
        %751 = vst.msk [vmem:[#allocation3] sm:$0xff] %vm750, %v748
        %v752 = vld [vmem:[#allocation2] sm:$0x1]
        %v753 = vld [vmem:[#allocation2 + $0x8] sm:$0x1]
        %v754 = vld [vmem:[#allocation2 + $0x10] sm:$0x1]
        %v755 = vld [vmem:[#allocation2 + $0x18] sm:$0x1]
        %v756 = vld [vmem:[#allocation2 + $0x20] sm:$0x1]
        %v757 = vld [vmem:[#allocation2 + $0x28] sm:$0x1]
        %v758 = vld [vmem:[#allocation2 + $0x30] sm:$0x1]
        %v759 = vld [vmem:[#allocation2 + $0x38] sm:$0x1]
        %v760 = vmul.f32 %v752, 0.06666667
        %v761 = vmul.f32 %v753, 0.06666667
        %v762 = vmul.f32 %v754, 0.06666667
        %v763 = vmul.f32 %v755, 0.06666667
        %v764 = vmul.f32 %v756, 0.06666667
        %v765 = vmul.f32 %v757, 0.06666667
        %v766 = vmul.f32 %v758, 0.06666667
        %v767 = vmul.f32 %v759, 0.06666667
        %v768 = vld [vmem:[#allocation2 + $0x1] sm:$0x1]
        %v769 = vld [vmem:[#allocation2 + $0x9] sm:$0x1]
        %v770 = vld [vmem:[#allocation2 + $0x11] sm:$0x1]
        %v771 = vld [vmem:[#allocation2 + $0x19] sm:$0x1]
        %v772 = vld [vmem:[#allocation2 + $0x21] sm:$0x1]
        %v773 = vld [vmem:[#allocation2 + $0x29] sm:$0x1]
        %v774 = vld [vmem:[#allocation2 + $0x31] sm:$0x1]
        %v775 = vld [vmem:[#allocation2 + $0x39] sm:$0x1]
        %v776 = vmul.f32 %v768, 0.93333334
        %v777 = vmul.f32 %v769, 0.93333334
        %v778 = vmul.f32 %v770, 0.93333334
        %v779 = vmul.f32 %v771, 0.93333334
        %v780 = vmul.f32 %v772, 0.93333334
        %v781 = vmul.f32 %v773, 0.93333334
        %v782 = vmul.f32 %v774, 0.93333334
        %v783 = vmul.f32 %v775, 0.93333334
        %v784 = vadd.f32 %v760, %v776
        %v785 = vadd.f32 %v761, %v777
        %v786 = vadd.f32 %v762, %v778
        %v787 = vadd.f32 %v763, %v779
        %v788 = vadd.f32 %v764, %v780
        %v789 = vadd.f32 %v765, %v781
        %v790 = vadd.f32 %v766, %v782
        %v791 = vadd.f32 %v767, %v783
        %v800 = vrot.slane %v785, 7
        %v801 = vsel %vm663, %v800, %v784
        %v802 = vrot.slane %v786, 6
        %v803 = vsel %vm666, %v802, %v801
        %v804 = vrot.slane %v787, 5
        %v805 = vsel %vm669, %v804, %v803
        %v806 = vrot.slane %v788, 4
        %v807 = vsel %vm672, %v806, %v805
        %v808 = vrot.slane %v789, 3
        %v809 = vsel %vm675, %v808, %v807
        %v810 = vrot.slane %v790, 2
        %v811 = vsel %vm678, %v810, %v809
        %v812 = vrot.slane %v791, 1
        %v813 = vsel %vm681, %v812, %v811
        %814 = vrot.lane.b32.xlu0 %v813, 32
        %v815 = vpop.permute.xlu0 %814
        %vm817 = vcmask 392448
        %818 = vst.msk [vmem:[#allocation3] sm:$0xff] %vm817, %v815
        %v819 = vld [vmem:[#allocation2 + $0x1] sm:$0x1]
        %v820 = vld [vmem:[#allocation2 + $0x9] sm:$0x1]
        %v821 = vld [vmem:[#allocation2 + $0x11] sm:$0x1]
        %v822 = vld [vmem:[#allocation2 + $0x19] sm:$0x1]
        %v823 = vld [vmem:[#allocation2 + $0x21] sm:$0x1]
        %v824 = vld [vmem:[#allocation2 + $0x29] sm:$0x1]
        %v825 = vld [vmem:[#allocation2 + $0x31] sm:$0x1]
        %v826 = vld [vmem:[#allocation2 + $0x39] sm:$0x1]
        %v827 = vmul.f32 %v819, 0.6
        %v828 = vmul.f32 %v820, 0.6
        %v829 = vmul.f32 %v821, 0.6
        %v830 = vmul.f32 %v822, 0.6
        %v831 = vmul.f32 %v823, 0.6
        %v832 = vmul.f32 %v824, 0.6
        %v833 = vmul.f32 %v825, 0.6
        %v834 = vmul.f32 %v826, 0.6
        %v835 = vld [vmem:[#allocation2 + $0x2] sm:$0x1]
        %v836 = vld [vmem:[#allocation2 + $0xa] sm:$0x1]
        %v837 = vld [vmem:[#allocation2 + $0x12] sm:$0x1]
        %v838 = vld [vmem:[#allocation2 + $0x1a] sm:$0x1]
        %v839 = vld [vmem:[#allocation2 + $0x22] sm:$0x1]
        %v840 = vld [vmem:[#allocation2 + $0x2a] sm:$0x1]
        %v841 = vld [vmem:[#allocation2 + $0x32] sm:$0x1]
        %v842 = vld [vmem:[#allocation2 + $0x3a] sm:$0x1]
        %v843 = vmul.f32 %v835, 0.4
        %v844 = vmul.f32 %v836, 0.4
        %v845 = vmul.f32 %v837, 0.4
        %v846 = vmul.f32 %v838, 0.4
        %v847 = vmul.f32 %v839, 0.4
        %v848 = vmul.f32 %v840, 0.4
        %v849 = vmul.f32 %v841, 0.4
        %v850 = vmul.f32 %v842, 0.4
        %v851 = vadd.f32 %v827, %v843
        %v852 = vadd.f32 %v828, %v844
        %v853 = vadd.f32 %v829, %v845
        %v854 = vadd.f32 %v830, %v846
        %v855 = vadd.f32 %v831, %v847
        %v856 = vadd.f32 %v832, %v848
        %v857 = vadd.f32 %v833, %v849
        %v858 = vadd.f32 %v834, %v850
        %v867 = vrot.slane %v852, 7
        %v868 = vsel %vm663, %v867, %v851
        %v869 = vrot.slane %v853, 6
        %v870 = vsel %vm666, %v869, %v868
        %v871 = vrot.slane %v854, 5
        %v872 = vsel %vm669, %v871, %v870
        %v873 = vrot.slane %v855, 4
        %v874 = vsel %vm672, %v873, %v872
        %v875 = vrot.slane %v856, 3
        %v876 = vsel %vm675, %v875, %v874
        %v877 = vrot.slane %v857, 2
        %v878 = vsel %vm678, %v877, %v876
        %v879 = vrot.slane %v858, 1
        %v880 = vsel %vm681, %v879, %v878
        %881 = vrot.lane.b32.xlu0 %v880, 48
        %v882 = vpop.permute.xlu0 %881
        %vm884 = vcmask 523648
        %885 = vst.msk [vmem:[#allocation3] sm:$0xff] %vm884, %v882
        %v886 = vld [vmem:[#allocation2 + $0x1] sm:$0x1]
        %v887 = vld [vmem:[#allocation2 + $0x9] sm:$0x1]
        %v888 = vld [vmem:[#allocation2 + $0x11] sm:$0x1]
        %v889 = vld [vmem:[#allocation2 + $0x19] sm:$0x1]
        %v890 = vld [vmem:[#allocation2 + $0x21] sm:$0x1]
        %v891 = vld [vmem:[#allocation2 + $0x29] sm:$0x1]
        %v892 = vld [vmem:[#allocation2 + $0x31] sm:$0x1]
        %v893 = vld [vmem:[#allocation2 + $0x39] sm:$0x1]
        %v894 = vmul.f32 %v886, 0.13333334
        %v895 = vmul.f32 %v887, 0.13333334
        %v896 = vmul.f32 %v888, 0.13333334
        %v897 = vmul.f32 %v889, 0.13333334
        %v898 = vmul.f32 %v890, 0.13333334
        %v899 = vmul.f32 %v891, 0.13333334
        %v900 = vmul.f32 %v892, 0.13333334
        %v901 = vmul.f32 %v893, 0.13333334
        %v902 = vld [vmem:[#allocation2 + $0x2] sm:$0x1]
        %v903 = vld [vmem:[#allocation2 + $0xa] sm:$0x1]
        %v904 = vld [vmem:[#allocation2 + $0x12] sm:$0x1]
        %v905 = vld [vmem:[#allocation2 + $0x1a] sm:$0x1]
        %v906 = vld [vmem:[#allocation2 + $0x22] sm:$0x1]
        %v907 = vld [vmem:[#allocation2 + $0x2a] sm:$0x1]
        %v908 = vld [vmem:[#allocation2 + $0x32] sm:$0x1]
        %v909 = vld [vmem:[#allocation2 + $0x3a] sm:$0x1]
        %v910 = vmul.f32 %v902, 0.8666667
        %v911 = vmul.f32 %v903, 0.8666667
        %v912 = vmul.f32 %v904, 0.8666667
        %v913 = vmul.f32 %v905, 0.8666667
        %v914 = vmul.f32 %v906, 0.8666667
        %v915 = vmul.f32 %v907, 0.8666667
        %v916 = vmul.f32 %v908, 0.8666667
        %v917 = vmul.f32 %v909, 0.8666667
        %v918 = vadd.f32 %v894, %v910
        %v919 = vadd.f32 %v895, %v911
        %v920 = vadd.f32 %v896, %v912
        %v921 = vadd.f32 %v897, %v913
        %v922 = vadd.f32 %v898, %v914
        %v923 = vadd.f32 %v899, %v915
        %v924 = vadd.f32 %v900, %v916
        %v925 = vadd.f32 %v901, %v917
        %v934 = vrot.slane %v919, 7
        %v935 = vsel %vm663, %v934, %v918
        %v936 = vrot.slane %v920, 6
        %v937 = vsel %vm666, %v936, %v935
        %v938 = vrot.slane %v921, 5
        %v939 = vsel %vm669, %v938, %v937
        %v940 = vrot.slane %v922, 4
        %v941 = vsel %vm672, %v940, %v939
        %v942 = vrot.slane %v923, 3
        %v943 = vsel %vm675, %v942, %v941
        %v944 = vrot.slane %v924, 2
        %v945 = vsel %vm678, %v944, %v943
        %v946 = vrot.slane %v925, 1
        %v947 = vsel %vm681, %v946, %v945
        %948 = vrot.lane.b32.xlu0 %v947, 64
        %v949 = vpop.permute.xlu0 %948
        %vm951 = vcmask 654848
        %952 = vst.msk [vmem:[#allocation3] sm:$0xff] %vm951, %v949
        %v953 = vld [vmem:[#allocation2 + $0x2] sm:$0x1]
        %v954 = vld [vmem:[#allocation2 + $0xa] sm:$0x1]
        %v955 = vld [vmem:[#allocation2 + $0x12] sm:$0x1]
        %v956 = vld [vmem:[#allocation2 + $0x1a] sm:$0x1]
        %v957 = vld [vmem:[#allocation2 + $0x22] sm:$0x1]
        %v958 = vld [vmem:[#allocation2 + $0x2a] sm:$0x1]
        %v959 = vld [vmem:[#allocation2 + $0x32] sm:$0x1]
        %v960 = vld [vmem:[#allocation2 + $0x3a] sm:$0x1]
        %v961 = vmul.f32 %v953, 0.6666667
        %v962 = vmul.f32 %v954, 0.6666667
        %v963 = vmul.f32 %v955, 0.6666667
        %v964 = vmul.f32 %v956, 0.6666667
        %v965 = vmul.f32 %v957, 0.6666667
        %v966 = vmul.f32 %v958, 0.6666667
        %v967 = vmul.f32 %v959, 0.6666667
        %v968 = vmul.f32 %v960, 0.6666667
        %v969 = vld [vmem:[#allocation2 + $0x3] sm:$0x1]
        %v970 = vld [vmem:[#allocation2 + $0xb] sm:$0x1]
        %v971 = vld [vmem:[#allocation2 + $0x13] sm:$0x1]
        %v972 = vld [vmem:[#allocation2 + $0x1b] sm:$0x1]
        %v973 = vld [vmem:[#allocation2 + $0x23] sm:$0x1]
        %v974 = vld [vmem:[#allocation2 + $0x2b] sm:$0x1]
        %v975 = vld [vmem:[#allocation2 + $0x33] sm:$0x1]
        %v976 = vld [vmem:[#allocation2 + $0x3b] sm:$0x1]
        %v977 = vmul.f32 %v969, 0.33333334
        %v978 = vmul.f32 %v970, 0.33333334
        %v979 = vmul.f32 %v971, 0.33333334
        %v980 = vmul.f32 %v972, 0.33333334
        %v981 = vmul.f32 %v973, 0.33333334
        %v982 = vmul.f32 %v974, 0.33333334
        %v983 = vmul.f32 %v975, 0.33333334
        %v984 = vmul.f32 %v976, 0.33333334
        %v985 = vadd.f32 %v961, %v977
        %v986 = vadd.f32 %v962, %v978
        %v987 = vadd.f32 %v963, %v979
        %v988 = vadd.f32 %v964, %v980
        %v989 = vadd.f32 %v965, %v981
        %v990 = vadd.f32 %v966, %v982
        %v991 = vadd.f32 %v967, %v983
        %v992 = vadd.f32 %v968, %v984
        %v1001 = vrot.slane %v986, 7
        %v1002 = vsel %vm663, %v1001, %v985
        %v1003 = vrot.slane %v987, 6
        %v1004 = vsel %vm666, %v1003, %v1002
        %v1005 = vrot.slane %v988, 5
        %v1006 = vsel %vm669, %v1005, %v1004
        %v1007 = vrot.slane %v989, 4
        %v1008 = vsel %vm672, %v1007, %v1006
        %v1009 = vrot.slane %v990, 3
        %v1010 = vsel %vm675, %v1009, %v1008
        %v1011 = vrot.slane %v991, 2
        %v1012 = vsel %vm678, %v1011, %v1010
        %v1013 = vrot.slane %v992, 1
        %v1014 = vsel %vm681, %v1013, %v1012
        %1015 = vrot.lane.b32.xlu0 %v1014, 80
        %v1016 = vpop.permute.xlu0 %1015
        %vm1018 = vcmask 786048
        %1019 = vst.msk [vmem:[#allocation3] sm:$0xff] %vm1018, %v1016
        %v1020 = vld [vmem:[#allocation2 + $0x2] sm:$0x1]
        %v1021 = vld [vmem:[#allocation2 + $0xa] sm:$0x1]
        %v1022 = vld [vmem:[#allocation2 + $0x12] sm:$0x1]
        %v1023 = vld [vmem:[#allocation2 + $0x1a] sm:$0x1]
        %v1024 = vld [vmem:[#allocation2 + $0x22] sm:$0x1]
        %v1025 = vld [vmem:[#allocation2 + $0x2a] sm:$0x1]
        %v1026 = vld [vmem:[#allocation2 + $0x32] sm:$0x1]
        %v1027 = vld [vmem:[#allocation2 + $0x3a] sm:$0x1]
        %v1028 = vmul.f32 %v1020, 0.2
        %v1029 = vmul.f32 %v1021, 0.2
        %v1030 = vmul.f32 %v1022, 0.2
        %v1031 = vmul.f32 %v1023, 0.2
        %v1032 = vmul.f32 %v1024, 0.2
        %v1033 = vmul.f32 %v1025, 0.2
        %v1034 = vmul.f32 %v1026, 0.2
        %v1035 = vmul.f32 %v1027, 0.2
        %v1036 = vld [vmem:[#allocation2 + $0x3] sm:$0x1]
        %v1037 = vld [vmem:[#allocation2 + $0xb] sm:$0x1]
        %v1038 = vld [vmem:[#allocation2 + $0x13] sm:$0x1]
        %v1039 = vld [vmem:[#allocation2 + $0x1b] sm:$0x1]
        %v1040 = vld [vmem:[#allocation2 + $0x23] sm:$0x1]
        %v1041 = vld [vmem:[#allocation2 + $0x2b] sm:$0x1]
        %v1042 = vld [vmem:[#allocation2 + $0x33] sm:$0x1]
        %v1043 = vld [vmem:[#allocation2 + $0x3b] sm:$0x1]
        %v1044 = vmul.f32 %v1036, 0.8
        %v1045 = vmul.f32 %v1037, 0.8
        %v1046 = vmul.f32 %v1038, 0.8
        %v1047 = vmul.f32 %v1039, 0.8
        %v1048 = vmul.f32 %v1040, 0.8
        %v1049 = vmul.f32 %v1041, 0.8
        %v1050 = vmul.f32 %v1042, 0.8
        %v1051 = vmul.f32 %v1043, 0.8
        %v1052 = vadd.f32 %v1028, %v1044
        %v1053 = vadd.f32 %v1029, %v1045
        %v1054 = vadd.f32 %v1030, %v1046
        %v1055 = vadd.f32 %v1031, %v1047
        %v1056 = vadd.f32 %v1032, %v1048
        %v1057 = vadd.f32 %v1033, %v1049
        %v1058 = vadd.f32 %v1034, %v1050
        %v1059 = vadd.f32 %v1035, %v1051
        %v1068 = vrot.slane %v1053, 7
        %v1069 = vsel %vm663, %v1068, %v1052
        %v1070 = vrot.slane %v1054, 6
        %v1071 = vsel %vm666, %v1070, %v1069
        %v1072 = vrot.slane %v1055, 5
        %v1073 = vsel %vm669, %v1072, %v1071
        %v1074 = vrot.slane %v1056, 4
        %v1075 = vsel %vm672, %v1074, %v1073
        %v1076 = vrot.slane %v1057, 3
        %v1077 = vsel %vm675, %v1076, %v1075
        %v1078 = vrot.slane %v1058, 2
        %v1079 = vsel %vm678, %v1078, %v1077
        %v1080 = vrot.slane %v1059, 1
        %v1081 = vsel %vm681, %v1080, %v1079
        %1082 = vrot.lane.b32.xlu0 %v1081, 96
        %v1083 = vpop.permute.xlu0 %1082
        %vm1085 = vcmask 917248
        %1086 = vst.msk [vmem:[#allocation3] sm:$0xff] %vm1085, %v1083
        %v1087 = vld [vmem:[#allocation2 + $0x3] sm:$0x1]
        %v1088 = vld [vmem:[#allocation2 + $0xb] sm:$0x1]
        %v1089 = vld [vmem:[#allocation2 + $0x13] sm:$0x1]
        %v1090 = vld [vmem:[#allocation2 + $0x1b] sm:$0x1]
        %v1091 = vld [vmem:[#allocation2 + $0x23] sm:$0x1]
        %v1092 = vld [vmem:[#allocation2 + $0x2b] sm:$0x1]
        %v1093 = vld [vmem:[#allocation2 + $0x33] sm:$0x1]
        %v1094 = vld [vmem:[#allocation2 + $0x3b] sm:$0x1]
        %v1095 = vmul.f32 %v1087, 0.73333335
        %v1096 = vmul.f32 %v1088, 0.73333335
        %v1097 = vmul.f32 %v1089, 0.73333335
        %v1098 = vmul.f32 %v1090, 0.73333335
        %v1099 = vmul.f32 %v1091, 0.73333335
        %v1100 = vmul.f32 %v1092, 0.73333335
        %v1101 = vmul.f32 %v1093, 0.73333335
        %v1102 = vmul.f32 %v1094, 0.73333335
        %v1103 = vld [vmem:[#allocation2 + $0x4] sm:$0x1]
        %v1104 = vld [vmem:[#allocation2 + $0xc] sm:$0x1]
        %v1105 = vld [vmem:[#allocation2 + $0x14] sm:$0x1]
        %v1106 = vld [vmem:[#allocation2 + $0x1c] sm:$0x1]
        %v1107 = vld [vmem:[#allocation2 + $0x24] sm:$0x1]
        %v1108 = vld [vmem:[#allocation2 + $0x2c] sm:$0x1]
        %v1109 = vld [vmem:[#allocation2 + $0x34] sm:$0x1]
        %v1110 = vld [vmem:[#allocation2 + $0x3c] sm:$0x1]
        %v1111 = vmul.f32 %v1103, 0.26666668
        %v1112 = vmul.f32 %v1104, 0.26666668
        %v1113 = vmul.f32 %v1105, 0.26666668
        %v1114 = vmul.f32 %v1106, 0.26666668
        %v1115 = vmul.f32 %v1107, 0.26666668
        %v1116 = vmul.f32 %v1108, 0.26666668
        %v1117 = vmul.f32 %v1109, 0.26666668
        %v1118 = vmul.f32 %v1110, 0.26666668
        %v1119 = vadd.f32 %v1095, %v1111
        %v1120 = vadd.f32 %v1096, %v1112
        %v1121 = vadd.f32 %v1097, %v1113
        %v1122 = vadd.f32 %v1098, %v1114
        %v1123 = vadd.f32 %v1099, %v1115
        %v1124 = vadd.f32 %v1100, %v1116
        %v1125 = vadd.f32 %v1101, %v1117
        %v1126 = vadd.f32 %v1102, %v1118
        %v1135 = vrot.slane %v1120, 7
        %v1136 = vsel %vm663, %v1135, %v1119
        %v1137 = vrot.slane %v1121, 6
        %v1138 = vsel %vm666, %v1137, %v1136
        %v1139 = vrot.slane %v1122, 5
        %v1140 = vsel %vm669, %v1139, %v1138
        %v1141 = vrot.slane %v1123, 4
        %v1142 = vsel %vm672, %v1141, %v1140
        %v1143 = vrot.slane %v1124, 3
        %v1144 = vsel %vm675, %v1143, %v1142
        %v1145 = vrot.slane %v1125, 2
        %v1146 = vsel %vm678, %v1145, %v1144
        %v1147 = vrot.slane %v1126, 1
        %v1148 = vsel %vm681, %v1147, %v1146
        %1149 = vrot.lane.b32.xlu0 %v1148, 112
        %v1150 = vpop.permute.xlu0 %1149
        %vm1152 = vcmask 1048448
        %1153 = vst.msk [vmem:[#allocation3] sm:$0xff] %vm1152, %v1150
        %v1154 = vld [vmem:[#allocation2 + $0x3] sm:$0x1]
        %v1155 = vld [vmem:[#allocation2 + $0xb] sm:$0x1]
        %v1156 = vld [vmem:[#allocation2 + $0x13] sm:$0x1]
        %v1157 = vld [vmem:[#allocation2 + $0x1b] sm:$0x1]
        %v1158 = vld [vmem:[#allocation2 + $0x23] sm:$0x1]
        %v1159 = vld [vmem:[#allocation2 + $0x2b] sm:$0x1]
        %v1160 = vld [vmem:[#allocation2 + $0x33] sm:$0x1]
        %v1161 = vld [vmem:[#allocation2 + $0x3b] sm:$0x1]
        %v1162 = vmul.f32 %v1154, 0.26666668
        %v1163 = vmul.f32 %v1155, 0.26666668
        %v1164 = vmul.f32 %v1156, 0.26666668
        %v1165 = vmul.f32 %v1157, 0.26666668
        %v1166 = vmul.f32 %v1158, 0.26666668
        %v1167 = vmul.f32 %v1159, 0.26666668
        %v1168 = vmul.f32 %v1160, 0.26666668
        %v1169 = vmul.f32 %v1161, 0.26666668
        %v1170 = vld [vmem:[#allocation2 + $0x4] sm:$0x1]
        %v1171 = vld [vmem:[#allocation2 + $0xc] sm:$0x1]
        %v1172 = vld [vmem:[#allocation2 + $0x14] sm:$0x1]
        %v1173 = vld [vmem:[#allocation2 + $0x1c] sm:$0x1]
        %v1174 = vld [vmem:[#allocation2 + $0x24] sm:$0x1]
        %v1175 = vld [vmem:[#allocation2 + $0x2c] sm:$0x1]
        %v1176 = vld [vmem:[#allocation2 + $0x34] sm:$0x1]
        %v1177 = vld [vmem:[#allocation2 + $0x3c] sm:$0x1]
        %v1178 = vmul.f32 %v1170, 0.73333335
        %v1179 = vmul.f32 %v1171, 0.73333335
        %v1180 = vmul.f32 %v1172, 0.73333335
        %v1181 = vmul.f32 %v1173, 0.73333335
        %v1182 = vmul.f32 %v1174, 0.73333335
        %v1183 = vmul.f32 %v1175, 0.73333335
        %v1184 = vmul.f32 %v1176, 0.73333335
        %v1185 = vmul.f32 %v1177, 0.73333335
        %v1186 = vadd.f32 %v1162, %v1178
        %v1187 = vadd.f32 %v1163, %v1179
        %v1188 = vadd.f32 %v1164, %v1180
        %v1189 = vadd.f32 %v1165, %v1181
        %v1190 = vadd.f32 %v1166, %v1182
        %v1191 = vadd.f32 %v1167, %v1183
        %v1192 = vadd.f32 %v1168, %v1184
        %v1193 = vadd.f32 %v1169, %v1185
        %v1202 = vrot.slane %v1187, 7
        %v1203 = vsel %vm663, %v1202, %v1186
        %v1204 = vrot.slane %v1188, 6
        %v1205 = vsel %vm666, %v1204, %v1203
        %v1206 = vrot.slane %v1189, 5
        %v1207 = vsel %vm669, %v1206, %v1205
        %v1208 = vrot.slane %v1190, 4
        %v1209 = vsel %vm672, %v1208, %v1207
        %v1210 = vrot.slane %v1191, 3
        %v1211 = vsel %vm675, %v1210, %v1209
        %v1212 = vrot.slane %v1192, 2
        %v1213 = vsel %vm678, %v1212, %v1211
        %v1214 = vrot.slane %v1193, 1
        %v1215 = vsel %vm681, %v1214, %v1213
        %1217 = vst.msk [vmem:[#allocation3 + $0x8] sm:$0xff] %vm637, %v1215
        %v1218 = vld [vmem:[#allocation2 + $0x4] sm:$0x1]
        %v1219 = vld [vmem:[#allocation2 + $0xc] sm:$0x1]
        %v1220 = vld [vmem:[#allocation2 + $0x14] sm:$0x1]
        %v1221 = vld [vmem:[#allocation2 + $0x1c] sm:$0x1]
        %v1222 = vld [vmem:[#allocation2 + $0x24] sm:$0x1]
        %v1223 = vld [vmem:[#allocation2 + $0x2c] sm:$0x1]
        %v1224 = vld [vmem:[#allocation2 + $0x34] sm:$0x1]
        %v1225 = vld [vmem:[#allocation2 + $0x3c] sm:$0x1]
        %v1226 = vmul.f32 %v1218, 0.8
        %v1227 = vmul.f32 %v1219, 0.8
        %v1228 = vmul.f32 %v1220, 0.8
        %v1229 = vmul.f32 %v1221, 0.8
        %v1230 = vmul.f32 %v1222, 0.8
        %v1231 = vmul.f32 %v1223, 0.8
        %v1232 = vmul.f32 %v1224, 0.8
        %v1233 = vmul.f32 %v1225, 0.8
        %v1234 = vld [vmem:[#allocation2 + $0x5] sm:$0x1]
        %v1235 = vld [vmem:[#allocation2 + $0xd] sm:$0x1]
        %v1236 = vld [vmem:[#allocation2 + $0x15] sm:$0x1]
        %v1237 = vld [vmem:[#allocation2 + $0x1d] sm:$0x1]
        %v1238 = vld [vmem:[#allocation2 + $0x25] sm:$0x1]
        %v1239 = vld [vmem:[#allocation2 + $0x2d] sm:$0x1]
        %v1240 = vld [vmem:[#allocation2 + $0x35] sm:$0x1]
        %v1241 = vld [vmem:[#allocation2 + $0x3d] sm:$0x1]
        %v1242 = vmul.f32 %v1234, 0.2
        %v1243 = vmul.f32 %v1235, 0.2
        %v1244 = vmul.f32 %v1236, 0.2
        %v1245 = vmul.f32 %v1237, 0.2
        %v1246 = vmul.f32 %v1238, 0.2
        %v1247 = vmul.f32 %v1239, 0.2
        %v1248 = vmul.f32 %v1240, 0.2
        %v1249 = vmul.f32 %v1241, 0.2
        %v1250 = vadd.f32 %v1226, %v1242
        %v1251 = vadd.f32 %v1227, %v1243
        %v1252 = vadd.f32 %v1228, %v1244
        %v1253 = vadd.f32 %v1229, %v1245
        %v1254 = vadd.f32 %v1230, %v1246
        %v1255 = vadd.f32 %v1231, %v1247
        %v1256 = vadd.f32 %v1232, %v1248
        %v1257 = vadd.f32 %v1233, %v1249
        %v1266 = vrot.slane %v1251, 7
        %v1267 = vsel %vm663, %v1266, %v1250
        %v1268 = vrot.slane %v1252, 6
        %v1269 = vsel %vm666, %v1268, %v1267
        %v1270 = vrot.slane %v1253, 5
        %v1271 = vsel %vm669, %v1270, %v1269
        %v1272 = vrot.slane %v1254, 4
        %v1273 = vsel %vm672, %v1272, %v1271
        %v1274 = vrot.slane %v1255, 3
        %v1275 = vsel %vm675, %v1274, %v1273
        %v1276 = vrot.slane %v1256, 2
        %v1277 = vsel %vm678, %v1276, %v1275
        %v1278 = vrot.slane %v1257, 1
        %v1279 = vsel %vm681, %v1278, %v1277
        %1280 = vrot.lane.b32.xlu0 %v1279, 16
        %v1281 = vpop.permute.xlu0 %1280
        %1283 = vst.msk [vmem:[#allocation3 + $0x8] sm:$0xff] %vm750, %v1281
        %v1284 = vld [vmem:[#allocation2 + $0x4] sm:$0x1]
        %v1285 = vld [vmem:[#allocation2 + $0xc] sm:$0x1]
        %v1286 = vld [vmem:[#allocation2 + $0x14] sm:$0x1]
        %v1287 = vld [vmem:[#allocation2 + $0x1c] sm:$0x1]
        %v1288 = vld [vmem:[#allocation2 + $0x24] sm:$0x1]
        %v1289 = vld [vmem:[#allocation2 + $0x2c] sm:$0x1]
        %v1290 = vld [vmem:[#allocation2 + $0x34] sm:$0x1]
        %v1291 = vld [vmem:[#allocation2 + $0x3c] sm:$0x1]
        %v1292 = vmul.f32 %v1284, 0.33333334
        %v1293 = vmul.f32 %v1285, 0.33333334
        %v1294 = vmul.f32 %v1286, 0.33333334
        %v1295 = vmul.f32 %v1287, 0.33333334
        %v1296 = vmul.f32 %v1288, 0.33333334
        %v1297 = vmul.f32 %v1289, 0.33333334
        %v1298 = vmul.f32 %v1290, 0.33333334
        %v1299 = vmul.f32 %v1291, 0.33333334
        %v1300 = vld [vmem:[#allocation2 + $0x5] sm:$0x1]
        %v1301 = vld [vmem:[#allocation2 + $0xd] sm:$0x1]
        %v1302 = vld [vmem:[#allocation2 + $0x15] sm:$0x1]
        %v1303 = vld [vmem:[#allocation2 + $0x1d] sm:$0x1]
        %v1304 = vld [vmem:[#allocation2 + $0x25] sm:$0x1]
        %v1305 = vld [vmem:[#allocation2 + $0x2d] sm:$0x1]
        %v1306 = vld [vmem:[#allocation2 + $0x35] sm:$0x1]
        %v1307 = vld [vmem:[#allocation2 + $0x3d] sm:$0x1]
        %v1308 = vmul.f32 %v1300, 0.6666667
        %v1309 = vmul.f32 %v1301, 0.6666667
        %v1310 = vmul.f32 %v1302, 0.6666667
        %v1311 = vmul.f32 %v1303, 0.6666667
        %v1312 = vmul.f32 %v1304, 0.6666667
        %v1313 = vmul.f32 %v1305, 0.6666667
        %v1314 = vmul.f32 %v1306, 0.6666667
        %v1315 = vmul.f32 %v1307, 0.6666667
        %v1316 = vadd.f32 %v1292, %v1308
        %v1317 = vadd.f32 %v1293, %v1309
        %v1318 = vadd.f32 %v1294, %v1310
        %v1319 = vadd.f32 %v1295, %v1311
        %v1320 = vadd.f32 %v1296, %v1312
        %v1321 = vadd.f32 %v1297, %v1313
        %v1322 = vadd.f32 %v1298, %v1314
        %v1323 = vadd.f32 %v1299, %v1315
        %v1332 = vrot.slane %v1317, 7
        %v1333 = vsel %vm663, %v1332, %v1316
        %v1334 = vrot.slane %v1318, 6
        %v1335 = vsel %vm666, %v1334, %v1333
        %v1336 = vrot.slane %v1319, 5
        %v1337 = vsel %vm669, %v1336, %v1335
        %v1338 = vrot.slane %v1320, 4
        %v1339 = vsel %vm672, %v1338, %v1337
        %v1340 = vrot.slane %v1321, 3
        %v1341 = vsel %vm675, %v1340, %v1339
        %v1342 = vrot.slane %v1322, 2
        %v1343 = vsel %vm678, %v1342, %v1341
        %v1344 = vrot.slane %v1323, 1
        %v1345 = vsel %vm681, %v1344, %v1343
        %1346 = vrot.lane.b32.xlu0 %v1345, 32
        %v1347 = vpop.permute.xlu0 %1346
        %1349 = vst.msk [vmem:[#allocation3 + $0x8] sm:$0xff] %vm817, %v1347
        %v1350 = vld [vmem:[#allocation2 + $0x5] sm:$0x1]
        %v1351 = vld [vmem:[#allocation2 + $0xd] sm:$0x1]
        %v1352 = vld [vmem:[#allocation2 + $0x15] sm:$0x1]
        %v1353 = vld [vmem:[#allocation2 + $0x1d] sm:$0x1]
        %v1354 = vld [vmem:[#allocation2 + $0x25] sm:$0x1]
        %v1355 = vld [vmem:[#allocation2 + $0x2d] sm:$0x1]
        %v1356 = vld [vmem:[#allocation2 + $0x35] sm:$0x1]
        %v1357 = vld [vmem:[#allocation2 + $0x3d] sm:$0x1]
        %v1358 = vmul.f32 %v1350, 0.8666667
        %v1359 = vmul.f32 %v1351, 0.8666667
        %v1360 = vmul.f32 %v1352, 0.8666667
        %v1361 = vmul.f32 %v1353, 0.8666667
        %v1362 = vmul.f32 %v1354, 0.8666667
        %v1363 = vmul.f32 %v1355, 0.8666667
        %v1364 = vmul.f32 %v1356, 0.8666667
        %v1365 = vmul.f32 %v1357, 0.8666667
        %v1366 = vld [vmem:[#allocation2 + $0x6] sm:$0x1]
        %v1367 = vld [vmem:[#allocation2 + $0xe] sm:$0x1]
        %v1368 = vld [vmem:[#allocation2 + $0x16] sm:$0x1]
        %v1369 = vld [vmem:[#allocation2 + $0x1e] sm:$0x1]
        %v1370 = vld [vmem:[#allocation2 + $0x26] sm:$0x1]
        %v1371 = vld [vmem:[#allocation2 + $0x2e] sm:$0x1]
        %v1372 = vld [vmem:[#allocation2 + $0x36] sm:$0x1]
        %v1373 = vld [vmem:[#allocation2 + $0x3e] sm:$0x1]
        %v1374 = vmul.f32 %v1366, 0.13333334
        %v1375 = vmul.f32 %v1367, 0.13333334
        %v1376 = vmul.f32 %v1368, 0.13333334
        %v1377 = vmul.f32 %v1369, 0.13333334
        %v1378 = vmul.f32 %v1370, 0.13333334
        %v1379 = vmul.f32 %v1371, 0.13333334
        %v1380 = vmul.f32 %v1372, 0.13333334
        %v1381 = vmul.f32 %v1373, 0.13333334
        %v1382 = vadd.f32 %v1358, %v1374
        %v1383 = vadd.f32 %v1359, %v1375
        %v1384 = vadd.f32 %v1360, %v1376
        %v1385 = vadd.f32 %v1361, %v1377
        %v1386 = vadd.f32 %v1362, %v1378
        %v1387 = vadd.f32 %v1363, %v1379
        %v1388 = vadd.f32 %v1364, %v1380
        %v1389 = vadd.f32 %v1365, %v1381
        %v1398 = vrot.slane %v1383, 7
        %v1399 = vsel %vm663, %v1398, %v1382
        %v1400 = vrot.slane %v1384, 6
        %v1401 = vsel %vm666, %v1400, %v1399
        %v1402 = vrot.slane %v1385, 5
        %v1403 = vsel %vm669, %v1402, %v1401
        %v1404 = vrot.slane %v1386, 4
        %v1405 = vsel %vm672, %v1404, %v1403
        %v1406 = vrot.slane %v1387, 3
        %v1407 = vsel %vm675, %v1406, %v1405
        %v1408 = vrot.slane %v1388, 2
        %v1409 = vsel %vm678, %v1408, %v1407
        %v1410 = vrot.slane %v1389, 1
        %v1411 = vsel %vm681, %v1410, %v1409
        %1412 = vrot.lane.b32.xlu0 %v1411, 48
        %v1413 = vpop.permute.xlu0 %1412
        %1415 = vst.msk [vmem:[#allocation3 + $0x8] sm:$0xff] %vm884, %v1413
        %v1416 = vld [vmem:[#allocation2 + $0x5] sm:$0x1]
        %v1417 = vld [vmem:[#allocation2 + $0xd] sm:$0x1]
        %v1418 = vld [vmem:[#allocation2 + $0x15] sm:$0x1]
        %v1419 = vld [vmem:[#allocation2 + $0x1d] sm:$0x1]
        %v1420 = vld [vmem:[#allocation2 + $0x25] sm:$0x1]
        %v1421 = vld [vmem:[#allocation2 + $0x2d] sm:$0x1]
        %v1422 = vld [vmem:[#allocation2 + $0x35] sm:$0x1]
        %v1423 = vld [vmem:[#allocation2 + $0x3d] sm:$0x1]
        %v1424 = vmul.f32 %v1416, 0.4
        %v1425 = vmul.f32 %v1417, 0.4
        %v1426 = vmul.f32 %v1418, 0.4
        %v1427 = vmul.f32 %v1419, 0.4
        %v1428 = vmul.f32 %v1420, 0.4
        %v1429 = vmul.f32 %v1421, 0.4
        %v1430 = vmul.f32 %v1422, 0.4
        %v1431 = vmul.f32 %v1423, 0.4
        %v1432 = vld [vmem:[#allocation2 + $0x6] sm:$0x1]
        %v1433 = vld [vmem:[#allocation2 + $0xe] sm:$0x1]
        %v1434 = vld [vmem:[#allocation2 + $0x16] sm:$0x1]
        %v1435 = vld [vmem:[#allocation2 + $0x1e] sm:$0x1]
        %v1436 = vld [vmem:[#allocation2 + $0x26] sm:$0x1]
        %v1437 = vld [vmem:[#allocation2 + $0x2e] sm:$0x1]
        %v1438 = vld [vmem:[#allocation2 + $0x36] sm:$0x1]
        %v1439 = vld [vmem:[#allocation2 + $0x3e] sm:$0x1]
        %v1440 = vmul.f32 %v1432, 0.6
        %v1441 = vmul.f32 %v1433, 0.6
        %v1442 = vmul.f32 %v1434, 0.6
        %v1443 = vmul.f32 %v1435, 0.6
        %v1444 = vmul.f32 %v1436, 0.6
        %v1445 = vmul.f32 %v1437, 0.6
        %v1446 = vmul.f32 %v1438, 0.6
        %v1447 = vmul.f32 %v1439, 0.6
        %v1448 = vadd.f32 %v1424, %v1440
        %v1449 = vadd.f32 %v1425, %v1441
        %v1450 = vadd.f32 %v1426, %v1442
        %v1451 = vadd.f32 %v1427, %v1443
        %v1452 = vadd.f32 %v1428, %v1444
        %v1453 = vadd.f32 %v1429, %v1445
        %v1454 = vadd.f32 %v1430, %v1446
        %v1455 = vadd.f32 %v1431, %v1447
        %v1464 = vrot.slane %v1449, 7
        %v1465 = vsel %vm663, %v1464, %v1448
        %v1466 = vrot.slane %v1450, 6
        %v1467 = vsel %vm666, %v1466, %v1465
        %v1468 = vrot.slane %v1451, 5
        %v1469 = vsel %vm669, %v1468, %v1467
        %v1470 = vrot.slane %v1452, 4
        %v1471 = vsel %vm672, %v1470, %v1469
        %v1472 = vrot.slane %v1453, 3
        %v1473 = vsel %vm675, %v1472, %v1471
        %v1474 = vrot.slane %v1454, 2
        %v1475 = vsel %vm678, %v1474, %v1473
        %v1476 = vrot.slane %v1455, 1
        %v1477 = vsel %vm681, %v1476, %v1475
        %1478 = vrot.lane.b32.xlu0 %v1477, 64
        %v1479 = vpop.permute.xlu0 %1478
        %1481 = vst.msk [vmem:[#allocation3 + $0x8] sm:$0xff] %vm951, %v1479
        %v1482 = vld [vmem:[#allocation2 + $0x6] sm:$0x1]
        %v1483 = vld [vmem:[#allocation2 + $0xe] sm:$0x1]
        %v1484 = vld [vmem:[#allocation2 + $0x16] sm:$0x1]
        %v1485 = vld [vmem:[#allocation2 + $0x1e] sm:$0x1]
        %v1486 = vld [vmem:[#allocation2 + $0x26] sm:$0x1]
        %v1487 = vld [vmem:[#allocation2 + $0x2e] sm:$0x1]
        %v1488 = vld [vmem:[#allocation2 + $0x36] sm:$0x1]
        %v1489 = vld [vmem:[#allocation2 + $0x3e] sm:$0x1]
        %v1490 = vmul.f32 %v1482, 0.93333334
        %v1491 = vmul.f32 %v1483, 0.93333334
        %v1492 = vmul.f32 %v1484, 0.93333334
        %v1493 = vmul.f32 %v1485, 0.93333334
        %v1494 = vmul.f32 %v1486, 0.93333334
        %v1495 = vmul.f32 %v1487, 0.93333334
        %v1496 = vmul.f32 %v1488, 0.93333334
        %v1497 = vmul.f32 %v1489, 0.93333334
        %v1498 = vld [vmem:[#allocation2 + $0x7] sm:$0x1]
        %v1499 = vld [vmem:[#allocation2 + $0xf] sm:$0x1]
        %v1500 = vld [vmem:[#allocation2 + $0x17] sm:$0x1]
        %v1501 = vld [vmem:[#allocation2 + $0x1f] sm:$0x1]
        %v1502 = vld [vmem:[#allocation2 + $0x27] sm:$0x1]
        %v1503 = vld [vmem:[#allocation2 + $0x2f] sm:$0x1]
        %v1504 = vld [vmem:[#allocation2 + $0x37] sm:$0x1]
        %v1505 = vld [vmem:[#allocation2 + $0x3f] sm:$0x1]
        %v1506 = vmul.f32 %v1498, 0.06666667
        %v1507 = vmul.f32 %v1499, 0.06666667
        %v1508 = vmul.f32 %v1500, 0.06666667
        %v1509 = vmul.f32 %v1501, 0.06666667
        %v1510 = vmul.f32 %v1502, 0.06666667
        %v1511 = vmul.f32 %v1503, 0.06666667
        %v1512 = vmul.f32 %v1504, 0.06666667
        %v1513 = vmul.f32 %v1505, 0.06666667
        %v1514 = vadd.f32 %v1490, %v1506
        %v1515 = vadd.f32 %v1491, %v1507
        %v1516 = vadd.f32 %v1492, %v1508
        %v1517 = vadd.f32 %v1493, %v1509
        %v1518 = vadd.f32 %v1494, %v1510
        %v1519 = vadd.f32 %v1495, %v1511
        %v1520 = vadd.f32 %v1496, %v1512
        %v1521 = vadd.f32 %v1497, %v1513
        %v1530 = vrot.slane %v1515, 7
        %v1531 = vsel %vm663, %v1530, %v1514
        %v1532 = vrot.slane %v1516, 6
        %v1533 = vsel %vm666, %v1532, %v1531
        %v1534 = vrot.slane %v1517, 5
        %v1535 = vsel %vm669, %v1534, %v1533
        %v1536 = vrot.slane %v1518, 4
        %v1537 = vsel %vm672, %v1536, %v1535
        %v1538 = vrot.slane %v1519, 3
        %v1539 = vsel %vm675, %v1538, %v1537
        %v1540 = vrot.slane %v1520, 2
        %v1541 = vsel %vm678, %v1540, %v1539
        %v1542 = vrot.slane %v1521, 1
        %v1543 = vsel %vm681, %v1542, %v1541
        %1544 = vrot.lane.b32.xlu0 %v1543, 80
        %v1545 = vpop.permute.xlu0 %1544
        %1547 = vst.msk [vmem:[#allocation3 + $0x8] sm:$0xff] %vm1018, %v1545
        %v1548 = vld [vmem:[#allocation2 + $0x6] sm:$0x1]
        %v1549 = vld [vmem:[#allocation2 + $0xe] sm:$0x1]
        %v1550 = vld [vmem:[#allocation2 + $0x16] sm:$0x1]
        %v1551 = vld [vmem:[#allocation2 + $0x1e] sm:$0x1]
        %v1552 = vld [vmem:[#allocation2 + $0x26] sm:$0x1]
        %v1553 = vld [vmem:[#allocation2 + $0x2e] sm:$0x1]
        %v1554 = vld [vmem:[#allocation2 + $0x36] sm:$0x1]
        %v1555 = vld [vmem:[#allocation2 + $0x3e] sm:$0x1]
        %v1556 = vmul.f32 %v1548, 0.46666667
        %v1557 = vmul.f32 %v1549, 0.46666667
        %v1558 = vmul.f32 %v1550, 0.46666667
        %v1559 = vmul.f32 %v1551, 0.46666667
        %v1560 = vmul.f32 %v1552, 0.46666667
        %v1561 = vmul.f32 %v1553, 0.46666667
        %v1562 = vmul.f32 %v1554, 0.46666667
        %v1563 = vmul.f32 %v1555, 0.46666667
        %v1564 = vld [vmem:[#allocation2 + $0x7] sm:$0x1]
        %v1565 = vld [vmem:[#allocation2 + $0xf] sm:$0x1]
        %v1566 = vld [vmem:[#allocation2 + $0x17] sm:$0x1]
        %v1567 = vld [vmem:[#allocation2 + $0x1f] sm:$0x1]
        %v1568 = vld [vmem:[#allocation2 + $0x27] sm:$0x1]
        %v1569 = vld [vmem:[#allocation2 + $0x2f] sm:$0x1]
        %v1570 = vld [vmem:[#allocation2 + $0x37] sm:$0x1]
        %v1571 = vld [vmem:[#allocation2 + $0x3f] sm:$0x1]
        %v1572 = vmul.f32 %v1564, 0.53333336
        %v1573 = vmul.f32 %v1565, 0.53333336
        %v1574 = vmul.f32 %v1566, 0.53333336
        %v1575 = vmul.f32 %v1567, 0.53333336
        %v1576 = vmul.f32 %v1568, 0.53333336
        %v1577 = vmul.f32 %v1569, 0.53333336
        %v1578 = vmul.f32 %v1570, 0.53333336
        %v1579 = vmul.f32 %v1571, 0.53333336
        %v1580 = vadd.f32 %v1556, %v1572
        %v1581 = vadd.f32 %v1557, %v1573
        %v1582 = vadd.f32 %v1558, %v1574
        %v1583 = vadd.f32 %v1559, %v1575
        %v1584 = vadd.f32 %v1560, %v1576
        %v1585 = vadd.f32 %v1561, %v1577
        %v1586 = vadd.f32 %v1562, %v1578
        %v1587 = vadd.f32 %v1563, %v1579
        %v1596 = vrot.slane %v1581, 7
        %v1597 = vsel %vm663, %v1596, %v1580
        %v1598 = vrot.slane %v1582, 6
        %v1599 = vsel %vm666, %v1598, %v1597
        %v1600 = vrot.slane %v1583, 5
        %v1601 = vsel %vm669, %v1600, %v1599
        %v1602 = vrot.slane %v1584, 4
        %v1603 = vsel %vm672, %v1602, %v1601
        %v1604 = vrot.slane %v1585, 3
        %v1605 = vsel %vm675, %v1604, %v1603
        %v1606 = vrot.slane %v1586, 2
        %v1607 = vsel %vm678, %v1606, %v1605
        %v1608 = vrot.slane %v1587, 1
        %v1609 = vsel %vm681, %v1608, %v1607
        %1610 = vrot.lane.b32.xlu0 %v1609, 96
        %v1611 = vpop.permute.xlu0 %1610
        %1613 = vst.msk [vmem:[#allocation3 + $0x8] sm:$0xff] %vm1085, %v1611
        %v1614 = vld [vmem:[#allocation2 + $0x7] sm:$0x1]
        %v1615 = vld [vmem:[#allocation2 + $0xf] sm:$0x1]
        %v1616 = vld [vmem:[#allocation2 + $0x17] sm:$0x1]
        %v1617 = vld [vmem:[#allocation2 + $0x1f] sm:$0x1]
        %v1618 = vld [vmem:[#allocation2 + $0x27] sm:$0x1]
        %v1619 = vld [vmem:[#allocation2 + $0x2f] sm:$0x1]
        %v1620 = vld [vmem:[#allocation2 + $0x37] sm:$0x1]
        %v1621 = vld [vmem:[#allocation2 + $0x3f] sm:$0x1]
        %v1630 = vrot.slane %v1615, 7
        %v1631 = vsel %vm663, %v1630, %v1614
        %v1632 = vrot.slane %v1616, 6
        %v1633 = vsel %vm666, %v1632, %v1631
        %v1634 = vrot.slane %v1617, 5
        %v1635 = vsel %vm669, %v1634, %v1633
        %v1636 = vrot.slane %v1618, 4
        %v1637 = vsel %vm672, %v1636, %v1635
        %v1638 = vrot.slane %v1619, 3
        %v1639 = vsel %vm675, %v1638, %v1637
        %v1640 = vrot.slane %v1620, 2
        %v1641 = vsel %vm678, %v1640, %v1639
        %v1642 = vrot.slane %v1621, 1
        %v1643 = vsel %vm681, %v1642, %v1641
        %1644 = vrot.lane.b32.xlu0 %v1643, 112
        %v1645 = vpop.permute.xlu0 %1644
        %1647 = vst.msk [vmem:[#allocation3 + $0x8] sm:$0xff] %vm1152, %v1645
        %v1648 = vld [vmem:[%s3] sm:$0xff]
        %v1649 = vld [vmem:[%s3 + $0x8] sm:$0xff]
        %v1650 = vld [vmem:[%s561] sm:$0xff]
        %v1651 = vld [vmem:[%s561 + $0x8] sm:$0xff]
        %v1652 = vld [vmem:[%s4] sm:$0xff]
        %v1653 = vld [vmem:[%s4 + $0x8] sm:$0xff]
        %v1654 = vld [vmem:[#allocation3] sm:$0xff]
        %v1655 = vld [vmem:[#allocation3 + $0x8] sm:$0xff]
        %v1657 = vsel %vm571, %v1652, 0
        %v1660 = vsel %vm571, %v1653, 0
        %1662 = vmatpush.msra.mxu0 0.0
        %1663 = vmatpush.msra.mxu0 0.0
        %1664 = vmatpush.msra.mxu0 0.0
        %1665 = vmatpush.msra.mxu0 0.0
        %1666 = vmatpush.msra.mxu0 0.0
        %1667 = vmatpush.msra.mxu0 0.0
        %1668 = vmatpush.msra.mxu0 0.0
        %1669 = vmatpush.msra.mxu0 0.0
        %1670 = vmatpush.msra.mxu0 0.0
        %1671 = vmatpush.msra.mxu0 0.0
        %1672 = vmatpush.msra.mxu0 0.0
        %1673 = vmatpush.msra.mxu0 0.0
        %1674 = vmatpush.msra.mxu0 0.0
        %1675 = vmatpush.msra.mxu0 0.0
        %1676 = vmatpush.msra.mxu0 0.0
        %1677 = vmatpush.msra.mxu0 %v1654
        %1678 = vmatmul.f32.gmra.mxu0 %v1657
        %v1679 = vpop.f32.mrf.mxu0
        %v1680 = vadd.f32 0.0, %v1679
        %1681 = vmatmul.f32.gmra.mxu0 %v1660
        %v1682 = vpop.f32.mrf.mxu0
        %v1683 = vadd.f32 0.0, %v1682
        %1684 = vdwg.mxu0
        %1685 = vmatpush.msra.mxu0 0.0
        %1686 = vmatpush.msra.mxu0 0.0
        %1687 = vmatpush.msra.mxu0 0.0
        %1688 = vmatpush.msra.mxu0 0.0
        %1689 = vmatpush.msra.mxu0 0.0
        %1690 = vmatpush.msra.mxu0 0.0
        %1691 = vmatpush.msra.mxu0 0.0
        %1692 = vmatpush.msra.mxu0 0.0
        %1693 = vmatpush.msra.mxu0 0.0
        %1694 = vmatpush.msra.mxu0 0.0
        %1695 = vmatpush.msra.mxu0 0.0
        %1696 = vmatpush.msra.mxu0 0.0
        %1697 = vmatpush.msra.mxu0 0.0
        %1698 = vmatpush.msra.mxu0 0.0
        %1699 = vmatpush.msra.mxu0 0.0
        %1700 = vmatpush.msra.mxu0 %v1655
        %1701 = vmatmul.f32.gmra.mxu0 %v1657
        %v1702 = vpop.f32.mrf.mxu0
        %v1703 = vadd.f32 0.0, %v1702
        %1704 = vmatmul.f32.gmra.mxu0 %v1660
        %v1705 = vpop.f32.mrf.mxu0
        %v1706 = vadd.f32 0.0, %v1705
        %1707 = vdwg.mxu0
        %v1709 = vsel %vm571, %v1648, 0
        %v1712 = vsel %vm571, %v1649, 0
        %1714 = vmatpush.msra.mxu0 0.0
        %1715 = vmatpush.msra.mxu0 0.0
        %1716 = vmatpush.msra.mxu0 0.0
        %1717 = vmatpush.msra.mxu0 0.0
        %1718 = vmatpush.msra.mxu0 0.0
        %1719 = vmatpush.msra.mxu0 0.0
        %1720 = vmatpush.msra.mxu0 0.0
        %1721 = vmatpush.msra.mxu0 0.0
        %1722 = vmatpush.msra.mxu0 0.0
        %1723 = vmatpush.msra.mxu0 0.0
        %1724 = vmatpush.msra.mxu0 0.0
        %1725 = vmatpush.msra.mxu0 0.0
        %1726 = vmatpush.msra.mxu0 0.0
        %1727 = vmatpush.msra.mxu0 0.0
        %1728 = vmatpush.msra.mxu0 0.0
        %1729 = vmatpush.msra.mxu0 %v1650
        %1730 = vmatmul.f32.gmra.mxu0 %v1709
        %v1731 = vpop.f32.mrf.mxu0
        %v1732 = vadd.f32 %v1680, %v1731
        %1733 = vmatmul.f32.gmra.mxu0 %v1712
        %v1734 = vpop.f32.mrf.mxu0
        %v1735 = vadd.f32 %v1683, %v1734
        %1736 = vdwg.mxu0
        %1737 = vmatpush.msra.mxu0 0.0
        %1738 = vmatpush.msra.mxu0 0.0
        %1739 = vmatpush.msra.mxu0 0.0
        %1740 = vmatpush.msra.mxu0 0.0
        %1741 = vmatpush.msra.mxu0 0.0
        %1742 = vmatpush.msra.mxu0 0.0
        %1743 = vmatpush.msra.mxu0 0.0
        %1744 = vmatpush.msra.mxu0 0.0
        %1745 = vmatpush.msra.mxu0 0.0
        %1746 = vmatpush.msra.mxu0 0.0
        %1747 = vmatpush.msra.mxu0 0.0
        %1748 = vmatpush.msra.mxu0 0.0
        %1749 = vmatpush.msra.mxu0 0.0
        %1750 = vmatpush.msra.mxu0 0.0
        %1751 = vmatpush.msra.mxu0 0.0
        %1752 = vmatpush.msra.mxu0 %v1651
        %1753 = vmatmul.f32.gmra.mxu0 %v1709
        %v1754 = vpop.f32.mrf.mxu0
        %v1755 = vadd.f32 %v1703, %v1754
        %1756 = vmatmul.f32.gmra.mxu0 %v1712
        %v1757 = vpop.f32.mrf.mxu0
        %v1758 = vadd.f32 %v1706, %v1757
        %1759 = vdwg.mxu0
        %v1760 = vld [vmem:[%s5] sm:$0xff]
        %v1761 = vld [vmem:[%s5 + $0x8] sm:$0xff]
        %1763 = vset.pattern.permute.xlu0 0
        %1764 = vperm.xlu0 %1763, %v1760
        %v1765 = vpop.permute.xlu0 %1764
        %1768 = vset.pattern.permute.xlu0 0
        %1769 = vperm.xlu0 %1768, %v1761
        %v1770 = vpop.permute.xlu0 %1769
        %v1772 = vadd.f32 %v1732, %v1765
        %v1773 = vadd.f32 %v1755, %v1765
        %v1774 = vadd.f32 %v1735, %v1770
        %v1775 = vadd.f32 %v1758, %v1770
        %v1776 = vmax.f32 %v1772, 0.0
        %v1777 = vmax.f32 %v1773, 0.0
        %v1778 = vmax.f32 %v1774, 0.0
        %v1779 = vmax.f32 %v1775, 0.0
        %v1780 = vlaneseq
        %v1781 = vand.u32 %v1780, 127
        %v1782 = vadd.s32 %v1781, 128
        %vm1783 = vcmp.lt.s32.totalorder %v1781, 0
        %v1784 = vsub.s32 0, %v1781
        %v1785 = vsel %vm1783, %v1784, %v1781
        %v1786 = vshrl.u32 %v1785, 4
        %v1787 = vand.u32 %v1785, 15
        %v1788 = vsub.s32 0, %v1787
        %v1789 = vsel %vm1783, %v1788, %v1787
        %vm1790 = vcmp.lt.s32.totalorder %v1782, 0
        %v1791 = vsub.s32 0, %v1782
        %v1792 = vsel %vm1790, %v1791, %v1782
        %v1793 = vshrl.u32 %v1792, 4
        %v1794 = vand.u32 %v1792, 15
        %v1795 = vsub.s32 0, %v1794
        %v1796 = vsel %vm1790, %v1795, %v1794
        %vm1797 = vcmp.ne.s32.totalorder %v1789, 0
        %vm1798 = vcmp.ne.s32.totalorder %v1796, 0
        %vm1799 = vcmp.lt.s32.totalorder %v1789, 0
        %vm1800 = vcmp.lt.s32.totalorder %v1796, 0
        %vm1801 = vmand %vm1799, %vm1797
        %vm1802 = vmand %vm1800, %vm1798
        %v1803 = vadd.s32 %v1789, 16
        %v1804 = vadd.s32 %v1796, 16
        %v1805 = vsel %vm1801, %v1803, %v1789
        %v1806 = vsel %vm1802, %v1804, %v1796
        %v1807 = vld [vmem:[%s6] sm:$0xff]
        %v1808 = vld [vmem:[%s6 + $0x8] sm:$0xff]
        %v1809 = vld [vmem:[%s8] sm:$0xff]
        %v1810 = vld [vmem:[%s8 + $0x8] sm:$0xff]
        %v1811 = vadd.f32 %v1807, %v1809
        %v1812 = vadd.f32 %v1808, %v1810
        %v1813 = vadd.f32 %v1811, 1.0
        %v1814 = vadd.f32 %v1812, 1.0
        %1816 = vset.pattern.permute.xlu0 2
        %1817 = vperm.xlu0 %1816, %v1813
        %v1818 = vpop.permute.xlu0 %1817
        %1821 = vset.pattern.permute.xlu0 2
        %1822 = vperm.xlu0 %1821, %v1814
        %v1823 = vpop.permute.xlu0 %1822
        %v1825 = vmul.f32 %v1776, %v1818
        %v1826 = vmul.f32 %v1777, %v1818
        %v1827 = vmul.f32 %v1778, %v1823
        %v1828 = vmul.f32 %v1779, %v1823
        %v1829 = vld [vmem:[%s7] sm:$0xff]
        %v1830 = vld [vmem:[%s7 + $0x8] sm:$0xff]
        %v1831 = vld [vmem:[%s9] sm:$0xff]
        %v1832 = vld [vmem:[%s9 + $0x8] sm:$0xff]
        %v1833 = vadd.f32 %v1829, %v1831
        %v1834 = vadd.f32 %v1830, %v1832
        %1836 = vset.pattern.permute.xlu0 0
        %1837 = vperm.xlu0 %1836, %v1833
        %v1838 = vpop.permute.xlu0 %1837
        %1841 = vset.pattern.permute.xlu0 0
        %1842 = vperm.xlu0 %1841, %v1834
        %v1843 = vpop.permute.xlu0 %1842
        %v1845 = vadd.f32 %v1825, %v1838
        %v1846 = vadd.f32 %v1826, %v1838
        %v1847 = vadd.f32 %v1827, %v1843
        %v1848 = vadd.f32 %v1828, %v1843
        %1849 = vrot.lane.b32.xlu0 %v1776, 2
        %v1850 = vpop.permute.xlu0 %1849
        %1851 = vrot.lane.b32.xlu0 %v1778, 2
        %v1852 = vpop.permute.xlu0 %1851
        %1853 = vrot.lane.b32.xlu0 %v1777, 2
        %v1854 = vpop.permute.xlu0 %1853
        %1855 = vrot.lane.b32.xlu0 %v1779, 2
        %v1856 = vpop.permute.xlu0 %1855
        %vm1857 = vcmp.lt.s32.totalorder %v1781, 2
        %v1858 = vsel %vm1857, %v1850, %v1854
        %v1859 = vsel %vm1857, %v1852, %v1856
        %v1860 = vsel %vm1857, %v1854, %v1850
        %v1861 = vsel %vm1857, %v1856, %v1852
        %vm1862 = vcmp.ge.s32.totalorder %v1805, 2
        %vm1863 = vcmp.ge.s32.totalorder %v1806, 2
        %v1864 = vsel %vm1862, 1, 0
        %v1865 = vsel %vm1863, 1, 0
        %vm1866 = vcmp.eq.s32.totalorder %v1864, 1
        %vm1867 = vcmp.eq.s32.totalorder %v1865, 1
        %v1868 = vsel %vm1866, %v1860, 0.0
        %v1869 = vsel %vm1867, %v1858, 0.0
        %v1870 = vsel %vm1866, %v1861, 0.0
        %v1871 = vsel %vm1867, %v1859, 0.0
        %1873 = vset.pattern.permute.xlu0 0
        %1874 = vperm.xlu0 %1873, %v1807
        %v1875 = vpop.permute.xlu0 %1874
        %1878 = vset.pattern.permute.xlu0 0
        %1879 = vperm.xlu0 %1878, %v1808
        %v1880 = vpop.permute.xlu0 %1879
        %v1882 = vmul.f32 %v1868, %v1875
        %v1883 = vmul.f32 %v1869, %v1875
        %v1884 = vmul.f32 %v1870, %v1880
        %v1885 = vmul.f32 %v1871, %v1880
        %v1886 = vadd.f32 %v1845, %v1882
        %v1887 = vadd.f32 %v1846, %v1883
        %v1888 = vadd.f32 %v1847, %v1884
        %v1889 = vadd.f32 %v1848, %v1885
        %1890 = vrot.lane.b32.xlu0 %v1776, 32
        %v1891 = vpop.permute.xlu0 %1890
        %1892 = vrot.lane.b32.xlu0 %v1778, 32
        %v1893 = vpop.permute.xlu0 %1892
        %1894 = vrot.lane.b32.xlu0 %v1777, 32
        %v1895 = vpop.permute.xlu0 %1894
        %1896 = vrot.lane.b32.xlu0 %v1779, 32
        %v1897 = vpop.permute.xlu0 %1896
        %vm1898 = vcmp.lt.s32.totalorder %v1781, 32
        %v1899 = vsel %vm1898, %v1891, %v1895
        %v1900 = vsel %vm1898, %v1893, %v1897
        %v1901 = vsel %vm1898, %v1895, %v1891
        %v1902 = vsel %vm1898, %v1897, %v1893
        %vm1903 = vcmp.ge.s32.totalorder %v1781, 32
        %vm1904 = vcmp.ge.s32.totalorder %v1782, 32
        %v1905 = vsel %vm1903, 1, 0
        %v1906 = vsel %vm1904, 1, 0
        %vm1907 = vcmp.eq.s32.totalorder %v1905, 1
        %vm1908 = vcmp.eq.s32.totalorder %v1906, 1
        %v1909 = vsel %vm1907, %v1901, 0.0
        %v1910 = vsel %vm1908, %v1899, 0.0
        %v1911 = vsel %vm1907, %v1902, 0.0
        %v1912 = vsel %vm1908, %v1900, 0.0
        %1914 = vset.pattern.permute.xlu0 0
        %1915 = vperm.xlu0 %1914, %v1809
        %v1916 = vpop.permute.xlu0 %1915
        %1919 = vset.pattern.permute.xlu0 0
        %1920 = vperm.xlu0 %1919, %v1810
        %v1921 = vpop.permute.xlu0 %1920
        %v1923 = vmul.f32 %v1909, %v1916
        %v1924 = vmul.f32 %v1910, %v1916
        %v1925 = vmul.f32 %v1911, %v1921
        %v1926 = vmul.f32 %v1912, %v1921
        %v1927 = vadd.f32 %v1886, %v1923
        %v1928 = vadd.f32 %v1887, %v1924
        %v1929 = vadd.f32 %v1888, %v1925
        %v1930 = vadd.f32 %v1889, %v1926
        %1931 = vrot.lane.b32.xlu0 %v1776, 1
        %v1932 = vpop.permute.xlu0 %1931
        %1933 = vrot.lane.b32.xlu0 %v1778, 1
        %v1934 = vpop.permute.xlu0 %1933
        %1935 = vrot.lane.b32.xlu0 %v1777, 1
        %v1936 = vpop.permute.xlu0 %1935
        %1937 = vrot.lane.b32.xlu0 %v1779, 1
        %v1938 = vpop.permute.xlu0 %1937
        %vm1939 = vcmp.lt.s32.totalorder %v1781, 1
        %v1940 = vsel %vm1939, %v1932, %v1936
        %v1941 = vsel %vm1939, %v1934, %v1938
        %v1942 = vsel %vm1939, %v1936, %v1932
        %v1943 = vsel %vm1939, %v1938, %v1934
        %vm1944 = vcmp.ge.s32.totalorder %v1805, 1
        %vm1945 = vcmp.ge.s32.totalorder %v1806, 1
        %v1946 = vsel %vm1944, 1, 0
        %v1947 = vsel %vm1945, 1, 0
        %vm1948 = vcmp.eq.s32.totalorder %v1946, 1
        %vm1949 = vcmp.eq.s32.totalorder %v1947, 1
        %v1950 = vsel %vm1948, %v1942, 0.0
        %v1951 = vsel %vm1949, %v1940, 0.0
        %v1952 = vsel %vm1948, %v1943, 0.0
        %v1953 = vsel %vm1949, %v1941, 0.0
        %1954 = vset.pattern.permute.xlu0 1
        %1955 = vperm.xlu0 %1954, %v1807
        %v1956 = vpop.permute.xlu0 %1955
        %1958 = vset.pattern.permute.xlu0 1
        %1959 = vperm.xlu0 %1958, %v1808
        %v1960 = vpop.permute.xlu0 %1959
        %v1962 = vmul.f32 %v1950, %v1956
        %v1963 = vmul.f32 %v1951, %v1956
        %v1964 = vmul.f32 %v1952, %v1960
        %v1965 = vmul.f32 %v1953, %v1960
        %v1966 = vadd.f32 %v1927, %v1962
        %v1967 = vadd.f32 %v1928, %v1963
        %v1968 = vadd.f32 %v1929, %v1964
        %v1969 = vadd.f32 %v1930, %v1965
        %1970 = vrot.lane.b32.xlu0 %v1776, 16
        %v1971 = vpop.permute.xlu0 %1970
        %1972 = vrot.lane.b32.xlu0 %v1778, 16
        %v1973 = vpop.permute.xlu0 %1972
        %1974 = vrot.lane.b32.xlu0 %v1777, 16
        %v1975 = vpop.permute.xlu0 %1974
        %1976 = vrot.lane.b32.xlu0 %v1779, 16
        %v1977 = vpop.permute.xlu0 %1976
        %vm1978 = vcmp.lt.s32.totalorder %v1781, 16
        %v1979 = vsel %vm1978, %v1971, %v1975
        %v1980 = vsel %vm1978, %v1973, %v1977
        %v1981 = vsel %vm1978, %v1975, %v1971
        %v1982 = vsel %vm1978, %v1977, %v1973
        %vm1983 = vcmp.ge.s32.totalorder %v1781, 16
        %vm1984 = vcmp.ge.s32.totalorder %v1782, 16
        %v1985 = vsel %vm1983, 1, 0
        %v1986 = vsel %vm1984, 1, 0
        %vm1987 = vcmp.eq.s32.totalorder %v1985, 1
        %vm1988 = vcmp.eq.s32.totalorder %v1986, 1
        %v1989 = vsel %vm1987, %v1981, 0.0
        %v1990 = vsel %vm1988, %v1979, 0.0
        %v1991 = vsel %vm1987, %v1982, 0.0
        %v1992 = vsel %vm1988, %v1980, 0.0
        %1993 = vset.pattern.permute.xlu0 1
        %1994 = vperm.xlu0 %1993, %v1809
        %v1995 = vpop.permute.xlu0 %1994
        %1997 = vset.pattern.permute.xlu0 1
        %1998 = vperm.xlu0 %1997, %v1810
        %v1999 = vpop.permute.xlu0 %1998
        %v2001 = vmul.f32 %v1989, %v1995
        %v2002 = vmul.f32 %v1990, %v1995
        %v2003 = vmul.f32 %v1991, %v1999
        %v2004 = vmul.f32 %v1992, %v1999
        %v2005 = vadd.f32 %v1966, %v2001
        %v2006 = vadd.f32 %v1967, %v2002
        %v2007 = vadd.f32 %v1968, %v2003
        %v2008 = vadd.f32 %v1969, %v2004
        %2009 = vrot.lane.b32.xlu0 %v1776, 127
        %v2010 = vpop.permute.xlu0 %2009
        %2011 = vrot.lane.b32.xlu0 %v1778, 127
        %v2012 = vpop.permute.xlu0 %2011
        %2013 = vrot.lane.b32.xlu0 %v1777, 127
        %v2014 = vpop.permute.xlu0 %2013
        %2015 = vrot.lane.b32.xlu0 %v1779, 127
        %v2016 = vpop.permute.xlu0 %2015
        %vm2017 = vcmp.lt.s32.totalorder %v1781, 127
        %v2018 = vsel %vm2017, %v2010, %v2014
        %v2019 = vsel %vm2017, %v2012, %v2016
        %v2020 = vsel %vm2017, %v2014, %v2010
        %v2021 = vsel %vm2017, %v2016, %v2012
        %vm2022 = vcmp.lt.s32.totalorder %v1805, 15
        %vm2023 = vcmp.lt.s32.totalorder %v1806, 15
        %v2024 = vsel %vm2022, 1, 0
        %v2025 = vsel %vm2023, 1, 0
        %vm2026 = vcmp.eq.s32.totalorder %v2024, 1
        %vm2027 = vcmp.eq.s32.totalorder %v2025, 1
        %v2028 = vsel %vm2026, %v2018, 0.0
        %v2029 = vsel %vm2027, %v2020, 0.0
        %v2030 = vsel %vm2026, %v2019, 0.0
        %v2031 = vsel %vm2027, %v2021, 0.0
        %2032 = vset.pattern.permute.xlu0 3
        %2033 = vperm.xlu0 %2032, %v1807
        %v2034 = vpop.permute.xlu0 %2033
        %2036 = vset.pattern.permute.xlu0 3
        %2037 = vperm.xlu0 %2036, %v1808
        %v2038 = vpop.permute.xlu0 %2037
        %v2040 = vmul.f32 %v2028, %v2034
        %v2041 = vmul.f32 %v2029, %v2034
        %v2042 = vmul.f32 %v2030, %v2038
        %v2043 = vmul.f32 %v2031, %v2038
        %v2044 = vadd.f32 %v2005, %v2040
        %v2045 = vadd.f32 %v2006, %v2041
        %v2046 = vadd.f32 %v2007, %v2042
        %v2047 = vadd.f32 %v2008, %v2043
        %2048 = vrot.lane.b32.xlu0 %v1776, 112
        %v2049 = vpop.permute.xlu0 %2048
        %2050 = vrot.lane.b32.xlu0 %v1778, 112
        %v2051 = vpop.permute.xlu0 %2050
        %2052 = vrot.lane.b32.xlu0 %v1777, 112
        %v2053 = vpop.permute.xlu0 %2052
        %2054 = vrot.lane.b32.xlu0 %v1779, 112
        %v2055 = vpop.permute.xlu0 %2054
        %vm2056 = vcmp.lt.s32.totalorder %v1781, 112
        %v2057 = vsel %vm2056, %v2049, %v2053
        %v2058 = vsel %vm2056, %v2051, %v2055
        %v2059 = vsel %vm2056, %v2053, %v2049
        %v2060 = vsel %vm2056, %v2055, %v2051
        %vm2061 = vcmp.lt.s32.totalorder %v1781, 240
        %vm2062 = vcmp.lt.s32.totalorder %v1782, 240
        %v2063 = vsel %vm2061, 1, 0
        %v2064 = vsel %vm2062, 1, 0
        %vm2065 = vcmp.eq.s32.totalorder %v2063, 1
        %vm2066 = vcmp.eq.s32.totalorder %v2064, 1
        %v2067 = vsel %vm2065, %v2057, 0.0
        %v2068 = vsel %vm2066, %v2059, 0.0
        %v2069 = vsel %vm2065, %v2058, 0.0
        %v2070 = vsel %vm2066, %v2060, 0.0
        %2071 = vset.pattern.permute.xlu0 3
        %2072 = vperm.xlu0 %2071, %v1809
        %v2073 = vpop.permute.xlu0 %2072
        %2075 = vset.pattern.permute.xlu0 3
        %2076 = vperm.xlu0 %2075, %v1810
        %v2077 = vpop.permute.xlu0 %2076
        %v2079 = vmul.f32 %v2067, %v2073
        %v2080 = vmul.f32 %v2068, %v2073
        %v2081 = vmul.f32 %v2069, %v2077
        %v2082 = vmul.f32 %v2070, %v2077
        %v2083 = vadd.f32 %v2044, %v2079
        %v2084 = vadd.f32 %v2045, %v2080
        %v2085 = vadd.f32 %v2046, %v2081
        %v2086 = vadd.f32 %v2047, %v2082
        %2087 = vrot.lane.b32.xlu0 %v1776, 126
        %v2088 = vpop.permute.xlu0 %2087
        %2089 = vrot.lane.b32.xlu0 %v1778, 126
        %v2090 = vpop.permute.xlu0 %2089
        %2091 = vrot.lane.b32.xlu0 %v1777, 126
        %v2092 = vpop.permute.xlu0 %2091
        %2093 = vrot.lane.b32.xlu0 %v1779, 126
        %v2094 = vpop.permute.xlu0 %2093
        %vm2095 = vcmp.lt.s32.totalorder %v1781, 126
        %v2096 = vsel %vm2095, %v2088, %v2092
        %v2097 = vsel %vm2095, %v2090, %v2094
        %v2098 = vsel %vm2095, %v2092, %v2088
        %v2099 = vsel %vm2095, %v2094, %v2090
        %vm2100 = vcmp.lt.s32.totalorder %v1805, 14
        %vm2101 = vcmp.lt.s32.totalorder %v1806, 14
        %v2102 = vsel %vm2100, 1, 0
        %v2103 = vsel %vm2101, 1, 0
        %vm2104 = vcmp.eq.s32.totalorder %v2102, 1
        %vm2105 = vcmp.eq.s32.totalorder %v2103, 1
        %v2106 = vsel %vm2104, %v2096, 0.0
        %v2107 = vsel %vm2105, %v2098, 0.0
        %v2108 = vsel %vm2104, %v2097, 0.0
        %v2109 = vsel %vm2105, %v2099, 0.0
        %2110 = vset.pattern.permute.xlu0 4
        %2111 = vperm.xlu0 %2110, %v1807
        %v2112 = vpop.permute.xlu0 %2111
        %2114 = vset.pattern.permute.xlu0 4
        %2115 = vperm.xlu0 %2114, %v1808
        %v2116 = vpop.permute.xlu0 %2115
        %v2118 = vmul.f32 %v2106, %v2112
        %v2119 = vmul.f32 %v2107, %v2112
        %v2120 = vmul.f32 %v2108, %v2116
        %v2121 = vmul.f32 %v2109, %v2116
        %v2122 = vadd.f32 %v2083, %v2118
        %v2123 = vadd.f32 %v2084, %v2119
        %v2124 = vadd.f32 %v2085, %v2120
        %v2125 = vadd.f32 %v2086, %v2121
        %2126 = vrot.lane.b32.xlu0 %v1776, 96
        %v2127 = vpop.permute.xlu0 %2126
        %2128 = vrot.lane.b32.xlu0 %v1778, 96
        %v2129 = vpop.permute.xlu0 %2128
        %2130 = vrot.lane.b32.xlu0 %v1777, 96
        %v2131 = vpop.permute.xlu0 %2130
        %2132 = vrot.lane.b32.xlu0 %v1779, 96
        %v2133 = vpop.permute.xlu0 %2132
        %vm2134 = vcmp.lt.s32.totalorder %v1781, 96
        %v2135 = vsel %vm2134, %v2127, %v2131
        %v2136 = vsel %vm2134, %v2129, %v2133
        %v2137 = vsel %vm2134, %v2131, %v2127
        %v2138 = vsel %vm2134, %v2133, %v2129
        %vm2139 = vcmp.lt.s32.totalorder %v1781, 224
        %vm2140 = vcmp.lt.s32.totalorder %v1782, 224
        %v2141 = vsel %vm2139, 1, 0
        %v2142 = vsel %vm2140, 1, 0
        %vm2143 = vcmp.eq.s32.totalorder %v2141, 1
        %vm2144 = vcmp.eq.s32.totalorder %v2142, 1
        %v2145 = vsel %vm2143, %v2135, 0.0
        %v2146 = vsel %vm2144, %v2137, 0.0
        %v2147 = vsel %vm2143, %v2136, 0.0
        %v2148 = vsel %vm2144, %v2138, 0.0
        %2149 = vset.pattern.permute.xlu0 4
        %2150 = vperm.xlu0 %2149, %v1809
        %v2151 = vpop.permute.xlu0 %2150
        %2153 = vset.pattern.permute.xlu0 4
        %2154 = vperm.xlu0 %2153, %v1810
        %v2155 = vpop.permute.xlu0 %2154
        %v2157 = vmul.f32 %v2145, %v2151
        %v2158 = vmul.f32 %v2146, %v2151
        %v2159 = vmul.f32 %v2147, %v2155
        %v2160 = vmul.f32 %v2148, %v2155
        %v2161 = vadd.f32 %v2122, %v2157
        %v2162 = vadd.f32 %v2123, %v2158
        %v2163 = vadd.f32 %v2124, %v2159
        %v2164 = vadd.f32 %v2125, %v2160
        %v2165 = vmax.f32 %v2161, 0.0
        %v2166 = vmax.f32 %v2162, 0.0
        %v2167 = vmax.f32 %v2163, 0.0
        %v2168 = vmax.f32 %v2164, 0.0
        %v2169 = vld [vmem:[%s10] sm:$0xff]
        %v2170 = vld [vmem:[%s10 + $0x8] sm:$0xff]
        %v2171 = vld [vmem:[%s10 + $0x10] sm:$0xff]
        %v2172 = vld [vmem:[%s10 + $0x18] sm:$0xff]
        %v2173 = vld [vmem:[%s11] sm:$0xff]
        %v2174 = vld [vmem:[%s11 + $0x8] sm:$0xff]
        %v2175 = vld [vmem:[%s11 + $0x10] sm:$0xff]
        %v2176 = vld [vmem:[%s11 + $0x18] sm:$0xff]
        %2178 = vset.pattern.permute.xlu0 0
        %2179 = vperm.xlu0 %2178, %v2173
        %v2180 = vpop.permute.xlu0 %2179
        %2183 = vset.pattern.permute.xlu0 0
        %2184 = vperm.xlu0 %2183, %v2174
        %v2185 = vpop.permute.xlu0 %2184
        %2188 = vset.pattern.permute.xlu0 0
        %2189 = vperm.xlu0 %2188, %v2175
        %v2190 = vpop.permute.xlu0 %2189
        %2193 = vset.pattern.permute.xlu0 0
        %2194 = vperm.xlu0 %2193, %v2176
        %v2195 = vpop.permute.xlu0 %2194
        %v2198 = vsel %vm637, %v2169, 0
        %v2201 = vsel %vm637, %v2170, 0
        %v2204 = vsel %vm637, %v2171, 0
        %v2207 = vsel %vm637, %v2172, 0
        %2209 = vmatpush.msra.mxu0 0.0
        %2210 = vmatpush.msra.mxu0 0.0
        %2211 = vmatpush.msra.mxu0 0.0
        %2212 = vmatpush.msra.mxu0 0.0
        %2213 = vmatpush.msra.mxu0 0.0
        %2214 = vmatpush.msra.mxu0 0.0
        %2215 = vmatpush.msra.mxu0 0.0
        %2216 = vmatpush.msra.mxu0 0.0
        %2217 = vmatpush.msra.mxu0 0.0
        %2218 = vmatpush.msra.mxu0 0.0
        %2219 = vmatpush.msra.mxu0 0.0
        %2220 = vmatpush.msra.mxu0 0.0
        %2221 = vmatpush.msra.mxu0 0.0
        %2222 = vmatpush.msra.mxu0 0.0
        %2223 = vmatpush.msra.mxu0 %v2167
        %2224 = vmatpush.msra.mxu0 %v2165
        %2225 = vmatmul.f32.gmra.mxu0 %v2198
        %v2226 = vpop.f32.mrf.mxu0
        %v2227 = vadd.f32 %v2180, %v2226
        %2228 = vmatmul.f32.gmra.mxu0 %v2201
        %v2229 = vpop.f32.mrf.mxu0
        %v2230 = vadd.f32 %v2185, %v2229
        %2231 = vmatmul.f32.gmra.mxu0 %v2204
        %v2232 = vpop.f32.mrf.mxu0
        %v2233 = vadd.f32 %v2190, %v2232
        %2234 = vmatmul.f32.gmra.mxu0 %v2207
        %v2235 = vpop.f32.mrf.mxu0
        %v2236 = vadd.f32 %v2195, %v2235
        %2237 = vdwg.mxu0
        %2238 = vmatpush.msra.mxu0 0.0
        %2239 = vmatpush.msra.mxu0 0.0
        %2240 = vmatpush.msra.mxu0 0.0
        %2241 = vmatpush.msra.mxu0 0.0
        %2242 = vmatpush.msra.mxu0 0.0
        %2243 = vmatpush.msra.mxu0 0.0
        %2244 = vmatpush.msra.mxu0 0.0
        %2245 = vmatpush.msra.mxu0 0.0
        %2246 = vmatpush.msra.mxu0 0.0
        %2247 = vmatpush.msra.mxu0 0.0
        %2248 = vmatpush.msra.mxu0 0.0
        %2249 = vmatpush.msra.mxu0 0.0
        %2250 = vmatpush.msra.mxu0 0.0
        %2251 = vmatpush.msra.mxu0 0.0
        %2252 = vmatpush.msra.mxu0 %v2168
        %2253 = vmatpush.msra.mxu0 %v2166
        %2254 = vmatmul.f32.gmra.mxu0 %v2198
        %v2255 = vpop.f32.mrf.mxu0
        %v2256 = vadd.f32 %v2180, %v2255
        %2257 = vmatmul.f32.gmra.mxu0 %v2201
        %v2258 = vpop.f32.mrf.mxu0
        %v2259 = vadd.f32 %v2185, %v2258
        %2260 = vmatmul.f32.gmra.mxu0 %v2204
        %v2261 = vpop.f32.mrf.mxu0
        %v2262 = vadd.f32 %v2190, %v2261
        %2263 = vmatmul.f32.gmra.mxu0 %v2207
        %v2264 = vpop.f32.mrf.mxu0
        %v2265 = vadd.f32 %v2195, %v2264
        %2266 = vdwg.mxu0
        %v2267 = vadd.f32 %v2227, %v2256
        %2268 = vadd.xlane.f32.xlu0 %v2267
        %v2269 = vpop.xlane.xlu0 %2268
        %v2270 = vadd.f32 %v2230, %v2259
        %2271 = vadd.xlane.f32.xlu0 %v2270
        %v2272 = vpop.xlane.xlu0 %2271
        %v2273 = vadd.f32 %v2233, %v2262
        %2274 = vadd.xlane.f32.xlu0 %v2273
        %v2275 = vpop.xlane.xlu0 %2274
        %v2276 = vadd.f32 %v2236, %v2265
        %2277 = vadd.xlane.f32.xlu0 %v2276
        %v2278 = vpop.xlane.xlu0 %2277
        %v2279 = vrcp.pop 256.0
        %v2280 = vmul.f32 256.0, %v2279
        %v2281 = vsub.f32 1.0, %v2280
        %v2282 = vmul.f32 %v2279, %v2281
        %v2283 = vadd.f32 %v2279, %v2282
        %vm2284 = vweird.f32 %v2279
        %v2285 = vsel %vm2284, %v2279, %v2283
        %v2286 = vmul.f32 %v2269, %v2285
        %v2287 = vmul.f32 %v2272, %v2285
        %v2288 = vmul.f32 %v2275, %v2285
        %v2289 = vmul.f32 %v2278, %v2285
        %v2290 = vld [vmem:[%s12] sm:$0xff]
        %v2291 = vld [vmem:[%s12 + $0x8] sm:$0xff]
        %v2292 = vld [vmem:[%s12 + $0x10] sm:$0xff]
        %v2293 = vld [vmem:[%s12 + $0x18] sm:$0xff]
        %v2294 = vmul.f32 %v2290, %v2286
        %v2295 = vmul.f32 %v2291, %v2287
        %v2296 = vmul.f32 %v2292, %v2288
        %v2297 = vmul.f32 %v2293, %v2289
        %vm2298 = vcmask 15360
        %v2299 = vsel %vm2298, %v2294, 0.0
        %v2300 = vsel %vm2298, %v2295, 0.0
        %v2301 = vadd.f32 %v2299, %v2300
        %v2302 = vsel %vm2298, %v2296, 0.0
        %v2303 = vadd.f32 %v2301, %v2302
        %v2304 = vsel %vm2298, %v2297, 0.0
        %v2305 = vadd.f32 %v2303, %v2304
        %v2306 = vrot.slane %v2305, 4
        %v2307 = vadd.f32 %v2305, %v2306
        %v2308 = vrot.slane %v2307, 2
        %v2309 = vadd.f32 %v2307, %v2308
        %v2310 = vrot.slane %v2309, 1
        %v2311 = vadd.f32 %v2309, %v2310
        %v2312 = vmax.f32 %v2311, 0.0
        %v2313 = vld [vmem:[%s13] sm:$0xff]
        %v2314 = vld [vmem:[%s13 + $0x8] sm:$0xff]
        %v2315 = vld [vmem:[%s13 + $0x10] sm:$0xff]
        %v2316 = vld [vmem:[%s13 + $0x18] sm:$0xff]
        %v2317 = vmul.f32 %v2313, %v2312
        %v2318 = vmul.f32 %v2314, %v2312
        %v2319 = vmul.f32 %v2315, %v2312
        %v2320 = vmul.f32 %v2316, %v2312
        %v2321 = vsel %vm2298, %v2317, 0.0
        %2322 = vadd.xlane.f32.xlu0 %v2321
        %v2323 = vpop.xlane.xlu0 %2322
        %v2324 = vsel %vm2298, %v2318, 0.0
        %2325 = vadd.xlane.f32.xlu0 %v2324
        %v2326 = vpop.xlane.xlu0 %2325
        %v2327 = vsel %vm2298, %v2319, 0.0
        %2328 = vadd.xlane.f32.xlu0 %v2327
        %v2329 = vpop.xlane.xlu0 %2328
        %v2330 = vsel %vm2298, %v2320, 0.0
        %2331 = vadd.xlane.f32.xlu0 %v2330
        %v2332 = vpop.xlane.xlu0 %2331
        %v2333 = vxor.u32 %v2323, 2147483648
        %v2334 = vxor.u32 %v2326, 2147483648
        %v2335 = vxor.u32 %v2329, 2147483648
        %v2336 = vxor.u32 %v2332, 2147483648
        %v2337 = vmul.f32 %v2333, 1.442695
        %v2338 = vpow.pop %v2337
        %v2339 = vmul.f32 %v2334, 1.442695
        %v2340 = vpow.pop %v2339
        %v2341 = vmul.f32 %v2335, 1.442695
        %v2342 = vpow.pop %v2341
        %v2343 = vmul.f32 %v2336, 1.442695
        %v2344 = vpow.pop %v2343
        %v2345 = vadd.f32 %v2338, 1.0
        %v2346 = vadd.f32 %v2340, 1.0
        %v2347 = vadd.f32 %v2342, 1.0
        %v2348 = vadd.f32 %v2344, 1.0
        %v2349 = vrcp.pop %v2345
        %v2350 = vmul.f32 %v2345, %v2349
        %v2351 = vsub.f32 1.0, %v2350
        %v2352 = vmul.f32 %v2349, %v2351
        %v2353 = vadd.f32 %v2349, %v2352
        %vm2354 = vweird.f32 %v2345
        %vm2355 = vweird.f32 %v2349
        %vm2356 = vmor %vm2354, %vm2355
        %v2357 = vsel %vm2356, %v2349, %v2353
        %v2358 = vand.u32 2147483647, %v2345
        %vm2359 = vcmp.eq.f32.partialorder %v2358, 8.507059e+37
        %v2360 = vand.u32 %v2345, 2147483648
        %v2361 = vor.u32 1.1754944e-38, %v2360
        %v2362 = vsel %vm2359, %v2361, %v2357
        %v2363 = vmul.f32 1.0, %v2362
        %v2364 = vrcp.pop %v2346
        %v2365 = vmul.f32 %v2346, %v2364
        %v2366 = vsub.f32 1.0, %v2365
        %v2367 = vmul.f32 %v2364, %v2366
        %v2368 = vadd.f32 %v2364, %v2367
        %vm2369 = vweird.f32 %v2346
        %vm2370 = vweird.f32 %v2364
        %vm2371 = vmor %vm2369, %vm2370
        %v2372 = vsel %vm2371, %v2364, %v2368
        %v2373 = vand.u32 2147483647, %v2346
        %vm2374 = vcmp.eq.f32.partialorder %v2373, 8.507059e+37
        %v2375 = vand.u32 %v2346, 2147483648
        %v2376 = vor.u32 1.1754944e-38, %v2375
        %v2377 = vsel %vm2374, %v2376, %v2372
        %v2378 = vmul.f32 1.0, %v2377
        %v2379 = vrcp.pop %v2347
        %v2380 = vmul.f32 %v2347, %v2379
        %v2381 = vsub.f32 1.0, %v2380
        %v2382 = vmul.f32 %v2379, %v2381
        %v2383 = vadd.f32 %v2379, %v2382
        %vm2384 = vweird.f32 %v2347
        %vm2385 = vweird.f32 %v2379
        %vm2386 = vmor %vm2384, %vm2385
        %v2387 = vsel %vm2386, %v2379, %v2383
        %v2388 = vand.u32 2147483647, %v2347
        %vm2389 = vcmp.eq.f32.partialorder %v2388, 8.507059e+37
        %v2390 = vand.u32 %v2347, 2147483648
        %v2391 = vor.u32 1.1754944e-38, %v2390
        %v2392 = vsel %vm2389, %v2391, %v2387
        %v2393 = vmul.f32 1.0, %v2392
        %v2394 = vrcp.pop %v2348
        %v2395 = vmul.f32 %v2348, %v2394
        %v2396 = vsub.f32 1.0, %v2395
        %v2397 = vmul.f32 %v2394, %v2396
        %v2398 = vadd.f32 %v2394, %v2397
        %vm2399 = vweird.f32 %v2348
        %vm2400 = vweird.f32 %v2394
        %vm2401 = vmor %vm2399, %vm2400
        %v2402 = vsel %vm2401, %v2394, %v2398
        %v2403 = vand.u32 2147483647, %v2348
        %vm2404 = vcmp.eq.f32.partialorder %v2403, 8.507059e+37
        %v2405 = vand.u32 %v2348, 2147483648
        %v2406 = vor.u32 1.1754944e-38, %v2405
        %v2407 = vsel %vm2404, %v2406, %v2402
        %v2408 = vmul.f32 1.0, %v2407
        %v2409 = vmul.f32 %v2227, %v2363
        %v2410 = vmul.f32 %v2256, %v2363
        %v2411 = vmul.f32 %v2230, %v2378
        %v2412 = vmul.f32 %v2259, %v2378
        %v2413 = vmul.f32 %v2233, %v2393
        %v2414 = vmul.f32 %v2262, %v2393
        %v2415 = vmul.f32 %v2236, %v2408
        %v2416 = vmul.f32 %v2265, %v2408
        %v2417 = vmax.f32 %v2409, 0.0
        %v2418 = vmax.f32 %v2410, 0.0
        %v2419 = vmax.f32 %v2411, 0.0
        %v2420 = vmax.f32 %v2412, 0.0
        %v2421 = vmax.f32 %v2413, 0.0
        %v2422 = vmax.f32 %v2414, 0.0
        %v2423 = vmax.f32 %v2415, 0.0
        %v2424 = vmax.f32 %v2416, 0.0
        %v2425 = vld [vmem:[%s14] sm:$0xff]
        %v2426 = vld [vmem:[%s14 + $0x8] sm:$0xff]
        %v2427 = vld [vmem:[%s14 + $0x10] sm:$0xff]
        %v2428 = vld [vmem:[%s14 + $0x18] sm:$0xff]
        %v2429 = vld [vmem:[%s15] sm:$0xff]
        %v2430 = vld [vmem:[%s15 + $0x8] sm:$0xff]
        %v2431 = vld [vmem:[%s15 + $0x10] sm:$0xff]
        %v2432 = vld [vmem:[%s15 + $0x18] sm:$0xff]
        %2434 = vset.pattern.permute.xlu0 0
        %2435 = vperm.xlu0 %2434, %v2429
        %v2436 = vpop.permute.xlu0 %2435
        %2439 = vset.pattern.permute.xlu0 0
        %2440 = vperm.xlu0 %2439, %v2430
        %v2441 = vpop.permute.xlu0 %2440
        %2444 = vset.pattern.permute.xlu0 0
        %2445 = vperm.xlu0 %2444, %v2431
        %v2446 = vpop.permute.xlu0 %2445
        %2449 = vset.pattern.permute.xlu0 0
        %2450 = vperm.xlu0 %2449, %v2432
        %v2451 = vpop.permute.xlu0 %2450
        %vm2453 = vcmask 261120
        %v2455 = vsel %vm2453, %v2425, 0
        %v2458 = vsel %vm2453, %v2426, 0
        %v2461 = vsel %vm2453, %v2427, 0
        %v2464 = vsel %vm2453, %v2428, 0
        %2466 = vmatpush.msra.mxu0 0.0
        %2467 = vmatpush.msra.mxu0 0.0
        %2468 = vmatpush.msra.mxu0 0.0
        %2469 = vmatpush.msra.mxu0 0.0
        %2470 = vmatpush.msra.mxu0 0.0
        %2471 = vmatpush.msra.mxu0 0.0
        %2472 = vmatpush.msra.mxu0 0.0
        %2473 = vmatpush.msra.mxu0 0.0
        %2474 = vmatpush.msra.mxu0 0.0
        %2475 = vmatpush.msra.mxu0 0.0
        %2476 = vmatpush.msra.mxu0 0.0
        %2477 = vmatpush.msra.mxu0 0.0
        %2478 = vmatpush.msra.mxu0 %v2423
        %2479 = vmatpush.msra.mxu0 %v2421
        %2480 = vmatpush.msra.mxu0 %v2419
        %2481 = vmatpush.msra.mxu0 %v2417
        %2482 = vmatmul.f32.gmra.mxu0 %v2455
        %v2483 = vpop.f32.mrf.mxu0
        %v2484 = vadd.f32 %v2436, %v2483
        %2485 = vmatmul.f32.gmra.mxu0 %v2458
        %v2486 = vpop.f32.mrf.mxu0
        %v2487 = vadd.f32 %v2441, %v2486
        %2488 = vmatmul.f32.gmra.mxu0 %v2461
        %v2489 = vpop.f32.mrf.mxu0
        %v2490 = vadd.f32 %v2446, %v2489
        %2491 = vmatmul.f32.gmra.mxu0 %v2464
        %v2492 = vpop.f32.mrf.mxu0
        %v2493 = vadd.f32 %v2451, %v2492
        %2494 = vdwg.mxu0
        %2495 = vmatpush.msra.mxu0 0.0
        %2496 = vmatpush.msra.mxu0 0.0
        %2497 = vmatpush.msra.mxu0 0.0
        %2498 = vmatpush.msra.mxu0 0.0
        %2499 = vmatpush.msra.mxu0 0.0
        %2500 = vmatpush.msra.mxu0 0.0
        %2501 = vmatpush.msra.mxu0 0.0
        %2502 = vmatpush.msra.mxu0 0.0
        %2503 = vmatpush.msra.mxu0 0.0
        %2504 = vmatpush.msra.mxu0 0.0
        %2505 = vmatpush.msra.mxu0 0.0
        %2506 = vmatpush.msra.mxu0 0.0
        %2507 = vmatpush.msra.mxu0 %v2424
        %2508 = vmatpush.msra.mxu0 %v2422
        %2509 = vmatpush.msra.mxu0 %v2420
        %2510 = vmatpush.msra.mxu0 %v2418
        %2511 = vmatmul.f32.gmra.mxu0 %v2455
        %v2512 = vpop.f32.mrf.mxu0
        %v2513 = vadd.f32 %v2436, %v2512
        %2514 = vmatmul.f32.gmra.mxu0 %v2458
        %v2515 = vpop.f32.mrf.mxu0
        %v2516 = vadd.f32 %v2441, %v2515
        %2517 = vmatmul.f32.gmra.mxu0 %v2461
        %v2518 = vpop.f32.mrf.mxu0
        %v2519 = vadd.f32 %v2446, %v2518
        %2520 = vmatmul.f32.gmra.mxu0 %v2464
        %v2521 = vpop.f32.mrf.mxu0
        %v2522 = vadd.f32 %v2451, %v2521
        %2523 = vdwg.mxu0
        %v2524 = vmax.f32 %v2484, 0.0
        %v2525 = vmax.f32 %v2513, 0.0
        %v2526 = vmax.f32 %v2487, 0.0
        %v2527 = vmax.f32 %v2516, 0.0
        %v2528 = vmax.f32 %v2490, 0.0
        %v2529 = vmax.f32 %v2519, 0.0
        %v2530 = vmax.f32 %v2493, 0.0
        %v2531 = vmax.f32 %v2522, 0.0
        %2532 = vst [vmem:[%s556] sm:$0xff] %v2524
        %2533 = vst [vmem:[%s556 + $0x8] sm:$0xff] %v2525
        %2534 = vst [vmem:[%s556 + $0x10] sm:$0xff] %v2526
        %2535 = vst [vmem:[%s556 + $0x18] sm:$0xff] %v2527
        %2536 = vst [vmem:[%s556 + $0x20] sm:$0xff] %v2528
        %2537 = vst [vmem:[%s556 + $0x28] sm:$0xff] %v2529
        %2538 = vst [vmem:[%s556 + $0x30] sm:$0xff] %v2530
        %2539 = vst [vmem:[%s556 + $0x38] sm:$0xff] %v2531
        %s2540 = sand.u32 %s387, 1
        %s2541 = scalar_lea.sflag [#allocation6], %s2540
        %s2542 = sand.u32 %s387, 1
        %s2543 = smul.addr %s2542, 64
        %s2544 = scalar_lea.vmem [#allocation7], %s2543
        // Predicated region
        $region89: #{tpu_custom_call.1} parent=83 // pred_check
          %p2545 = pneg %p397
        $region90: #{tpu_custom_call.1} parent=83 // pred_check_branch
          %2547 = sbr.rel (%p2545) target = $region92
        $region91: #{tpu_custom_call.1} parent=83 // pred_region
          %2549 = vsyncadd %s2541, 0
          %s2550 = smul.addr %s33, 8
          %s2551 = smul.addr %s2550, 8
          %s2552 = scalar_lea.hbm %s16, %s2551
          %s2553 = sshll.u32 %s2544, 4
          %s2554 = int_to_ptr.vmem [resolvable:$true] %s2553
          %s2555 = sshll.u32 %s2552, 4
          %s2556 = int_to_ptr.hbm [resolvable:$true] %s2555
          %2561 = dma.vmem_to_hbm [thread:$0]  %s2554, 1024, %s2556, %s2541, 256, 256, 16
        $region92: #{tpu_custom_call.1} parent=83 // pred_fallthru
          _
      $region84: #{tpu_custom_call.1} parent=5 // pred_fallthru
        _
      %p2562 = scmp.le.s32.totalorder 2, %s28
      // Predicated region
      $region93: #{tpu_custom_call.1} parent=5 // pred_check
        %p2563 = pneg %p2562
      $region94: #{tpu_custom_call.1} parent=5 // pred_check_branch
        %2565 = sbr.rel (%p2563) target = $region96
      $region95: #{tpu_custom_call.1} parent=5 // pred_region
        %s2566 = ssub.s32 %s28, 2
        // Predicated region
        $region97: #{tpu_custom_call.1} parent=95 // pred_check
          %p2567 = pneg %p403
        $region98: #{tpu_custom_call.1} parent=95 // pred_check_branch
          %2569 = sbr.rel (%p2567) target = $region100
        $region99: #{tpu_custom_call.1} parent=95 // pred_region
          %s2570 = sand.u32 %s388, 1
          %s2571 = scalar_lea.sflag [#allocation6], %s2570
          %s2572 = sand.u32 %s388, 1
          %s2573 = smul.addr %s2572, 64
          %s2574 = scalar_lea.vmem [#allocation7], %s2573
          %2576 = dma.done %s2571, 1024
        $region100: #{tpu_custom_call.1} parent=95 // pred_fallthru
          _
      $region96: #{tpu_custom_call.1} parent=5 // pred_fallthru
        _
    $region6: #{tpu_custom_call.1} parent=1 // loop_footer
      %s32 = sadd.s32 1, %s28
    $region7: #{tpu_custom_call.1} parent=1 // loop_footer_branch
      %27 = sbr.rel target = $region3
    $region8: #{tpu_custom_call.1} parent=1 // loop_exit
      _
    %2577 = vsyncpa [#allocation5], 1
    %s2578 = scalar_lea.sflag [#allocation5], 1
    %2579 = vsyncpa %s2578, 1
    %2580 = vsyncpa [#allocation6], 1
    %s2581 = scalar_lea.sflag [#allocation6], 1
    %2582 = vsyncpa %s2581, 1

</llo_original>
